<compile_context>
chip_gen: v6e
topology: v6e:2x2x1
jax: 0.10.0
libtpu: 0.0.40
codegen_flags: <defaults>
</compile_context>

<pallas_src>
import functools
import math

import jax
import jax.numpy as jnp
from jax.experimental import pallas as pl
from jax.experimental.pallas import tpu as pltpu

# ----- small deterministic config (stands in for hidden=768, heads=12, ffn=3072, layers=12) -----
VOCAB = 128
MAX_POS = 64
HIDDEN = 128          # lane-dense (multiple of 128)
NUM_HEADS = 4
HEAD_DIM = HIDDEN // NUM_HEADS
FFN = 512             # lane-dense (multiple of 128)
NUM_LAYERS = 2
LN_EPS = 1e-12
BATCH = 2
SEQ = 8


# ----------------------------- in-kernel helpers -----------------------------

def _layernorm(h, g, b):
    """LayerNorm over the last axis, fp32 statistics."""
    h = h.astype(jnp.float32)
    mu = jnp.mean(h, axis=-1, keepdims=True)
    var = jnp.mean(jnp.square(h - mu), axis=-1, keepdims=True)
    norm = (h - mu) * jax.lax.rsqrt(var + LN_EPS)
    return norm * g.astype(jnp.float32) + b.astype(jnp.float32)


# ----------------------------- the fused kernel -----------------------------

def bert_forward_kernel(emb_ref, mask_ref, emb_g_ref, emb_b_ref,
                        wqkv_ref, bqkv_ref, wo_ref, bo_ref,
                        ln1_g_ref, ln1_b_ref, w1_ref, b1_ref,
                        w2_ref, b2_ref, ln2_g_ref, ln2_b_ref,
                        pool_w_ref, pool_b_ref,
                        out_ref, x_scr,
                        *, batch, seq, num_heads, head_dim):
    """One encoder layer per grid step; activations stay resident in VMEM (x_scr).

    emb_ref:  (B*S, H) fp32   word+pos+type embedding sum
    mask_ref: (B, S)   fp32   additive key mask (0 / -1e4)
    wqkv_ref: (1, H, 3H) bf16 (flat [Wq|Wk|Wv], Wq pre-scaled by 1/sqrt(head_dim))
    wo_ref:   (1, H, H)  bf16, w1_ref: (1, H, F) bf16, w2_ref: (1, F, H) bf16
    out_ref:  (B, H) fp32 pooler output (written on the last layer only)
    x_scr:    (B*S, H) fp32 VMEM scratch, persists across the layer grid axis
    """
    layer = pl.program_id(0)
    B, S = batch, seq
    H = num_heads * head_dim

    # ---- layer 0: fused embedding LayerNorm initializes the resident activations ----
    @pl.when(layer == 0)
    def _():
        x_scr[...] = _layernorm(emb_ref[...], emb_g_ref[...], emb_b_ref[...])

    x = x_scr[...]                                  # (B*S, H) fp32
    x_bf = x.astype(jnp.bfloat16)

    # ---- QKV: one flat full-K matmul, lane-dense N = 3*H ----
    qkv = jnp.dot(x_bf, wqkv_ref[0], preferred_element_type=jnp.float32)
    qkv = qkv + bqkv_ref[0].astype(jnp.float32)     # (B*S, 3H)
    qkv_bf = qkv.astype(jnp.bfloat16)               # single cast, reused for q/k/v

    q = qkv_bf[:, :H]                               # 128-aligned lane slices
    k = qkv_bf[:, H:2 * H]                          # (scale already folded into Wq/bq)
    v = qkv_bf[:, 2 * H:]

    add_mask = mask_ref[...]                        # (B, S) fp32 additive key mask

    # ---- attention core: static (batch, head) unroll of rank-2 matmuls on aligned slices.
    # Mosaic unrolls batched dot_generals anyway, so this costs the same MXU passes while
    # avoiding any in-kernel lane reshapes / transposes or replication of x over heads.
    ctx_rows = []
    for b in range(B):
        m_b = add_mask[b:b + 1, :]                  # (1, S) broadcasts over query rows
        head_ctx = []
        for n in range(num_heads):
            lo = n * head_dim
            qs = q[b * S:(b + 1) * S, lo:lo + head_dim]     # (S, HD)
            ks = k[b * S:(b + 1) * S, lo:lo + head_dim]
            vs = v[b * S:(b + 1) * S, lo:lo + head_dim]
            s_bn = jax.lax.dot_general(                      # q @ k^T, fp32 accum
                qs, ks, (((1,), (1,)), ((), ())),
                preferred_element_type=jnp.float32)          # (S, S)
            s_bn = s_bn + m_b
            s_bn = s_bn - jnp.max(s_bn, axis=-1, keepdims=True)
            p = jnp.exp(s_bn)
            p = p * pl.reciprocal(jnp.sum(p, axis=-1, keepdims=True), approx=True)
            head_ctx.append(jnp.dot(p.astype(jnp.bfloat16), vs,
                                    preferred_element_type=jnp.float32))  # (S, HD)
        ctx_rows.append(jnp.concatenate(head_ctx, axis=-1))  # (S, H), heads back on lanes
    ctx = jnp.concatenate(ctx_rows, axis=0).astype(jnp.bfloat16)          # (B*S, H)

    # ---- output projection: one flat matmul with full K = H (no per-head intermediate) ----
    attn = jnp.dot(ctx, wo_ref[0], preferred_element_type=jnp.float32)
    attn = attn + bo_ref[0].astype(jnp.float32)

    # ---- Add & LayerNorm 1 (residual fused) ----
    h1 = _layernorm(attn + x, ln1_g_ref[0], ln1_b_ref[0])                 # (B*S, H)

    # ---- FFN: GELU(h1 @ W1 + b1) @ W2 + b2, flattened over B*S ----
    ff = jnp.dot(h1.astype(jnp.bfloat16), w1_ref[0],
                 preferred_element_type=jnp.float32) + b1_ref[0].astype(jnp.float32)
    ff = jax.nn.gelu(ff, approximate=True)          # tanh GELU -> EUP slot (slight HF deviation)
    ff2 = jnp.dot(ff.astype(jnp.bfloat16), w2_ref[0],
                  preferred_element_type=jnp.float32) + b2_ref[0].astype(jnp.float32)

    # ---- Add & LayerNorm 2 (residual fused); write back to the resident scratch ----
    h2 = _layernorm(ff2 + h1, ln2_g_ref[0], ln2_b_ref[0])
    x_scr[...] = h2

    # ---- last layer: fused pooler tanh(cls @ Wp + bp) ----
    @pl.when(layer == pl.num_programs(0) - 1)
    def _():
        cls = jnp.concatenate([h2[b * S:b * S + 1, :] for b in range(B)],
                              axis=0).astype(jnp.bfloat16)                # (B, H)
        pooled = jnp.dot(cls, pool_w_ref[...], preferred_element_type=jnp.float32)
        pooled = pooled + pool_b_ref[...].astype(jnp.float32)
        out_ref[...] = jnp.tanh(pooled).astype(out_ref.dtype)


# ----------------------------- pallas_call wrapper -----------------------------

def bert_encoder_pooler(emb2d, add_mask, kp):
    B, S, H, F, L = BATCH, SEQ, HIDDEN, FFN, NUM_LAYERS

    def w_spec(shape):         # stacked per-layer weight, indexed by the layer grid axis
        nd = len(shape)
        return pl.BlockSpec((1,) + tuple(shape[1:]), lambda l, _nd=nd: (l,) + (0,) * (_nd - 1))

    def c_spec(arr):           # layer-invariant input (fetched once: constant block index)
        nd = arr.ndim
        return pl.BlockSpec(arr.shape, lambda l, _nd=nd: (0,) * _nd)

    in_specs = [
        c_spec(emb2d), c_spec(add_mask),
        c_spec(kp["emb_ln_g"]), c_spec(kp["emb_ln_b"]),
        w_spec(kp["wqkv"].shape), w_spec(kp["bqkv"].shape),
        w_spec(kp["wo"].shape), w_spec(kp["bo"].shape),
        w_spec(kp["ln1_g"].shape), w_spec(kp["ln1_b"].shape),
        w_spec(kp["w1"].shape), w_spec(kp["b1"].shape),
        w_spec(kp["w2"].shape), w_spec(kp["b2"].shape),
        w_spec(kp["ln2_g"].shape), w_spec(kp["ln2_b"].shape),
        c_spec(kp["pool_w"]), c_spec(kp["pool_b"]),
    ]
    return pl.pallas_call(
        functools.partial(bert_forward_kernel, batch=B, seq=S,
                          num_heads=NUM_HEADS, head_dim=HEAD_DIM),
        out_shape=jax.ShapeDtypeStruct((B, H), jnp.float32),
        grid=(L,),
        in_specs=in_specs,
        out_specs=pl.BlockSpec((B, H), lambda l: (0, 0)),        # resident across layers
        scratch_shapes=[pltpu.VMEM((B * S, H), jnp.float32)],    # persistent activations
        compiler_params=pltpu.CompilerParams(
            dimension_semantics=("arbitrary",),                  # layers are sequential
            vmem_limit_bytes=32 * 1024 * 1024),
    )(emb2d, add_mask,
      kp["emb_ln_g"], kp["emb_ln_b"],
      kp["wqkv"], kp["bqkv"], kp["wo"], kp["bo"],
      kp["ln1_g"], kp["ln1_b"], kp["w1"], kp["b1"],
      kp["w2"], kp["b2"], kp["ln2_g"], kp["ln2_b"],
      kp["pool_w"], kp["pool_b"])


# ----------------------------- parameters -----------------------------

def init_params(key):
    """Standard BERT-style parameter layout (fp32, torch-like shapes transposed to (in, out))."""
    def nrm(k, shape, scale=0.02):
        return (scale * jax.random.normal(k, shape)).astype(jnp.float32)

    keys = iter(jax.random.split(key, 64))
    p = {
        "word_emb": nrm(next(keys), (VOCAB, HIDDEN)),
        "pos_emb": nrm(next(keys), (MAX_POS, HIDDEN)),
        "type_emb": nrm(next(keys), (2, HIDDEN)),
        "emb_ln_g": jnp.ones((1, HIDDEN), jnp.float32),
        "emb_ln_b": jnp.zeros((1, HIDDEN), jnp.float32),
        "pool_w": nrm(next(keys), (HIDDEN, HIDDEN)),
        "pool_b": jnp.zeros((1, HIDDEN), jnp.float32),
        "layers": [],
    }
    for _ in range(NUM_LAYERS):
        p["layers"].append({
            "wq": nrm(next(keys), (HIDDEN, HIDDEN)), "bq": jnp.zeros((1, HIDDEN), jnp.float32),
            "wk": nrm(next(keys), (HIDDEN, HIDDEN)), "bk": jnp.zeros((1, HIDDEN), jnp.float32),
            "wv": nrm(next(keys), (HIDDEN, HIDDEN)), "bv": jnp.zeros((1, HIDDEN), jnp.float32),
            "wo": nrm(next(keys), (HIDDEN, HIDDEN)), "bo": jnp.zeros((1, HIDDEN), jnp.float32),
            "ln1_g": jnp.ones((1, HIDDEN), jnp.float32), "ln1_b": jnp.zeros((1, HIDDEN), jnp.float32),
            "w1": nrm(next(keys), (HIDDEN, FFN)), "b1": jnp.zeros((1, FFN), jnp.float32),
            "w2": nrm(next(keys), (FFN, HIDDEN)), "b2": jnp.zeros((1, HIDDEN), jnp.float32),
            "ln2_g": jnp.ones((1, HIDDEN), jnp.float32), "ln2_b": jnp.zeros((1, HIDDEN), jnp.float32),
        })
    return p


def prepare_kernel_params(p):
    """One-time (outside jit) repack: stack layers on a leading axis, flat [Wq|Wk|Wv] with the
    attention scale folded into Wq/bq, bf16 matmul weights, fp32 biases / LN params."""
    scale = 1.0 / math.sqrt(HEAD_DIM)

    def stack(fn):
        return jnp.stack([fn(lp) for lp in p["layers"]], axis=0)

    kp = {
        "word_emb": p["word_emb"], "pos_emb": p["pos_emb"], "type_emb": p["type_emb"],
        "emb_ln_g": p["emb_ln_g"], "emb_ln_b": p["emb_ln_b"],
        "wqkv": stack(lambda lp: jnp.concatenate(
            [lp["wq"] * scale, lp["wk"], lp["wv"]], axis=1)).astype(jnp.bfloat16),   # (L, H, 3H)
        "bqkv": stack(lambda lp: jnp.concatenate(
            [lp["bq"] * scale, lp["bk"], lp["bv"]], axis=1)),                        # (L, 1, 3H)
        "wo": stack(lambda lp: lp["wo"]).astype(jnp.bfloat16),                       # (L, H, H)
        "bo": stack(lambda lp: lp["bo"]),
        "ln1_g": stack(lambda lp: lp["ln1_g"]), "ln1_b": stack(lambda lp: lp["ln1_b"]),
        "w1": stack(lambda lp: lp["w1"]).astype(jnp.bfloat16), "b1": stack(lambda lp: lp["b1"]),
        "w2": stack(lambda lp: lp["w2"]).astype(jnp.bfloat16), "b2": stack(lambda lp: lp["b2"]),
        "ln2_g": stack(lambda lp: lp["ln2_g"]), "ln2_b": stack(lambda lp: lp["ln2_b"]),
        "pool_w": p["pool_w"].astype(jnp.bfloat16), "pool_b": p["pool_b"],
    }
    return jax.device_put(kp)


# ----------------------------- forward -----------------------------

def transformer_forward(kp, input_ids, attention_mask):
    """Equivalent of TransformerModel.forward after tokenization.

    Returns outputs[1] semantics (pooler output = tanh(W @ hidden[:, 0] + b)), i.e. the
    BERT/RoBERTa branch of the original module (the ELECTRA branch would be hidden.mean(1)).
    """
    b, s = input_ids.shape
    # Embedding gather + sum is XLA glue; its LayerNorm is fused into layer 0 of the kernel.
    emb = (jnp.take(kp["word_emb"], input_ids, axis=0)
           + kp["pos_emb"][:s][None, :, :]
           + kp["type_emb"][0][None, None, :])
    emb2d = emb.reshape(b * s, HIDDEN).astype(jnp.float32)

    # Additive attention key mask (0 attended / -1e4 padded), kept general so non-prefix masks
    # from the original "both"-side truncation concatenation are handled correctly.
    add_mask = ((1.0 - attention_mask.astype(jnp.float32)) * -10000.0)   # (B, S)

    return bert_encoder_pooler(emb2d, add_mask, kp)


if __name__ == "__main__":
    key = jax.random.PRNGKey(0)
    k_param, k_ids = jax.random.split(key)

    params = init_params(k_param)
    kparams = prepare_kernel_params(params)          # one-time repack, OUTSIDE jit
    input_ids = jax.random.randint(k_ids, (BATCH, SEQ), 0, VOCAB, dtype=jnp.int32)
    # Pad the tail of the second sequence to exercise the attention mask.
    attention_mask = jnp.ones((BATCH, SEQ), jnp.int32).at[1, SEQ - 2:].set(0)

    fwd = jax.jit(transformer_forward)
    out = jax.block_until_ready(fwd(kparams, input_ids, attention_mask))

    assert out.shape == (BATCH, HIDDEN) and out.dtype == jnp.float32
    assert bool(jnp.all(jnp.isfinite(out)))
    assert bool(jnp.all(jnp.abs(out) <= 1.0))        # tanh-bounded pooler output
    print("KERNEL_OK")
</pallas_src>

<mosaic_0001>
module attributes {stable_mosaic.version = 11 : i64} {
  func.func @bert_forward_kernel(%arg0: i32, %arg1: memref<16x128xf32, #tpu.memory_space<vmem>>, %arg2: memref<2x8xf32, #tpu.memory_space<vmem>>, %arg3: memref<1x128xf32, #tpu.memory_space<vmem>>, %arg4: memref<1x128xf32, #tpu.memory_space<vmem>>, %arg5: memref<1x128x384xbf16, #tpu.memory_space<vmem>>, %arg6: memref<1x1x384xf32, #tpu.memory_space<vmem>>, %arg7: memref<1x128x128xbf16, #tpu.memory_space<vmem>>, %arg8: memref<1x1x128xf32, #tpu.memory_space<vmem>>, %arg9: memref<1x1x128xf32, #tpu.memory_space<vmem>>, %arg10: memref<1x1x128xf32, #tpu.memory_space<vmem>>, %arg11: memref<1x128x512xbf16, #tpu.memory_space<vmem>>, %arg12: memref<1x1x512xf32, #tpu.memory_space<vmem>>, %arg13: memref<1x512x128xbf16, #tpu.memory_space<vmem>>, %arg14: memref<1x1x128xf32, #tpu.memory_space<vmem>>, %arg15: memref<1x1x128xf32, #tpu.memory_space<vmem>>, %arg16: memref<1x1x128xf32, #tpu.memory_space<vmem>>, %arg17: memref<128x128xbf16, #tpu.memory_space<vmem>>, %arg18: memref<1x128xf32, #tpu.memory_space<vmem>>, %arg19: memref<2x128xf32, #tpu.memory_space<vmem>>, %arg20: memref<16x128xf32, #tpu.memory_space<vmem>>) attributes {dimension_semantics = [#tpu.dimension_semantics<arbitrary>], iteration_bounds = array<i64: 2>, scalar_prefetch = 0 : i64, scratch_operands = 1 : i64, tpu.core_type = #tpu.core_type<tc>, window_params = [{pipeline_mode = #tpu.pipeline_mode<synchronous>, transform_indices = @transform_0, window_bounds = array<i64: 16, 128>}, {pipeline_mode = #tpu.pipeline_mode<synchronous>, transform_indices = @transform_1, window_bounds = array<i64: 2, 8>}, {pipeline_mode = #tpu.pipeline_mode<synchronous>, transform_indices = @transform_2, window_bounds = array<i64: 1, 128>}, {pipeline_mode = #tpu.pipeline_mode<synchronous>, transform_indices = @transform_3, window_bounds = array<i64: 1, 128>}, {transform_indices = @transform_4, window_bounds = array<i64: 1, 128, 384>}, {transform_indices = @transform_5, window_bounds = array<i64: 1, 1, 384>}, {transform_indices = @transform_6, window_bounds = array<i64: 1, 128, 128>}, {transform_indices = @transform_7, window_bounds = array<i64: 1, 1, 128>}, {transform_indices = @transform_8, window_bounds = array<i64: 1, 1, 128>}, {transform_indices = @transform_9, window_bounds = array<i64: 1, 1, 128>}, {transform_indices = @transform_10, window_bounds = array<i64: 1, 128, 512>}, {transform_indices = @transform_11, window_bounds = array<i64: 1, 1, 512>}, {transform_indices = @transform_12, window_bounds = array<i64: 1, 512, 128>}, {transform_indices = @transform_13, window_bounds = array<i64: 1, 1, 128>}, {transform_indices = @transform_14, window_bounds = array<i64: 1, 1, 128>}, {transform_indices = @transform_15, window_bounds = array<i64: 1, 1, 128>}, {pipeline_mode = #tpu.pipeline_mode<synchronous>, transform_indices = @transform_16, window_bounds = array<i64: 128, 128>}, {pipeline_mode = #tpu.pipeline_mode<synchronous>, transform_indices = @transform_17, window_bounds = array<i64: 1, 128>}, {pipeline_mode = #tpu.pipeline_mode<synchronous>, transform_indices = @transform_18, window_bounds = array<i64: 2, 128>}]} {
    %c0_i32 = arith.constant 0 : i32
    %0 = arith.cmpi eq, %arg0, %c0_i32 : i32
    %1 = arith.extui %0 : i1 to i32
    %c0_i32_0 = arith.constant 0 : i32
    %2 = arith.cmpi ne, %1, %c0_i32_0 : i32
    scf.if %2 {
      %c0_92 = arith.constant 0 : index
      %c0_93 = arith.constant 0 : index
      %261 = vector.load %arg1[%c0_92, %c0_93] : memref<16x128xf32, #tpu.memory_space<vmem>>, vector<16x128xf32>
      %c0_94 = arith.constant 0 : index
      %c0_95 = arith.constant 0 : index
      %262 = vector.load %arg3[%c0_94, %c0_95] : memref<1x128xf32, #tpu.memory_space<vmem>>, vector<1x128xf32>
      %c0_96 = arith.constant 0 : index
      %c0_97 = arith.constant 0 : index
      %263 = vector.load %arg4[%c0_96, %c0_97] : memref<1x128xf32, #tpu.memory_space<vmem>>, vector<1x128xf32>
      %cst_98 = arith.constant dense<0.000000e+00> : vector<16xf32>
      %264 = vector.multi_reduction <add>, %261, %cst_98 [1] : vector<16x128xf32> to vector<16xf32>
      %265 = vector.shape_cast %264 : vector<16xf32> to vector<16x1xf32>
      %cst_99 = arith.constant 1.280000e+02 : f32
      %266 = vector.broadcast %cst_99 : f32 to vector<16x1xf32>
      %267 = arith.divf %265, %266 : vector<16x1xf32>
      %268 = vector.broadcast %267 : vector<16x1xf32> to vector<16x128xf32>
      %269 = arith.subf %261, %268 : vector<16x128xf32>
      %270 = arith.mulf %269, %269 : vector<16x128xf32>
      %cst_100 = arith.constant dense<0.000000e+00> : vector<16xf32>
      %271 = vector.multi_reduction <add>, %270, %cst_100 [1] : vector<16x128xf32> to vector<16xf32>
      %272 = vector.shape_cast %271 : vector<16xf32> to vector<16x1xf32>
      %cst_101 = arith.constant 1.280000e+02 : f32
      %273 = vector.broadcast %cst_101 : f32 to vector<16x1xf32>
      %274 = arith.divf %272, %273 : vector<16x1xf32>
      %275 = vector.broadcast %267 : vector<16x1xf32> to vector<16x128xf32>
      %276 = arith.subf %261, %275 : vector<16x128xf32>
      %cst_102 = arith.constant 9.99999996E-13 : f32
      %277 = vector.broadcast %cst_102 : f32 to vector<16x1xf32>
      %278 = arith.addf %274, %277 : vector<16x1xf32>
      %279 = math.rsqrt %278 : vector<16x1xf32>
      %280 = vector.broadcast %279 : vector<16x1xf32> to vector<16x128xf32>
      %281 = arith.mulf %276, %280 : vector<16x128xf32>
      %282 = vector.broadcast %262 : vector<1x128xf32> to vector<16x128xf32>
      %283 = arith.mulf %281, %282 : vector<16x128xf32>
      %284 = vector.broadcast %263 : vector<1x128xf32> to vector<16x128xf32>
      %285 = arith.addf %283, %284 : vector<16x128xf32>
      %c0_103 = arith.constant 0 : index
      %c0_104 = arith.constant 0 : index
      %286 = vector.load %arg20[%c0_103, %c0_104] : memref<16x128xf32, #tpu.memory_space<vmem>>, vector<16x128xf32>
      tpu.vector_store %arg20[%c0_103, %c0_104], %285 {strides = array<i32>} : memref<16x128xf32, #tpu.memory_space<vmem>>, vector<16x128xf32>,
    } else {
    }
    %c0 = arith.constant 0 : index
    %c0_1 = arith.constant 0 : index
    %3 = vector.load %arg20[%c0, %c0_1] : memref<16x128xf32, #tpu.memory_space<vmem>>, vector<16x128xf32>
    %4 = arith.truncf %3 : vector<16x128xf32> to vector<16x128xbf16>
    %c0_2 = arith.constant 0 : index
    %c0_3 = arith.constant 0 : index
    %c0_4 = arith.constant 0 : index
    %5 = vector.load %arg5[%c0_2, %c0_3, %c0_4] : memref<1x128x384xbf16, #tpu.memory_space<vmem>>, vector<1x128x384xbf16>
    %6 = vector.shape_cast %5 : vector<1x128x384xbf16> to vector<128x384xbf16>
    %cst = arith.constant dense<0.000000e+00> : vector<16x384xf32>
    %7 = tpu.matmul %4, %6, %cst {dimension_numbers = #tpu.dot_dimension_numbers<[1], [0], [0], [1], [0, 0, 1, 1], [], []>} : vector<16x128xbf16>, vector<128x384xbf16>, vector<16x384xf32> -> vector<16x384xf32>
    %c0_5 = arith.constant 0 : index
    %c0_6 = arith.constant 0 : index
    %c0_7 = arith.constant 0 : index
    %8 = vector.load %arg6[%c0_5, %c0_6, %c0_7] : memref<1x1x384xf32, #tpu.memory_space<vmem>>, vector<1x1x384xf32>
    %9 = vector.shape_cast %8 : vector<1x1x384xf32> to vector<1x384xf32>
    %10 = vector.broadcast %9 : vector<1x384xf32> to vector<16x384xf32>
    %11 = arith.addf %7, %10 : vector<16x384xf32>
    %12 = arith.truncf %11 : vector<16x384xf32> to vector<16x384xbf16>
    %13 = vector.extract_strided_slice %12 {offsets = [0, 0], sizes = [16, 128], strides = [1, 1]} : vector<16x384xbf16> to vector<16x128xbf16>
    %14 = vector.extract_strided_slice %12 {offsets = [0, 128], sizes = [16, 128], strides = [1, 1]} : vector<16x384xbf16> to vector<16x128xbf16>
    %15 = vector.extract_strided_slice %12 {offsets = [0, 256], sizes = [16, 128], strides = [1, 1]} : vector<16x384xbf16> to vector<16x128xbf16>
    %c0_8 = arith.constant 0 : index
    %c0_9 = arith.constant 0 : index
    %16 = vector.load %arg2[%c0_8, %c0_9] : memref<2x8xf32, #tpu.memory_space<vmem>>, vector<2x8xf32>
    %17 = vector.extract_strided_slice %16 {offsets = [0, 0], sizes = [1, 8], strides = [1, 1]} : vector<2x8xf32> to vector<1x8xf32>
    %18 = vector.extract_strided_slice %13 {offsets = [0, 0], sizes = [8, 32], strides = [1, 1]} : vector<16x128xbf16> to vector<8x32xbf16>
    %19 = vector.extract_strided_slice %14 {offsets = [0, 0], sizes = [8, 32], strides = [1, 1]} : vector<16x128xbf16> to vector<8x32xbf16>
    %20 = vector.extract_strided_slice %15 {offsets = [0, 0], sizes = [8, 32], strides = [1, 1]} : vector<16x128xbf16> to vector<8x32xbf16>
    %cst_10 = arith.constant dense<0.000000e+00> : vector<8x8xf32>
    %21 = tpu.matmul %18, %19, %cst_10 {dimension_numbers = #tpu.dot_dimension_numbers<[1], [1], [0], [0], [0, 0, 1, 0], [], []>} : vector<8x32xbf16>, vector<8x32xbf16>, vector<8x8xf32> -> vector<8x8xf32>
    %22 = vector.broadcast %17 : vector<1x8xf32> to vector<8x8xf32>
    %23 = arith.addf %21, %22 : vector<8x8xf32>
    %cst_11 = arith.constant dense<0xFF800000> : vector<8xf32>
    %24 = vector.multi_reduction <maximumf>, %23, %cst_11 [1] : vector<8x8xf32> to vector<8xf32>
    %25 = vector.shape_cast %24 : vector<8xf32> to vector<8x1xf32>
    %26 = vector.broadcast %25 : vector<8x1xf32> to vector<8x8xf32>
    %27 = arith.subf %23, %26 : vector<8x8xf32>
    %28 = math.exp %27 : vector<8x8xf32>
    %cst_12 = arith.constant dense<0.000000e+00> : vector<8xf32>
    %29 = vector.multi_reduction <add>, %28, %cst_12 [1] : vector<8x8xf32> to vector<8xf32>
    %30 = vector.shape_cast %29 : vector<8xf32> to vector<8x1xf32>
    %31 = tpu.reciprocal %30 {approx = true} : vector<8x1xf32> -> vector<8x1xf32>
    %32 = vector.broadcast %31 : vector<8x1xf32> to vector<8x8xf32>
    %33 = arith.mulf %28, %32 : vector<8x8xf32>
    %34 = arith.truncf %33 : vector<8x8xf32> to vector<8x8xbf16>
    %cst_13 = arith.constant dense<0.000000e+00> : vector<8x32xf32>
    %35 = tpu.matmul %34, %20, %cst_13 {dimension_numbers = #tpu.dot_dimension_numbers<[1], [0], [0], [1], [0, 0, 1, 1], [], []>} : vector<8x8xbf16>, vector<8x32xbf16>, vector<8x32xf32> -> vector<8x32xf32>
    %36 = vector.extract_strided_slice %13 {offsets = [0, 32], sizes = [8, 32], strides = [1, 1]} : vector<16x128xbf16> to vector<8x32xbf16>
    %37 = vector.extract_strided_slice %14 {offsets = [0, 32], sizes = [8, 32], strides = [1, 1]} : vector<16x128xbf16> to vector<8x32xbf16>
    %38 = vector.extract_strided_slice %15 {offsets = [0, 32], sizes = [8, 32], strides = [1, 1]} : vector<16x128xbf16> to vector<8x32xbf16>
    %cst_14 = arith.constant dense<0.000000e+00> : vector<8x8xf32>
    %39 = tpu.matmul %36, %37, %cst_14 {dimension_numbers = #tpu.dot_dimension_numbers<[1], [1], [0], [0], [0, 0, 1, 0], [], []>} : vector<8x32xbf16>, vector<8x32xbf16>, vector<8x8xf32> -> vector<8x8xf32>
    %40 = vector.broadcast %17 : vector<1x8xf32> to vector<8x8xf32>
    %41 = arith.addf %39, %40 : vector<8x8xf32>
    %cst_15 = arith.constant dense<0xFF800000> : vector<8xf32>
    %42 = vector.multi_reduction <maximumf>, %41, %cst_15 [1] : vector<8x8xf32> to vector<8xf32>
    %43 = vector.shape_cast %42 : vector<8xf32> to vector<8x1xf32>
    %44 = vector.broadcast %43 : vector<8x1xf32> to vector<8x8xf32>
    %45 = arith.subf %41, %44 : vector<8x8xf32>
    %46 = math.exp %45 : vector<8x8xf32>
    %cst_16 = arith.constant dense<0.000000e+00> : vector<8xf32>
    %47 = vector.multi_reduction <add>, %46, %cst_16 [1] : vector<8x8xf32> to vector<8xf32>
    %48 = vector.shape_cast %47 : vector<8xf32> to vector<8x1xf32>
    %49 = tpu.reciprocal %48 {approx = true} : vector<8x1xf32> -> vector<8x1xf32>
    %50 = vector.broadcast %49 : vector<8x1xf32> to vector<8x8xf32>
    %51 = arith.mulf %46, %50 : vector<8x8xf32>
    %52 = arith.truncf %51 : vector<8x8xf32> to vector<8x8xbf16>
    %cst_17 = arith.constant dense<0.000000e+00> : vector<8x32xf32>
    %53 = tpu.matmul %52, %38, %cst_17 {dimension_numbers = #tpu.dot_dimension_numbers<[1], [0], [0], [1], [0, 0, 1, 1], [], []>} : vector<8x8xbf16>, vector<8x32xbf16>, vector<8x32xf32> -> vector<8x32xf32>
    %54 = vector.extract_strided_slice %13 {offsets = [0, 64], sizes = [8, 32], strides = [1, 1]} : vector<16x128xbf16> to vector<8x32xbf16>
    %55 = vector.extract_strided_slice %14 {offsets = [0, 64], sizes = [8, 32], strides = [1, 1]} : vector<16x128xbf16> to vector<8x32xbf16>
    %56 = vector.extract_strided_slice %15 {offsets = [0, 64], sizes = [8, 32], strides = [1, 1]} : vector<16x128xbf16> to vector<8x32xbf16>
    %cst_18 = arith.constant dense<0.000000e+00> : vector<8x8xf32>
    %57 = tpu.matmul %54, %55, %cst_18 {dimension_numbers = #tpu.dot_dimension_numbers<[1], [1], [0], [0], [0, 0, 1, 0], [], []>} : vector<8x32xbf16>, vector<8x32xbf16>, vector<8x8xf32> -> vector<8x8xf32>
    %58 = vector.broadcast %17 : vector<1x8xf32> to vector<8x8xf32>
    %59 = arith.addf %57, %58 : vector<8x8xf32>
    %cst_19 = arith.constant dense<0xFF800000> : vector<8xf32>
    %60 = vector.multi_reduction <maximumf>, %59, %cst_19 [1] : vector<8x8xf32> to vector<8xf32>
    %61 = vector.shape_cast %60 : vector<8xf32> to vector<8x1xf32>
    %62 = vector.broadcast %61 : vector<8x1xf32> to vector<8x8xf32>
    %63 = arith.subf %59, %62 : vector<8x8xf32>
    %64 = math.exp %63 : vector<8x8xf32>
    %cst_20 = arith.constant dense<0.000000e+00> : vector<8xf32>
    %65 = vector.multi_reduction <add>, %64, %cst_20 [1] : vector<8x8xf32> to vector<8xf32>
    %66 = vector.shape_cast %65 : vector<8xf32> to vector<8x1xf32>
    %67 = tpu.reciprocal %66 {approx = true} : vector<8x1xf32> -> vector<8x1xf32>
    %68 = vector.broadcast %67 : vector<8x1xf32> to vector<8x8xf32>
    %69 = arith.mulf %64, %68 : vector<8x8xf32>
    %70 = arith.truncf %69 : vector<8x8xf32> to vector<8x8xbf16>
    %cst_21 = arith.constant dense<0.000000e+00> : vector<8x32xf32>
    %71 = tpu.matmul %70, %56, %cst_21 {dimension_numbers = #tpu.dot_dimension_numbers<[1], [0], [0], [1], [0, 0, 1, 1], [], []>} : vector<8x8xbf16>, vector<8x32xbf16>, vector<8x32xf32> -> vector<8x32xf32>
    %72 = vector.extract_strided_slice %13 {offsets = [0, 96], sizes = [8, 32], strides = [1, 1]} : vector<16x128xbf16> to vector<8x32xbf16>
    %73 = vector.extract_strided_slice %14 {offsets = [0, 96], sizes = [8, 32], strides = [1, 1]} : vector<16x128xbf16> to vector<8x32xbf16>
    %74 = vector.extract_strided_slice %15 {offsets = [0, 96], sizes = [8, 32], strides = [1, 1]} : vector<16x128xbf16> to vector<8x32xbf16>
    %cst_22 = arith.constant dense<0.000000e+00> : vector<8x8xf32>
    %75 = tpu.matmul %72, %73, %cst_22 {dimension_numbers = #tpu.dot_dimension_numbers<[1], [1], [0], [0], [0, 0, 1, 0], [], []>} : vector<8x32xbf16>, vector<8x32xbf16>, vector<8x8xf32> -> vector<8x8xf32>
    %76 = vector.broadcast %17 : vector<1x8xf32> to vector<8x8xf32>
    %77 = arith.addf %75, %76 : vector<8x8xf32>
    %cst_23 = arith.constant dense<0xFF800000> : vector<8xf32>
    %78 = vector.multi_reduction <maximumf>, %77, %cst_23 [1] : vector<8x8xf32> to vector<8xf32>
    %79 = vector.shape_cast %78 : vector<8xf32> to vector<8x1xf32>
    %80 = vector.broadcast %79 : vector<8x1xf32> to vector<8x8xf32>
    %81 = arith.subf %77, %80 : vector<8x8xf32>
    %82 = math.exp %81 : vector<8x8xf32>
    %cst_24 = arith.constant dense<0.000000e+00> : vector<8xf32>
    %83 = vector.multi_reduction <add>, %82, %cst_24 [1] : vector<8x8xf32> to vector<8xf32>
    %84 = vector.shape_cast %83 : vector<8xf32> to vector<8x1xf32>
    %85 = tpu.reciprocal %84 {approx = true} : vector<8x1xf32> -> vector<8x1xf32>
    %86 = vector.broadcast %85 : vector<8x1xf32> to vector<8x8xf32>
    %87 = arith.mulf %82, %86 : vector<8x8xf32>
    %88 = arith.truncf %87 : vector<8x8xf32> to vector<8x8xbf16>
    %cst_25 = arith.constant dense<0.000000e+00> : vector<8x32xf32>
    %89 = tpu.matmul %88, %74, %cst_25 {dimension_numbers = #tpu.dot_dimension_numbers<[1], [0], [0], [1], [0, 0, 1, 1], [], []>} : vector<8x8xbf16>, vector<8x32xbf16>, vector<8x32xf32> -> vector<8x32xf32>
    %90 = tpu.concatenate %35, %53, %71, %89 in 1 : vector<8x32xf32>, vector<8x32xf32>, vector<8x32xf32>, vector<8x32xf32> -> vector<8x128xf32>
    %91 = vector.extract_strided_slice %16 {offsets = [1, 0], sizes = [1, 8], strides = [1, 1]} : vector<2x8xf32> to vector<1x8xf32>
    %92 = vector.extract_strided_slice %13 {offsets = [8, 0], sizes = [8, 32], strides = [1, 1]} : vector<16x128xbf16> to vector<8x32xbf16>
    %93 = vector.extract_strided_slice %14 {offsets = [8, 0], sizes = [8, 32], strides = [1, 1]} : vector<16x128xbf16> to vector<8x32xbf16>
    %94 = vector.extract_strided_slice %15 {offsets = [8, 0], sizes = [8, 32], strides = [1, 1]} : vector<16x128xbf16> to vector<8x32xbf16>
    %cst_26 = arith.constant dense<0.000000e+00> : vector<8x8xf32>
    %95 = tpu.matmul %92, %93, %cst_26 {dimension_numbers = #tpu.dot_dimension_numbers<[1], [1], [0], [0], [0, 0, 1, 0], [], []>} : vector<8x32xbf16>, vector<8x32xbf16>, vector<8x8xf32> -> vector<8x8xf32>
    %96 = vector.broadcast %91 : vector<1x8xf32> to vector<8x8xf32>
    %97 = arith.addf %95, %96 : vector<8x8xf32>
    %cst_27 = arith.constant dense<0xFF800000> : vector<8xf32>
    %98 = vector.multi_reduction <maximumf>, %97, %cst_27 [1] : vector<8x8xf32> to vector<8xf32>
    %99 = vector.shape_cast %98 : vector<8xf32> to vector<8x1xf32>
    %100 = vector.broadcast %99 : vector<8x1xf32> to vector<8x8xf32>
    %101 = arith.subf %97, %100 : vector<8x8xf32>
    %102 = math.exp %101 : vector<8x8xf32>
    %cst_28 = arith.constant dense<0.000000e+00> : vector<8xf32>
    %103 = vector.multi_reduction <add>, %102, %cst_28 [1] : vector<8x8xf32> to vector<8xf32>
    %104 = vector.shape_cast %103 : vector<8xf32> to vector<8x1xf32>
    %105 = tpu.reciprocal %104 {approx = true} : vector<8x1xf32> -> vector<8x1xf32>
    %106 = vector.broadcast %105 : vector<8x1xf32> to vector<8x8xf32>
    %107 = arith.mulf %102, %106 : vector<8x8xf32>
    %108 = arith.truncf %107 : vector<8x8xf32> to vector<8x8xbf16>
    %cst_29 = arith.constant dense<0.000000e+00> : vector<8x32xf32>
    %109 = tpu.matmul %108, %94, %cst_29 {dimension_numbers = #tpu.dot_dimension_numbers<[1], [0], [0], [1], [0, 0, 1, 1], [], []>} : vector<8x8xbf16>, vector<8x32xbf16>, vector<8x32xf32> -> vector<8x32xf32>
    %110 = vector.extract_strided_slice %13 {offsets = [8, 32], sizes = [8, 32], strides = [1, 1]} : vector<16x128xbf16> to vector<8x32xbf16>
    %111 = vector.extract_strided_slice %14 {offsets = [8, 32], sizes = [8, 32], strides = [1, 1]} : vector<16x128xbf16> to vector<8x32xbf16>
    %112 = vector.extract_strided_slice %15 {offsets = [8, 32], sizes = [8, 32], strides = [1, 1]} : vector<16x128xbf16> to vector<8x32xbf16>
    %cst_30 = arith.constant dense<0.000000e+00> : vector<8x8xf32>
    %113 = tpu.matmul %110, %111, %cst_30 {dimension_numbers = #tpu.dot_dimension_numbers<[1], [1], [0], [0], [0, 0, 1, 0], [], []>} : vector<8x32xbf16>, vector<8x32xbf16>, vector<8x8xf32> -> vector<8x8xf32>
    %114 = vector.broadcast %91 : vector<1x8xf32> to vector<8x8xf32>
    %115 = arith.addf %113, %114 : vector<8x8xf32>
    %cst_31 = arith.constant dense<0xFF800000> : vector<8xf32>
    %116 = vector.multi_reduction <maximumf>, %115, %cst_31 [1] : vector<8x8xf32> to vector<8xf32>
    %117 = vector.shape_cast %116 : vector<8xf32> to vector<8x1xf32>
    %118 = vector.broadcast %117 : vector<8x1xf32> to vector<8x8xf32>
    %119 = arith.subf %115, %118 : vector<8x8xf32>
    %120 = math.exp %119 : vector<8x8xf32>
    %cst_32 = arith.constant dense<0.000000e+00> : vector<8xf32>
    %121 = vector.multi_reduction <add>, %120, %cst_32 [1] : vector<8x8xf32> to vector<8xf32>
    %122 = vector.shape_cast %121 : vector<8xf32> to vector<8x1xf32>
    %123 = tpu.reciprocal %122 {approx = true} : vector<8x1xf32> -> vector<8x1xf32>
    %124 = vector.broadcast %123 : vector<8x1xf32> to vector<8x8xf32>
    %125 = arith.mulf %120, %124 : vector<8x8xf32>
    %126 = arith.truncf %125 : vector<8x8xf32> to vector<8x8xbf16>
    %cst_33 = arith.constant dense<0.000000e+00> : vector<8x32xf32>
    %127 = tpu.matmul %126, %112, %cst_33 {dimension_numbers = #tpu.dot_dimension_numbers<[1], [0], [0], [1], [0, 0, 1, 1], [], []>} : vector<8x8xbf16>, vector<8x32xbf16>, vector<8x32xf32> -> vector<8x32xf32>
    %128 = vector.extract_strided_slice %13 {offsets = [8, 64], sizes = [8, 32], strides = [1, 1]} : vector<16x128xbf16> to vector<8x32xbf16>
    %129 = vector.extract_strided_slice %14 {offsets = [8, 64], sizes = [8, 32], strides = [1, 1]} : vector<16x128xbf16> to vector<8x32xbf16>
    %130 = vector.extract_strided_slice %15 {offsets = [8, 64], sizes = [8, 32], strides = [1, 1]} : vector<16x128xbf16> to vector<8x32xbf16>
    %cst_34 = arith.constant dense<0.000000e+00> : vector<8x8xf32>
    %131 = tpu.matmul %128, %129, %cst_34 {dimension_numbers = #tpu.dot_dimension_numbers<[1], [1], [0], [0], [0, 0, 1, 0], [], []>} : vector<8x32xbf16>, vector<8x32xbf16>, vector<8x8xf32> -> vector<8x8xf32>
    %132 = vector.broadcast %91 : vector<1x8xf32> to vector<8x8xf32>
    %133 = arith.addf %131, %132 : vector<8x8xf32>
    %cst_35 = arith.constant dense<0xFF800000> : vector<8xf32>
    %134 = vector.multi_reduction <maximumf>, %133, %cst_35 [1] : vector<8x8xf32> to vector<8xf32>
    %135 = vector.shape_cast %134 : vector<8xf32> to vector<8x1xf32>
    %136 = vector.broadcast %135 : vector<8x1xf32> to vector<8x8xf32>
    %137 = arith.subf %133, %136 : vector<8x8xf32>
    %138 = math.exp %137 : vector<8x8xf32>
    %cst_36 = arith.constant dense<0.000000e+00> : vector<8xf32>
    %139 = vector.multi_reduction <add>, %138, %cst_36 [1] : vector<8x8xf32> to vector<8xf32>
    %140 = vector.shape_cast %139 : vector<8xf32> to vector<8x1xf32>
    %141 = tpu.reciprocal %140 {approx = true} : vector<8x1xf32> -> vector<8x1xf32>
    %142 = vector.broadcast %141 : vector<8x1xf32> to vector<8x8xf32>
    %143 = arith.mulf %138, %142 : vector<8x8xf32>
    %144 = arith.truncf %143 : vector<8x8xf32> to vector<8x8xbf16>
    %cst_37 = arith.constant dense<0.000000e+00> : vector<8x32xf32>
    %145 = tpu.matmul %144, %130, %cst_37 {dimension_numbers = #tpu.dot_dimension_numbers<[1], [0], [0], [1], [0, 0, 1, 1], [], []>} : vector<8x8xbf16>, vector<8x32xbf16>, vector<8x32xf32> -> vector<8x32xf32>
    %146 = vector.extract_strided_slice %13 {offsets = [8, 96], sizes = [8, 32], strides = [1, 1]} : vector<16x128xbf16> to vector<8x32xbf16>
    %147 = vector.extract_strided_slice %14 {offsets = [8, 96], sizes = [8, 32], strides = [1, 1]} : vector<16x128xbf16> to vector<8x32xbf16>
    %148 = vector.extract_strided_slice %15 {offsets = [8, 96], sizes = [8, 32], strides = [1, 1]} : vector<16x128xbf16> to vector<8x32xbf16>
    %cst_38 = arith.constant dense<0.000000e+00> : vector<8x8xf32>
    %149 = tpu.matmul %146, %147, %cst_38 {dimension_numbers = #tpu.dot_dimension_numbers<[1], [1], [0], [0], [0, 0, 1, 0], [], []>} : vector<8x32xbf16>, vector<8x32xbf16>, vector<8x8xf32> -> vector<8x8xf32>
    %150 = vector.broadcast %91 : vector<1x8xf32> to vector<8x8xf32>
    %151 = arith.addf %149, %150 : vector<8x8xf32>
    %cst_39 = arith.constant dense<0xFF800000> : vector<8xf32>
    %152 = vector.multi_reduction <maximumf>, %151, %cst_39 [1] : vector<8x8xf32> to vector<8xf32>
    %153 = vector.shape_cast %152 : vector<8xf32> to vector<8x1xf32>
    %154 = vector.broadcast %153 : vector<8x1xf32> to vector<8x8xf32>
    %155 = arith.subf %151, %154 : vector<8x8xf32>
    %156 = math.exp %155 : vector<8x8xf32>
    %cst_40 = arith.constant dense<0.000000e+00> : vector<8xf32>
    %157 = vector.multi_reduction <add>, %156, %cst_40 [1] : vector<8x8xf32> to vector<8xf32>
    %158 = vector.shape_cast %157 : vector<8xf32> to vector<8x1xf32>
    %159 = tpu.reciprocal %158 {approx = true} : vector<8x1xf32> -> vector<8x1xf32>
    %160 = vector.broadcast %159 : vector<8x1xf32> to vector<8x8xf32>
    %161 = arith.mulf %156, %160 : vector<8x8xf32>
    %162 = arith.truncf %161 : vector<8x8xf32> to vector<8x8xbf16>
    %cst_41 = arith.constant dense<0.000000e+00> : vector<8x32xf32>
    %163 = tpu.matmul %162, %148, %cst_41 {dimension_numbers = #tpu.dot_dimension_numbers<[1], [0], [0], [1], [0, 0, 1, 1], [], []>} : vector<8x8xbf16>, vector<8x32xbf16>, vector<8x32xf32> -> vector<8x32xf32>
    %164 = tpu.concatenate %109, %127, %145, %163 in 1 : vector<8x32xf32>, vector<8x32xf32>, vector<8x32xf32>, vector<8x32xf32> -> vector<8x128xf32>
    %165 = tpu.concatenate %90, %164 in 0 : vector<8x128xf32>, vector<8x128xf32> -> vector<16x128xf32>
    %166 = arith.truncf %165 : vector<16x128xf32> to vector<16x128xbf16>
    %c0_42 = arith.constant 0 : index
    %c0_43 = arith.constant 0 : index
    %c0_44 = arith.constant 0 : index
    %167 = vector.load %arg7[%c0_42, %c0_43, %c0_44] : memref<1x128x128xbf16, #tpu.memory_space<vmem>>, vector<1x128x128xbf16>
    %168 = vector.shape_cast %167 : vector<1x128x128xbf16> to vector<128x128xbf16>
    %cst_45 = arith.constant dense<0.000000e+00> : vector<16x128xf32>
    %169 = tpu.matmul %166, %168, %cst_45 {dimension_numbers = #tpu.dot_dimension_numbers<[1], [0], [0], [1], [0, 0, 1, 1], [], []>} : vector<16x128xbf16>, vector<128x128xbf16>, vector<16x128xf32> -> vector<16x128xf32>
    %c0_46 = arith.constant 0 : index
    %c0_47 = arith.constant 0 : index
    %c0_48 = arith.constant 0 : index
    %170 = vector.load %arg8[%c0_46, %c0_47, %c0_48] : memref<1x1x128xf32, #tpu.memory_space<vmem>>, vector<1x1x128xf32>
    %171 = vector.shape_cast %170 : vector<1x1x128xf32> to vector<1x128xf32>
    %172 = vector.broadcast %171 : vector<1x128xf32> to vector<16x128xf32>
    %173 = arith.addf %169, %172 : vector<16x128xf32>
    %174 = arith.addf %173, %3 : vector<16x128xf32>
    %c0_49 = arith.constant 0 : index
    %c0_50 = arith.constant 0 : index
    %c0_51 = arith.constant 0 : index
    %175 = vector.load %arg9[%c0_49, %c0_50, %c0_51] : memref<1x1x128xf32, #tpu.memory_space<vmem>>, vector<1x1x128xf32>
    %176 = vector.shape_cast %175 : vector<1x1x128xf32> to vector<1x128xf32>
    %c0_52 = arith.constant 0 : index
    %c0_53 = arith.constant 0 : index
    %c0_54 = arith.constant 0 : index
    %177 = vector.load %arg10[%c0_52, %c0_53, %c0_54] : memref<1x1x128xf32, #tpu.memory_space<vmem>>, vector<1x1x128xf32>
    %178 = vector.shape_cast %177 : vector<1x1x128xf32> to vector<1x128xf32>
    %cst_55 = arith.constant dense<0.000000e+00> : vector<16xf32>
    %179 = vector.multi_reduction <add>, %174, %cst_55 [1] : vector<16x128xf32> to vector<16xf32>
    %180 = vector.shape_cast %179 : vector<16xf32> to vector<16x1xf32>
    %cst_56 = arith.constant 1.280000e+02 : f32
    %181 = vector.broadcast %cst_56 : f32 to vector<16x1xf32>
    %182 = arith.divf %180, %181 : vector<16x1xf32>
    %183 = vector.broadcast %182 : vector<16x1xf32> to vector<16x128xf32>
    %184 = arith.subf %174, %183 : vector<16x128xf32>
    %185 = arith.mulf %184, %184 : vector<16x128xf32>
    %cst_57 = arith.constant dense<0.000000e+00> : vector<16xf32>
    %186 = vector.multi_reduction <add>, %185, %cst_57 [1] : vector<16x128xf32> to vector<16xf32>
    %187 = vector.shape_cast %186 : vector<16xf32> to vector<16x1xf32>
    %cst_58 = arith.constant 1.280000e+02 : f32
    %188 = vector.broadcast %cst_58 : f32 to vector<16x1xf32>
    %189 = arith.divf %187, %188 : vector<16x1xf32>
    %190 = vector.broadcast %182 : vector<16x1xf32> to vector<16x128xf32>
    %191 = arith.subf %174, %190 : vector<16x128xf32>
    %cst_59 = arith.constant 9.99999996E-13 : f32
    %192 = vector.broadcast %cst_59 : f32 to vector<16x1xf32>
    %193 = arith.addf %189, %192 : vector<16x1xf32>
    %194 = math.rsqrt %193 : vector<16x1xf32>
    %195 = vector.broadcast %194 : vector<16x1xf32> to vector<16x128xf32>
    %196 = arith.mulf %191, %195 : vector<16x128xf32>
    %197 = vector.broadcast %176 : vector<1x128xf32> to vector<16x128xf32>
    %198 = arith.mulf %196, %197 : vector<16x128xf32>
    %199 = vector.broadcast %178 : vector<1x128xf32> to vector<16x128xf32>
    %200 = arith.addf %198, %199 : vector<16x128xf32>
    %201 = arith.truncf %200 : vector<16x128xf32> to vector<16x128xbf16>
    %c0_60 = arith.constant 0 : index
    %c0_61 = arith.constant 0 : index
    %c0_62 = arith.constant 0 : index
    %202 = vector.load %arg11[%c0_60, %c0_61, %c0_62] : memref<1x128x512xbf16, #tpu.memory_space<vmem>>, vector<1x128x512xbf16>
    %203 = vector.shape_cast %202 : vector<1x128x512xbf16> to vector<128x512xbf16>
    %cst_63 = arith.constant dense<0.000000e+00> : vector<16x512xf32>
    %204 = tpu.matmul %201, %203, %cst_63 {dimension_numbers = #tpu.dot_dimension_numbers<[1], [0], [0], [1], [0, 0, 1, 1], [], []>} : vector<16x128xbf16>, vector<128x512xbf16>, vector<16x512xf32> -> vector<16x512xf32>
    %c0_64 = arith.constant 0 : index
    %c0_65 = arith.constant 0 : index
    %c0_66 = arith.constant 0 : index
    %205 = vector.load %arg12[%c0_64, %c0_65, %c0_66] : memref<1x1x512xf32, #tpu.memory_space<vmem>>, vector<1x1x512xf32>
    %206 = vector.shape_cast %205 : vector<1x1x512xf32> to vector<1x512xf32>
    %207 = vector.broadcast %206 : vector<1x512xf32> to vector<16x512xf32>
    %208 = arith.addf %204, %207 : vector<16x512xf32>
    %209 = arith.mulf %208, %208 : vector<16x512xf32>
    %210 = arith.mulf %208, %209 : vector<16x512xf32>
    %cst_67 = arith.constant 4.471500e-02 : f32
    %211 = vector.broadcast %cst_67 : f32 to vector<16x512xf32>
    %212 = arith.mulf %211, %210 : vector<16x512xf32>
    %213 = arith.addf %208, %212 : vector<16x512xf32>
    %cst_68 = arith.constant 0.797884583 : f32
    %214 = vector.broadcast %cst_68 : f32 to vector<16x512xf32>
    %215 = arith.mulf %214, %213 : vector<16x512xf32>
    %216 = math.tanh %215 : vector<16x512xf32>
    %cst_69 = arith.constant 1.000000e+00 : f32
    %217 = vector.broadcast %cst_69 : f32 to vector<16x512xf32>
    %218 = arith.addf %217, %216 : vector<16x512xf32>
    %cst_70 = arith.constant 5.000000e-01 : f32
    %219 = vector.broadcast %cst_70 : f32 to vector<16x512xf32>
    %220 = arith.mulf %219, %218 : vector<16x512xf32>
    %221 = arith.mulf %208, %220 : vector<16x512xf32>
    %222 = arith.truncf %221 : vector<16x512xf32> to vector<16x512xbf16>
    %c0_71 = arith.constant 0 : index
    %c0_72 = arith.constant 0 : index
    %c0_73 = arith.constant 0 : index
    %223 = vector.load %arg13[%c0_71, %c0_72, %c0_73] : memref<1x512x128xbf16, #tpu.memory_space<vmem>>, vector<1x512x128xbf16>
    %224 = vector.shape_cast %223 : vector<1x512x128xbf16> to vector<512x128xbf16>
    %cst_74 = arith.constant dense<0.000000e+00> : vector<16x128xf32>
    %225 = tpu.matmul %222, %224, %cst_74 {dimension_numbers = #tpu.dot_dimension_numbers<[1], [0], [0], [1], [0, 0, 1, 1], [], []>} : vector<16x512xbf16>, vector<512x128xbf16>, vector<16x128xf32> -> vector<16x128xf32>
    %c0_75 = arith.constant 0 : index
    %c0_76 = arith.constant 0 : index
    %c0_77 = arith.constant 0 : index
    %226 = vector.load %arg14[%c0_75, %c0_76, %c0_77] : memref<1x1x128xf32, #tpu.memory_space<vmem>>, vector<1x1x128xf32>
    %227 = vector.shape_cast %226 : vector<1x1x128xf32> to vector<1x128xf32>
    %228 = vector.broadcast %227 : vector<1x128xf32> to vector<16x128xf32>
    %229 = arith.addf %225, %228 : vector<16x128xf32>
    %230 = arith.addf %229, %200 : vector<16x128xf32>
    %c0_78 = arith.constant 0 : index
    %c0_79 = arith.constant 0 : index
    %c0_80 = arith.constant 0 : index
    %231 = vector.load %arg15[%c0_78, %c0_79, %c0_80] : memref<1x1x128xf32, #tpu.memory_space<vmem>>, vector<1x1x128xf32>
    %232 = vector.shape_cast %231 : vector<1x1x128xf32> to vector<1x128xf32>
    %c0_81 = arith.constant 0 : index
    %c0_82 = arith.constant 0 : index
    %c0_83 = arith.constant 0 : index
    %233 = vector.load %arg16[%c0_81, %c0_82, %c0_83] : memref<1x1x128xf32, #tpu.memory_space<vmem>>, vector<1x1x128xf32>
    %234 = vector.shape_cast %233 : vector<1x1x128xf32> to vector<1x128xf32>
    %cst_84 = arith.constant dense<0.000000e+00> : vector<16xf32>
    %235 = vector.multi_reduction <add>, %230, %cst_84 [1] : vector<16x128xf32> to vector<16xf32>
    %236 = vector.shape_cast %235 : vector<16xf32> to vector<16x1xf32>
    %cst_85 = arith.constant 1.280000e+02 : f32
    %237 = vector.broadcast %cst_85 : f32 to vector<16x1xf32>
    %238 = arith.divf %236, %237 : vector<16x1xf32>
    %239 = vector.broadcast %238 : vector<16x1xf32> to vector<16x128xf32>
    %240 = arith.subf %230, %239 : vector<16x128xf32>
    %241 = arith.mulf %240, %240 : vector<16x128xf32>
    %cst_86 = arith.constant dense<0.000000e+00> : vector<16xf32>
    %242 = vector.multi_reduction <add>, %241, %cst_86 [1] : vector<16x128xf32> to vector<16xf32>
    %243 = vector.shape_cast %242 : vector<16xf32> to vector<16x1xf32>
    %cst_87 = arith.constant 1.280000e+02 : f32
    %244 = vector.broadcast %cst_87 : f32 to vector<16x1xf32>
    %245 = arith.divf %243, %244 : vector<16x1xf32>
    %246 = vector.broadcast %238 : vector<16x1xf32> to vector<16x128xf32>
    %247 = arith.subf %230, %246 : vector<16x128xf32>
    %cst_88 = arith.constant 9.99999996E-13 : f32
    %248 = vector.broadcast %cst_88 : f32 to vector<16x1xf32>
    %249 = arith.addf %245, %248 : vector<16x1xf32>
    %250 = math.rsqrt %249 : vector<16x1xf32>
    %251 = vector.broadcast %250 : vector<16x1xf32> to vector<16x128xf32>
    %252 = arith.mulf %247, %251 : vector<16x128xf32>
    %253 = vector.broadcast %232 : vector<1x128xf32> to vector<16x128xf32>
    %254 = arith.mulf %252, %253 : vector<16x128xf32>
    %255 = vector.broadcast %234 : vector<1x128xf32> to vector<16x128xf32>
    %256 = arith.addf %254, %255 : vector<16x128xf32>
    %c0_89 = arith.constant 0 : index
    %c0_90 = arith.constant 0 : index
    %257 = vector.load %arg20[%c0_89, %c0_90] : memref<16x128xf32, #tpu.memory_space<vmem>>, vector<16x128xf32>
    tpu.vector_store %arg20[%c0_89, %c0_90], %256 {strides = array<i32>} : memref<16x128xf32, #tpu.memory_space<vmem>>, vector<16x128xf32>,
    %c1_i32 = arith.constant 1 : i32
    %258 = arith.cmpi eq, %arg0, %c1_i32 : i32
    %259 = arith.extui %258 : i1 to i32
    %c0_i32_91 = arith.constant 0 : i32
    %260 = arith.cmpi ne, %259, %c0_i32_91 : i32
    scf.if %260 {
      %261 = vector.extract_strided_slice %256 {offsets = [0, 0], sizes = [1, 128], strides = [1, 1]} : vector<16x128xf32> to vector<1x128xf32>
      %262 = vector.extract_strided_slice %256 {offsets = [8, 0], sizes = [1, 128], strides = [1, 1]} : vector<16x128xf32> to vector<1x128xf32>
      %263 = tpu.concatenate %261, %262 in 0 : vector<1x128xf32>, vector<1x128xf32> -> vector<2x128xf32>
      %264 = arith.truncf %263 : vector<2x128xf32> to vector<2x128xbf16>
      %c0_92 = arith.constant 0 : index
      %c0_93 = arith.constant 0 : index
      %265 = vector.load %arg17[%c0_92, %c0_93] : memref<128x128xbf16, #tpu.memory_space<vmem>>, vector<128x128xbf16>
      %cst_94 = arith.constant dense<0.000000e+00> : vector<2x128xf32>
      %266 = tpu.matmul %264, %265, %cst_94 {dimension_numbers = #tpu.dot_dimension_numbers<[1], [0], [0], [1], [0, 0, 1, 1], [], []>} : vector<2x128xbf16>, vector<128x128xbf16>, vector<2x128xf32> -> vector<2x128xf32>
      %c0_95 = arith.constant 0 : index
      %c0_96 = arith.constant 0 : index
      %267 = vector.load %arg18[%c0_95, %c0_96] : memref<1x128xf32, #tpu.memory_space<vmem>>, vector<1x128xf32>
      %268 = vector.broadcast %267 : vector<1x128xf32> to vector<2x128xf32>
      %269 = arith.addf %266, %268 : vector<2x128xf32>
      %270 = math.tanh %269 : vector<2x128xf32>
      %c0_97 = arith.constant 0 : index
      %c0_98 = arith.constant 0 : index
      %271 = vector.load %arg19[%c0_97, %c0_98] : memref<2x128xf32, #tpu.memory_space<vmem>>, vector<2x128xf32>
      tpu.vector_store %arg19[%c0_97, %c0_98], %270 {strides = array<i32>} : memref<2x128xf32, #tpu.memory_space<vmem>>, vector<2x128xf32>,
    } else {
    }
    return
  }
  func.func @transform_0(%arg0: i32) -> (i32, i32) {
    %c0_i32 = arith.constant 0 : i32
    %c0_i32_0 = arith.constant 0 : i32
    %c0_i32_1 = arith.constant 0 : i32
    return %c0_i32, %c0_i32_0 : i32, i32
  }
  func.func @transform_1(%arg0: i32) -> (i32, i32) {
    %c0_i32 = arith.constant 0 : i32
    %c0_i32_0 = arith.constant 0 : i32
    %c0_i32_1 = arith.constant 0 : i32
    return %c0_i32, %c0_i32_0 : i32, i32
  }
  func.func @transform_2(%arg0: i32) -> (i32, i32) {
    %c0_i32 = arith.constant 0 : i32
    %c0_i32_0 = arith.constant 0 : i32
    %c0_i32_1 = arith.constant 0 : i32
    return %c0_i32, %c0_i32_0 : i32, i32
  }
  func.func @transform_3(%arg0: i32) -> (i32, i32) {
    %c0_i32 = arith.constant 0 : i32
    %c0_i32_0 = arith.constant 0 : i32
    %c0_i32_1 = arith.constant 0 : i32
    return %c0_i32, %c0_i32_0 : i32, i32
  }
  func.func @transform_4(%arg0: i32) -> (i32, i32, i32) {
    %c0_i32 = arith.constant 0 : i32
    %c0_i32_0 = arith.constant 0 : i32
    %c0_i32_1 = arith.constant 0 : i32
    return %arg0, %c0_i32, %c0_i32_0 : i32, i32, i32
  }
  func.func @transform_5(%arg0: i32) -> (i32, i32, i32) {
    %c0_i32 = arith.constant 0 : i32
    %c0_i32_0 = arith.constant 0 : i32
    %c0_i32_1 = arith.constant 0 : i32
    return %arg0, %c0_i32, %c0_i32_0 : i32, i32, i32
  }
  func.func @transform_6(%arg0: i32) -> (i32, i32, i32) {
    %c0_i32 = arith.constant 0 : i32
    %c0_i32_0 = arith.constant 0 : i32
    %c0_i32_1 = arith.constant 0 : i32
    return %arg0, %c0_i32, %c0_i32_0 : i32, i32, i32
  }
  func.func @transform_7(%arg0: i32) -> (i32, i32, i32) {
    %c0_i32 = arith.constant 0 : i32
    %c0_i32_0 = arith.constant 0 : i32
    %c0_i32_1 = arith.constant 0 : i32
    return %arg0, %c0_i32, %c0_i32_0 : i32, i32, i32
  }
  func.func @transform_8(%arg0: i32) -> (i32, i32, i32) {
    %c0_i32 = arith.constant 0 : i32
    %c0_i32_0 = arith.constant 0 : i32
    %c0_i32_1 = arith.constant 0 : i32
    return %arg0, %c0_i32, %c0_i32_0 : i32, i32, i32
  }
  func.func @transform_9(%arg0: i32) -> (i32, i32, i32) {
    %c0_i32 = arith.constant 0 : i32
    %c0_i32_0 = arith.constant 0 : i32
    %c0_i32_1 = arith.constant 0 : i32
    return %arg0, %c0_i32, %c0_i32_0 : i32, i32, i32
  }
  func.func @transform_10(%arg0: i32) -> (i32, i32, i32) {
    %c0_i32 = arith.constant 0 : i32
    %c0_i32_0 = arith.constant 0 : i32
    %c0_i32_1 = arith.constant 0 : i32
    return %arg0, %c0_i32, %c0_i32_0 : i32, i32, i32
  }
  func.func @transform_11(%arg0: i32) -> (i32, i32, i32) {
    %c0_i32 = arith.constant 0 : i32
    %c0_i32_0 = arith.constant 0 : i32
    %c0_i32_1 = arith.constant 0 : i32
    return %arg0, %c0_i32, %c0_i32_0 : i32, i32, i32
  }
  func.func @transform_12(%arg0: i32) -> (i32, i32, i32) {
    %c0_i32 = arith.constant 0 : i32
    %c0_i32_0 = arith.constant 0 : i32
    %c0_i32_1 = arith.constant 0 : i32
    return %arg0, %c0_i32, %c0_i32_0 : i32, i32, i32
  }
  func.func @transform_13(%arg0: i32) -> (i32, i32, i32) {
    %c0_i32 = arith.constant 0 : i32
    %c0_i32_0 = arith.constant 0 : i32
    %c0_i32_1 = arith.constant 0 : i32
    return %arg0, %c0_i32, %c0_i32_0 : i32, i32, i32
  }
  func.func @transform_14(%arg0: i32) -> (i32, i32, i32) {
    %c0_i32 = arith.constant 0 : i32
    %c0_i32_0 = arith.constant 0 : i32
    %c0_i32_1 = arith.constant 0 : i32
    return %arg0, %c0_i32, %c0_i32_0 : i32, i32, i32
  }
  func.func @transform_15(%arg0: i32) -> (i32, i32, i32) {
    %c0_i32 = arith.constant 0 : i32
    %c0_i32_0 = arith.constant 0 : i32
    %c0_i32_1 = arith.constant 0 : i32
    return %arg0, %c0_i32, %c0_i32_0 : i32, i32, i32
  }
  func.func @transform_16(%arg0: i32) -> (i32, i32) {
    %c0_i32 = arith.constant 0 : i32
    %c0_i32_0 = arith.constant 0 : i32
    %c0_i32_1 = arith.constant 0 : i32
    return %c0_i32, %c0_i32_0 : i32, i32
  }
  func.func @transform_17(%arg0: i32) -> (i32, i32) {
    %c0_i32 = arith.constant 0 : i32
    %c0_i32_0 = arith.constant 0 : i32
    %c0_i32_1 = arith.constant 0 : i32
    return %c0_i32, %c0_i32_0 : i32, i32
  }
  func.func @transform_18(%arg0: i32) -> (i32, i32) {
    %c0_i32 = arith.constant 0 : i32
    %c0_i32_0 = arith.constant 0 : i32
    %c0_i32_1 = arith.constant 0 : i32
    return %c0_i32, %c0_i32_0 : i32, i32
  }
}

</mosaic_0001>

<llo_original>
// kernel: transformer_forward.1
$region0: #{transformer_forward.1}
  #allocation0 [shape = 'u32[]', space=smem, size = 0x4, offset = 0x4, fixed_abs, tag = 'smem constant byte address 0x4 - core index']
  #allocation1 [shape = 'u32[144,128]{1,0:T(1,128)}', space=vmem, size = 0x12000, scoped, tag = 'internal scratch']
  #allocation2 [shape = 'f32[16,128]{1,0:T(8,128)}', space=vmem, size = 0x2000, scoped, tag = 'scratch operand']
  %s0 = inlined_call_operand.vmem [shape: f32[16,128], index: 0, kind: input, shape index: {}]
  %s1 = inlined_call_operand.vmem [shape: f32[2,8], index: 1, kind: input, shape index: {}]
  %s2 = inlined_call_operand.vmem [shape: f32[1,128], index: 2, kind: input, shape index: {}]
  %s3 = inlined_call_operand.vmem [shape: f32[1,128], index: 3, kind: input, shape index: {}]
  %s4 = inlined_call_operand.hbm [shape: bf16[2,128,384], index: 4, kind: input, shape index: {}]
  %s5 = inlined_call_operand.vmem [shape: f32[2,1,384], index: 5, kind: input, shape index: {}]
  %s6 = inlined_call_operand.vmem [shape: bf16[2,128,128], index: 6, kind: input, shape index: {}]
  %s7 = inlined_call_operand.vmem [shape: f32[2,1,128], index: 7, kind: input, shape index: {}]
  %s8 = inlined_call_operand.vmem [shape: f32[2,1,128], index: 8, kind: input, shape index: {}]
  %s9 = inlined_call_operand.vmem [shape: f32[2,1,128], index: 9, kind: input, shape index: {}]
  %s10 = inlined_call_operand.hbm [shape: bf16[2,128,512], index: 10, kind: input, shape index: {}]
  %s11 = inlined_call_operand.vmem [shape: f32[2,1,512], index: 11, kind: input, shape index: {}]
  %s12 = inlined_call_operand.hbm [shape: bf16[2,512,128], index: 12, kind: input, shape index: {}]
  %s13 = inlined_call_operand.vmem [shape: f32[2,1,128], index: 13, kind: input, shape index: {}]
  %s14 = inlined_call_operand.vmem [shape: f32[2,1,128], index: 14, kind: input, shape index: {}]
  %s15 = inlined_call_operand.vmem [shape: f32[2,1,128], index: 15, kind: input, shape index: {}]
  %s16 = inlined_call_operand.vmem [shape: bf16[128,128], index: 16, kind: input, shape index: {}]
  %s17 = inlined_call_operand.vmem [shape: f32[1,128], index: 17, kind: input, shape index: {}]
  %s18 = inlined_call_operand.hbm [shape: f32[2,128], index: 18, kind: output, shape index: {}]
  %s19 = sld [smem:[#allocation0]]
  $region125: #{transformer_forward.1} parent=0
    _
  %s21 = ssub.s32 1, %s19
  %s22 = scalar_select 0, %s21, %s19
  $region1: #{transformer_forward.1} parent=0
    #allocation3 [shape = 'u8[196608]{0}', space=vmem, size = 0x30000, scoped, tag = 'input window, operand 4']
    #allocation4 [shape = 's32[2]{0}', space=sflag, size = 0x8, scoped, tag = 'scoped memory for transformer_forward.1']
    #allocation5 [shape = 's32[2]{0}', space=sflag, size = 0x8, scoped, tag = 'scoped memory for transformer_forward.1']
    #allocation6 [shape = 'u8[262144]{0}', space=vmem, size = 0x40000, scoped, tag = 'input window, operand 10']
    #allocation7 [shape = 's32[2]{0}', space=sflag, size = 0x8, scoped, tag = 'scoped memory for transformer_forward.1']
    #allocation8 [shape = 'u8[262144]{0}', space=vmem, size = 0x40000, scoped, tag = 'input window, operand 12']
    #allocation9 [shape = 'u8[1024]{0}', space=vmem, size = 0x400, scoped, tag = 'output window, operand 0, single buffered']
    %23 = vsyncpa [#allocation4], 0
    %s24 = scalar_lea.sflag [#allocation4], 1
    %25 = vsyncpa %s24, 0
    %26 = vsyncpa [#allocation7], 0
    %s27 = scalar_lea.sflag [#allocation7], 1
    %28 = vsyncpa %s27, 0
    %29 = vsyncpa [#allocation5], 0
    loop: start=0, step=1, limit=4
    $region2: #{transformer_forward.1} parent=1 // loop_pre_header
      _
    $region3: #{transformer_forward.1} parent=1 // loop_header
      %s31 = sphi 0, %s35
      %p32 = scmp.ge.s32.totalorder %s31, 4
      %s39 = sphi 0, %s39
      %s41 = sphi 0, %s39
      %s42 = sphi 0, %s41
      %s56 = sphi 0, %s42
      %s60 = sphi 0, %s60
      %s62 = sphi 0, %s60
      %s63 = sphi 0, %s62
      %s77 = sphi 0, %s63
      %s81 = sphi 0, %s81
      %s83 = sphi 0, %s81
      %s84 = sphi 0, %s83
      %s98 = sphi 0, %s84
      %s102 = sphi 0, %s102
      %s104 = sphi 0, %s102
      %s105 = sphi 0, %s104
      %s119 = sphi 0, %s105
      %s125 = sphi 0, %s127
      %s128 = sphi 0, %s125
      %s129 = sphi 0, %s128
      %s145 = sphi 0, %s129
      %s151 = sphi 0, %s153
      %s154 = sphi 0, %s151
      %s155 = sphi 0, %s154
      %s171 = sphi 0, %s155
      %s177 = sphi 0, %s179
      %s180 = sphi 0, %s177
      %s181 = sphi 0, %s180
      %s197 = sphi 0, %s181
      %s203 = sphi 0, %s205
      %s206 = sphi 0, %s203
      %s207 = sphi 0, %s206
      %s223 = sphi 0, %s207
      %s229 = sphi 0, %s231
      %s232 = sphi 0, %s229
      %s233 = sphi 0, %s232
      %s249 = sphi 0, %s233
      %s255 = sphi 0, %s257
      %s258 = sphi 0, %s255
      %s259 = sphi 0, %s258
      %s275 = sphi 0, %s259
      %s281 = sphi 0, %s283
      %s284 = sphi 0, %s281
      %s285 = sphi 0, %s284
      %s301 = sphi 0, %s285
      %s307 = sphi 0, %s309
      %s310 = sphi 0, %s307
      %s311 = sphi 0, %s310
      %s327 = sphi 0, %s311
      %s333 = sphi 0, %s335
      %s336 = sphi 0, %s333
      %s337 = sphi 0, %s336
      %s353 = sphi 0, %s337
      %s359 = sphi 0, %s361
      %s362 = sphi 0, %s359
      %s363 = sphi 0, %s362
      %s379 = sphi 0, %s363
      %s385 = sphi 0, %s387
      %s388 = sphi 0, %s385
      %s389 = sphi 0, %s388
      %s405 = sphi 0, %s389
      %s411 = sphi 0, %s413
      %s414 = sphi 0, %s411
      %s415 = sphi 0, %s414
      %s431 = sphi 0, %s415
      %s435 = sphi 0, %s435
      %s437 = sphi 0, %s435
      %s438 = sphi 0, %s437
      %s452 = sphi 0, %s438
      %s456 = sphi 0, %s456
      %s458 = sphi 0, %s456
      %s459 = sphi 0, %s458
      %s473 = sphi 0, %s459
      %s477 = sphi 0, %s477
      %s479 = sphi 0, %s477
      %s480 = sphi 0, %s479
      %s494 = sphi 0, %s480
    $region4: #{transformer_forward.1} parent=1 // loop_header_branch
      %34 = sbr.rel (%p32) target = $region8
    $region5: #{transformer_forward.1} parent=1 // loop_body
      %s36 = ssub.s32 %s31, 1
      %s37 = ssub.s32 %s31, 2
      %s38 = sadd.s32 %s31, 1
      %s40 = sadd.s32 %s39, 1
      %p43 = scmp.eq.s32.totalorder %s31, 1
      %p44 = scmp.ne.s32.totalorder %s39, %s41
      %p45 = scmp.eq.s32.totalorder %s31, 0
      %p46 = por %p44, %p45
      %p47 = scmp.ne.s32.totalorder %s39, %s41
      %p48 = scmp.eq.s32.totalorder %s36, 1
      %p49 = por %p47, %p48
      %p50 = scmp.ne.s32.totalorder %s41, %s42
      %p51 = scmp.eq.s32.totalorder %s36, 0
      %p52 = por %p50, %p51
      %p53 = scmp.ne.s32.totalorder %s41, %s42
      %p54 = scmp.eq.s32.totalorder %s37, 1
      %p55 = por %p53, %p54
      %p57 = scmp.ne.s32.totalorder %s42, %s56
      %p58 = scmp.eq.s32.totalorder %s37, 0
      %p59 = por %p57, %p58
      %s61 = sadd.s32 %s60, 1
      %p64 = scmp.eq.s32.totalorder %s31, 1
      %p65 = scmp.ne.s32.totalorder %s60, %s62
      %p66 = scmp.eq.s32.totalorder %s31, 0
      %p67 = por %p65, %p66
      %p68 = scmp.ne.s32.totalorder %s60, %s62
      %p69 = scmp.eq.s32.totalorder %s36, 1
      %p70 = por %p68, %p69
      %p71 = scmp.ne.s32.totalorder %s62, %s63
      %p72 = scmp.eq.s32.totalorder %s36, 0
      %p73 = por %p71, %p72
      %p74 = scmp.ne.s32.totalorder %s62, %s63
      %p75 = scmp.eq.s32.totalorder %s37, 1
      %p76 = por %p74, %p75
      %p78 = scmp.ne.s32.totalorder %s63, %s77
      %p79 = scmp.eq.s32.totalorder %s37, 0
      %p80 = por %p78, %p79
      %s82 = sadd.s32 %s81, 1
      %p85 = scmp.eq.s32.totalorder %s31, 1
      %p86 = scmp.ne.s32.totalorder %s81, %s83
      %p87 = scmp.eq.s32.totalorder %s31, 0
      %p88 = por %p86, %p87
      %p89 = scmp.ne.s32.totalorder %s81, %s83
      %p90 = scmp.eq.s32.totalorder %s36, 1
      %p91 = por %p89, %p90
      %p92 = scmp.ne.s32.totalorder %s83, %s84
      %p93 = scmp.eq.s32.totalorder %s36, 0
      %p94 = por %p92, %p93
      %p95 = scmp.ne.s32.totalorder %s83, %s84
      %p96 = scmp.eq.s32.totalorder %s37, 1
      %p97 = por %p95, %p96
      %p99 = scmp.ne.s32.totalorder %s84, %s98
      %p100 = scmp.eq.s32.totalorder %s37, 0
      %p101 = por %p99, %p100
      %s103 = sadd.s32 %s102, 1
      %p106 = scmp.eq.s32.totalorder %s31, 1
      %p107 = scmp.ne.s32.totalorder %s102, %s104
      %p108 = scmp.eq.s32.totalorder %s31, 0
      %p109 = por %p107, %p108
      %p110 = scmp.ne.s32.totalorder %s102, %s104
      %p111 = scmp.eq.s32.totalorder %s36, 1
      %p112 = por %p110, %p111
      %p113 = scmp.ne.s32.totalorder %s104, %s105
      %p114 = scmp.eq.s32.totalorder %s36, 0
      %p115 = por %p113, %p114
      %p116 = scmp.ne.s32.totalorder %s104, %s105
      %p117 = scmp.eq.s32.totalorder %s37, 1
      %p118 = por %p116, %p117
      %p120 = scmp.ne.s32.totalorder %s105, %s119
      %p121 = scmp.eq.s32.totalorder %s37, 0
      %p122 = por %p120, %p121
      %s123 = ssub.s32 %s31, %s38
      %p124 = scmp.eq.s32.totalorder %s123, 0
      %s126 = sadd.s32 %s125, 1
      %s127 = scalar_select %p124, %s125, %s126
      %p130 = pneg %p124
      %p131 = scmp.eq.s32.totalorder %s31, 1
      %p132 = por %p130, %p131
      %p133 = scmp.ne.s32.totalorder %s125, %s128
      %p134 = scmp.eq.s32.totalorder %s31, 0
      %p135 = por %p133, %p134
      %p136 = scmp.ne.s32.totalorder %s125, %s128
      %p137 = scmp.eq.s32.totalorder %s36, 1
      %p138 = por %p136, %p137
      %p139 = scmp.ne.s32.totalorder %s128, %s129
      %p140 = scmp.eq.s32.totalorder %s36, 0
      %p141 = por %p139, %p140
      %p142 = scmp.ne.s32.totalorder %s128, %s129
      %p143 = scmp.eq.s32.totalorder %s37, 1
      %p144 = por %p142, %p143
      %p146 = scmp.ne.s32.totalorder %s129, %s145
      %p147 = scmp.eq.s32.totalorder %s37, 0
      %p148 = por %p146, %p147
      %s149 = ssub.s32 %s31, %s38
      %p150 = scmp.eq.s32.totalorder %s149, 0
      %s152 = sadd.s32 %s151, 1
      %s153 = scalar_select %p150, %s151, %s152
      %p156 = pneg %p150
      %p157 = scmp.eq.s32.totalorder %s31, 1
      %p158 = por %p156, %p157
      %p159 = scmp.ne.s32.totalorder %s151, %s154
      %p160 = scmp.eq.s32.totalorder %s31, 0
      %p161 = por %p159, %p160
      %p162 = scmp.ne.s32.totalorder %s151, %s154
      %p163 = scmp.eq.s32.totalorder %s36, 1
      %p164 = por %p162, %p163
      %p165 = scmp.ne.s32.totalorder %s154, %s155
      %p166 = scmp.eq.s32.totalorder %s36, 0
      %p167 = por %p165, %p166
      %p168 = scmp.ne.s32.totalorder %s154, %s155
      %p169 = scmp.eq.s32.totalorder %s37, 1
      %p170 = por %p168, %p169
      %p172 = scmp.ne.s32.totalorder %s155, %s171
      %p173 = scmp.eq.s32.totalorder %s37, 0
      %p174 = por %p172, %p173
      %s175 = ssub.s32 %s31, %s38
      %p176 = scmp.eq.s32.totalorder %s175, 0
      %s178 = sadd.s32 %s177, 1
      %s179 = scalar_select %p176, %s177, %s178
      %p182 = pneg %p176
      %p183 = scmp.eq.s32.totalorder %s31, 1
      %p184 = por %p182, %p183
      %p185 = scmp.ne.s32.totalorder %s177, %s180
      %p186 = scmp.eq.s32.totalorder %s31, 0
      %p187 = por %p185, %p186
      %p188 = scmp.ne.s32.totalorder %s177, %s180
      %p189 = scmp.eq.s32.totalorder %s36, 1
      %p190 = por %p188, %p189
      %p191 = scmp.ne.s32.totalorder %s180, %s181
      %p192 = scmp.eq.s32.totalorder %s36, 0
      %p193 = por %p191, %p192
      %p194 = scmp.ne.s32.totalorder %s180, %s181
      %p195 = scmp.eq.s32.totalorder %s37, 1
      %p196 = por %p194, %p195
      %p198 = scmp.ne.s32.totalorder %s181, %s197
      %p199 = scmp.eq.s32.totalorder %s37, 0
      %p200 = por %p198, %p199
      %s201 = ssub.s32 %s31, %s38
      %p202 = scmp.eq.s32.totalorder %s201, 0
      %s204 = sadd.s32 %s203, 1
      %s205 = scalar_select %p202, %s203, %s204
      %p208 = pneg %p202
      %p209 = scmp.eq.s32.totalorder %s31, 1
      %p210 = por %p208, %p209
      %p211 = scmp.ne.s32.totalorder %s203, %s206
      %p212 = scmp.eq.s32.totalorder %s31, 0
      %p213 = por %p211, %p212
      %p214 = scmp.ne.s32.totalorder %s203, %s206
      %p215 = scmp.eq.s32.totalorder %s36, 1
      %p216 = por %p214, %p215
      %p217 = scmp.ne.s32.totalorder %s206, %s207
      %p218 = scmp.eq.s32.totalorder %s36, 0
      %p219 = por %p217, %p218
      %p220 = scmp.ne.s32.totalorder %s206, %s207
      %p221 = scmp.eq.s32.totalorder %s37, 1
      %p222 = por %p220, %p221
      %p224 = scmp.ne.s32.totalorder %s207, %s223
      %p225 = scmp.eq.s32.totalorder %s37, 0
      %p226 = por %p224, %p225
      %s227 = ssub.s32 %s31, %s38
      %p228 = scmp.eq.s32.totalorder %s227, 0
      %s230 = sadd.s32 %s229, 1
      %s231 = scalar_select %p228, %s229, %s230
      %p234 = pneg %p228
      %p235 = scmp.eq.s32.totalorder %s31, 1
      %p236 = por %p234, %p235
      %p237 = scmp.ne.s32.totalorder %s229, %s232
      %p238 = scmp.eq.s32.totalorder %s31, 0
      %p239 = por %p237, %p238
      %p240 = scmp.ne.s32.totalorder %s229, %s232
      %p241 = scmp.eq.s32.totalorder %s36, 1
      %p242 = por %p240, %p241
      %p243 = scmp.ne.s32.totalorder %s232, %s233
      %p244 = scmp.eq.s32.totalorder %s36, 0
      %p245 = por %p243, %p244
      %p246 = scmp.ne.s32.totalorder %s232, %s233
      %p247 = scmp.eq.s32.totalorder %s37, 1
      %p248 = por %p246, %p247
      %p250 = scmp.ne.s32.totalorder %s233, %s249
      %p251 = scmp.eq.s32.totalorder %s37, 0
      %p252 = por %p250, %p251
      %s253 = ssub.s32 %s31, %s38
      %p254 = scmp.eq.s32.totalorder %s253, 0
      %s256 = sadd.s32 %s255, 1
      %s257 = scalar_select %p254, %s255, %s256
      %p260 = pneg %p254
      %p261 = scmp.eq.s32.totalorder %s31, 1
      %p262 = por %p260, %p261
      %p263 = scmp.ne.s32.totalorder %s255, %s258
      %p264 = scmp.eq.s32.totalorder %s31, 0
      %p265 = por %p263, %p264
      %p266 = scmp.ne.s32.totalorder %s255, %s258
      %p267 = scmp.eq.s32.totalorder %s36, 1
      %p268 = por %p266, %p267
      %p269 = scmp.ne.s32.totalorder %s258, %s259
      %p270 = scmp.eq.s32.totalorder %s36, 0
      %p271 = por %p269, %p270
      %p272 = scmp.ne.s32.totalorder %s258, %s259
      %p273 = scmp.eq.s32.totalorder %s37, 1
      %p274 = por %p272, %p273
      %p276 = scmp.ne.s32.totalorder %s259, %s275
      %p277 = scmp.eq.s32.totalorder %s37, 0
      %p278 = por %p276, %p277
      %s279 = ssub.s32 %s31, %s38
      %p280 = scmp.eq.s32.totalorder %s279, 0
      %s282 = sadd.s32 %s281, 1
      %s283 = scalar_select %p280, %s281, %s282
      %p286 = pneg %p280
      %p287 = scmp.eq.s32.totalorder %s31, 1
      %p288 = por %p286, %p287
      %p289 = scmp.ne.s32.totalorder %s281, %s284
      %p290 = scmp.eq.s32.totalorder %s31, 0
      %p291 = por %p289, %p290
      %p292 = scmp.ne.s32.totalorder %s281, %s284
      %p293 = scmp.eq.s32.totalorder %s36, 1
      %p294 = por %p292, %p293
      %p295 = scmp.ne.s32.totalorder %s284, %s285
      %p296 = scmp.eq.s32.totalorder %s36, 0
      %p297 = por %p295, %p296
      %p298 = scmp.ne.s32.totalorder %s284, %s285
      %p299 = scmp.eq.s32.totalorder %s37, 1
      %p300 = por %p298, %p299
      %p302 = scmp.ne.s32.totalorder %s285, %s301
      %p303 = scmp.eq.s32.totalorder %s37, 0
      %p304 = por %p302, %p303
      %s305 = ssub.s32 %s31, %s38
      %p306 = scmp.eq.s32.totalorder %s305, 0
      %s308 = sadd.s32 %s307, 1
      %s309 = scalar_select %p306, %s307, %s308
      %p312 = pneg %p306
      %p313 = scmp.eq.s32.totalorder %s31, 1
      %p314 = por %p312, %p313
      %p315 = scmp.ne.s32.totalorder %s307, %s310
      %p316 = scmp.eq.s32.totalorder %s31, 0
      %p317 = por %p315, %p316
      %p318 = scmp.ne.s32.totalorder %s307, %s310
      %p319 = scmp.eq.s32.totalorder %s36, 1
      %p320 = por %p318, %p319
      %p321 = scmp.ne.s32.totalorder %s310, %s311
      %p322 = scmp.eq.s32.totalorder %s36, 0
      %p323 = por %p321, %p322
      %p324 = scmp.ne.s32.totalorder %s310, %s311
      %p325 = scmp.eq.s32.totalorder %s37, 1
      %p326 = por %p324, %p325
      %p328 = scmp.ne.s32.totalorder %s311, %s327
      %p329 = scmp.eq.s32.totalorder %s37, 0
      %p330 = por %p328, %p329
      %s331 = ssub.s32 %s31, %s38
      %p332 = scmp.eq.s32.totalorder %s331, 0
      %s334 = sadd.s32 %s333, 1
      %s335 = scalar_select %p332, %s333, %s334
      %p338 = pneg %p332
      %p339 = scmp.eq.s32.totalorder %s31, 1
      %p340 = por %p338, %p339
      %p341 = scmp.ne.s32.totalorder %s333, %s336
      %p342 = scmp.eq.s32.totalorder %s31, 0
      %p343 = por %p341, %p342
      %p344 = scmp.ne.s32.totalorder %s333, %s336
      %p345 = scmp.eq.s32.totalorder %s36, 1
      %p346 = por %p344, %p345
      %p347 = scmp.ne.s32.totalorder %s336, %s337
      %p348 = scmp.eq.s32.totalorder %s36, 0
      %p349 = por %p347, %p348
      %p350 = scmp.ne.s32.totalorder %s336, %s337
      %p351 = scmp.eq.s32.totalorder %s37, 1
      %p352 = por %p350, %p351
      %p354 = scmp.ne.s32.totalorder %s337, %s353
      %p355 = scmp.eq.s32.totalorder %s37, 0
      %p356 = por %p354, %p355
      %s357 = ssub.s32 %s31, %s38
      %p358 = scmp.eq.s32.totalorder %s357, 0
      %s360 = sadd.s32 %s359, 1
      %s361 = scalar_select %p358, %s359, %s360
      %p364 = pneg %p358
      %p365 = scmp.eq.s32.totalorder %s31, 1
      %p366 = por %p364, %p365
      %p367 = scmp.ne.s32.totalorder %s359, %s362
      %p368 = scmp.eq.s32.totalorder %s31, 0
      %p369 = por %p367, %p368
      %p370 = scmp.ne.s32.totalorder %s359, %s362
      %p371 = scmp.eq.s32.totalorder %s36, 1
      %p372 = por %p370, %p371
      %p373 = scmp.ne.s32.totalorder %s362, %s363
      %p374 = scmp.eq.s32.totalorder %s36, 0
      %p375 = por %p373, %p374
      %p376 = scmp.ne.s32.totalorder %s362, %s363
      %p377 = scmp.eq.s32.totalorder %s37, 1
      %p378 = por %p376, %p377
      %p380 = scmp.ne.s32.totalorder %s363, %s379
      %p381 = scmp.eq.s32.totalorder %s37, 0
      %p382 = por %p380, %p381
      %s383 = ssub.s32 %s31, %s38
      %p384 = scmp.eq.s32.totalorder %s383, 0
      %s386 = sadd.s32 %s385, 1
      %s387 = scalar_select %p384, %s385, %s386
      %p390 = pneg %p384
      %p391 = scmp.eq.s32.totalorder %s31, 1
      %p392 = por %p390, %p391
      %p393 = scmp.ne.s32.totalorder %s385, %s388
      %p394 = scmp.eq.s32.totalorder %s31, 0
      %p395 = por %p393, %p394
      %p396 = scmp.ne.s32.totalorder %s385, %s388
      %p397 = scmp.eq.s32.totalorder %s36, 1
      %p398 = por %p396, %p397
      %p399 = scmp.ne.s32.totalorder %s388, %s389
      %p400 = scmp.eq.s32.totalorder %s36, 0
      %p401 = por %p399, %p400
      %p402 = scmp.ne.s32.totalorder %s388, %s389
      %p403 = scmp.eq.s32.totalorder %s37, 1
      %p404 = por %p402, %p403
      %p406 = scmp.ne.s32.totalorder %s389, %s405
      %p407 = scmp.eq.s32.totalorder %s37, 0
      %p408 = por %p406, %p407
      %s409 = ssub.s32 %s31, %s38
      %p410 = scmp.eq.s32.totalorder %s409, 0
      %s412 = sadd.s32 %s411, 1
      %s413 = scalar_select %p410, %s411, %s412
      %p416 = pneg %p410
      %p417 = scmp.eq.s32.totalorder %s31, 1
      %p418 = por %p416, %p417
      %p419 = scmp.ne.s32.totalorder %s411, %s414
      %p420 = scmp.eq.s32.totalorder %s31, 0
      %p421 = por %p419, %p420
      %p422 = scmp.ne.s32.totalorder %s411, %s414
      %p423 = scmp.eq.s32.totalorder %s36, 1
      %p424 = por %p422, %p423
      %p425 = scmp.ne.s32.totalorder %s414, %s415
      %p426 = scmp.eq.s32.totalorder %s36, 0
      %p427 = por %p425, %p426
      %p428 = scmp.ne.s32.totalorder %s414, %s415
      %p429 = scmp.eq.s32.totalorder %s37, 1
      %p430 = por %p428, %p429
      %p432 = scmp.ne.s32.totalorder %s415, %s431
      %p433 = scmp.eq.s32.totalorder %s37, 0
      %p434 = por %p432, %p433
      %s436 = sadd.s32 %s435, 1
      %p439 = scmp.eq.s32.totalorder %s31, 1
      %p440 = scmp.ne.s32.totalorder %s435, %s437
      %p441 = scmp.eq.s32.totalorder %s31, 0
      %p442 = por %p440, %p441
      %p443 = scmp.ne.s32.totalorder %s435, %s437
      %p444 = scmp.eq.s32.totalorder %s36, 1
      %p445 = por %p443, %p444
      %p446 = scmp.ne.s32.totalorder %s437, %s438
      %p447 = scmp.eq.s32.totalorder %s36, 0
      %p448 = por %p446, %p447
      %p449 = scmp.ne.s32.totalorder %s437, %s438
      %p450 = scmp.eq.s32.totalorder %s37, 1
      %p451 = por %p449, %p450
      %p453 = scmp.ne.s32.totalorder %s438, %s452
      %p454 = scmp.eq.s32.totalorder %s37, 0
      %p455 = por %p453, %p454
      %s457 = sadd.s32 %s456, 1
      %p460 = scmp.eq.s32.totalorder %s31, 1
      %p461 = scmp.ne.s32.totalorder %s456, %s458
      %p462 = scmp.eq.s32.totalorder %s31, 0
      %p463 = por %p461, %p462
      %p464 = scmp.ne.s32.totalorder %s456, %s458
      %p465 = scmp.eq.s32.totalorder %s36, 1
      %p466 = por %p464, %p465
      %p467 = scmp.ne.s32.totalorder %s458, %s459
      %p468 = scmp.eq.s32.totalorder %s36, 0
      %p469 = por %p467, %p468
      %p470 = scmp.ne.s32.totalorder %s458, %s459
      %p471 = scmp.eq.s32.totalorder %s37, 1
      %p472 = por %p470, %p471
      %p474 = scmp.ne.s32.totalorder %s459, %s473
      %p475 = scmp.eq.s32.totalorder %s37, 0
      %p476 = por %p474, %p475
      %s478 = sadd.s32 %s477, 1
      %p481 = scmp.eq.s32.totalorder %s31, 1
      %p482 = scmp.ne.s32.totalorder %s477, %s479
      %p483 = scmp.eq.s32.totalorder %s31, 0
      %p484 = por %p482, %p483
      %p485 = scmp.ne.s32.totalorder %s477, %s479
      %p486 = scmp.eq.s32.totalorder %s36, 1
      %p487 = por %p485, %p486
      %p488 = scmp.ne.s32.totalorder %s479, %s480
      %p489 = scmp.eq.s32.totalorder %s36, 0
      %p490 = por %p488, %p489
      %p491 = scmp.ne.s32.totalorder %s479, %s480
      %p492 = scmp.eq.s32.totalorder %s37, 1
      %p493 = por %p491, %p492
      %p495 = scmp.ne.s32.totalorder %s480, %s494
      %p496 = scmp.eq.s32.totalorder %s37, 0
      %p497 = por %p495, %p496
      %p498 = scmp.le.s32.totalorder 1, %s31
      %p499 = scmp.lt.s32.totalorder %s31, 3
      %p500 = pnand %p498, %p499
      %p501 = pneg %p500
      // Predicated region
      $region9: #{transformer_forward.1} parent=5 // pred_check
        _
      $region10: #{transformer_forward.1} parent=5 // pred_check_branch
        %503 = sbr.rel (%p500) target = $region12
      $region11: #{transformer_forward.1} parent=5 // pred_region
        %s504 = ssub.s32 %s31, 1
        // Predicated region
        $region13: #{transformer_forward.1} parent=11 // pred_check
          %p505 = pneg %p52
        $region14: #{transformer_forward.1} parent=11 // pred_check_branch
          %507 = sbr.rel (%p505) target = $region16
        $region15: #{transformer_forward.1} parent=11 // pred_region
          _
        $region16: #{transformer_forward.1} parent=11 // pred_fallthru
          _
        // Predicated region
        $region17: #{transformer_forward.1} parent=11 // pred_check
          %p508 = pneg %p73
        $region18: #{transformer_forward.1} parent=11 // pred_check_branch
          %510 = sbr.rel (%p508) target = $region20
        $region19: #{transformer_forward.1} parent=11 // pred_region
          _
        $region20: #{transformer_forward.1} parent=11 // pred_fallthru
          _
        // Predicated region
        $region21: #{transformer_forward.1} parent=11 // pred_check
          %p511 = pneg %p94
        $region22: #{transformer_forward.1} parent=11 // pred_check_branch
          %513 = sbr.rel (%p511) target = $region24
        $region23: #{transformer_forward.1} parent=11 // pred_region
          _
        $region24: #{transformer_forward.1} parent=11 // pred_fallthru
          _
        // Predicated region
        $region25: #{transformer_forward.1} parent=11 // pred_check
          %p514 = pneg %p115
        $region26: #{transformer_forward.1} parent=11 // pred_check_branch
          %516 = sbr.rel (%p514) target = $region28
        $region27: #{transformer_forward.1} parent=11 // pred_region
          _
        $region28: #{transformer_forward.1} parent=11 // pred_fallthru
          _
        // Predicated region
        $region29: #{transformer_forward.1} parent=11 // pred_check
          %p517 = pneg %p448
        $region30: #{transformer_forward.1} parent=11 // pred_check_branch
          %519 = sbr.rel (%p517) target = $region32
        $region31: #{transformer_forward.1} parent=11 // pred_region
          _
        $region32: #{transformer_forward.1} parent=11 // pred_fallthru
          _
        // Predicated region
        $region33: #{transformer_forward.1} parent=11 // pred_check
          %p520 = pneg %p469
        $region34: #{transformer_forward.1} parent=11 // pred_check_branch
          %522 = sbr.rel (%p520) target = $region36
        $region35: #{transformer_forward.1} parent=11 // pred_region
          _
        $region36: #{transformer_forward.1} parent=11 // pred_fallthru
          _
      $region12: #{transformer_forward.1} parent=5 // pred_fallthru
        _
      %p523 = scmp.lt.s32.totalorder %s31, 2
      // Predicated region
      $region37: #{transformer_forward.1} parent=5 // pred_check
        %p524 = pneg %p523
      $region38: #{transformer_forward.1} parent=5 // pred_check_branch
        %526 = sbr.rel (%p524) target = $region40
      $region39: #{transformer_forward.1} parent=5 // pred_region
        // Predicated region
        $region41: #{transformer_forward.1} parent=39 // pred_check
          %p527 = pneg %p135
        $region42: #{transformer_forward.1} parent=39 // pred_check_branch
          %529 = sbr.rel (%p527) target = $region44
        $region43: #{transformer_forward.1} parent=39 // pred_region
          %s530 = sand.u32 %s125, 1
          %s531 = scalar_lea.sflag [#allocation4], %s530
          %s532 = sand.u32 %s125, 1
          %s533 = smul.addr %s532, 192
          %s534 = scalar_lea.vmem [#allocation3], %s533
          %s536 = ssub.s32 3072, 3072
          %537 = vsyncadd %s531, %s536
          %s538 = smul.addr %s31, 48
          %s539 = smul.addr %s538, 64
          %s540 = scalar_lea.hbm %s4, %s539
          %s541 = sshll.u32 %s534, 4
          %s542 = int_to_ptr.vmem [resolvable:$true] %s541
          %547 = dma.hbm_to_vmem [thread:$0]  %s540, 3072, %s542, %s531, 192, 192, 12
        $region44: #{transformer_forward.1} parent=39 // pred_fallthru
          _
        // Predicated region
        $region45: #{transformer_forward.1} parent=39 // pred_check
          %p548 = pneg %p161
        $region46: #{transformer_forward.1} parent=39 // pred_check_branch
          %550 = sbr.rel (%p548) target = $region48
        $region47: #{transformer_forward.1} parent=39 // pred_region
          %p551 = scmp.lt.s32.totalorder %s31, 1
          %s552 = scalar_select %p551, %s31, 1
          %s553 = smul.addr %s552, 3
          %s554 = scalar_lea.vmem %s5, %s553
        $region48: #{transformer_forward.1} parent=39 // pred_fallthru
          _
        // Predicated region
        $region49: #{transformer_forward.1} parent=39 // pred_check
          %p555 = pneg %p187
        $region50: #{transformer_forward.1} parent=39 // pred_check_branch
          %557 = sbr.rel (%p555) target = $region52
        $region51: #{transformer_forward.1} parent=39 // pred_region
          %p558 = scmp.lt.s32.totalorder %s31, 1
          %s559 = scalar_select %p558, %s31, 1
          %s560 = smul.addr %s559, 16
          %s561 = smul.addr %s560, 4
          %s562 = scalar_lea.vmem %s6, %s561
        $region52: #{transformer_forward.1} parent=39 // pred_fallthru
          _
        // Predicated region
        $region53: #{transformer_forward.1} parent=39 // pred_check
          %p563 = pneg %p213
        $region54: #{transformer_forward.1} parent=39 // pred_check_branch
          %565 = sbr.rel (%p563) target = $region56
        $region55: #{transformer_forward.1} parent=39 // pred_region
          %p566 = scmp.lt.s32.totalorder %s31, 1
          %s567 = scalar_select %p566, %s31, 1
          %s568 = scalar_lea.vmem %s7, %s567
        $region56: #{transformer_forward.1} parent=39 // pred_fallthru
          _
        // Predicated region
        $region57: #{transformer_forward.1} parent=39 // pred_check
          %p569 = pneg %p239
        $region58: #{transformer_forward.1} parent=39 // pred_check_branch
          %571 = sbr.rel (%p569) target = $region60
        $region59: #{transformer_forward.1} parent=39 // pred_region
          %p572 = scmp.lt.s32.totalorder %s31, 1
          %s573 = scalar_select %p572, %s31, 1
          %s574 = scalar_lea.vmem %s8, %s573
        $region60: #{transformer_forward.1} parent=39 // pred_fallthru
          _
        // Predicated region
        $region61: #{transformer_forward.1} parent=39 // pred_check
          %p575 = pneg %p265
        $region62: #{transformer_forward.1} parent=39 // pred_check_branch
          %577 = sbr.rel (%p575) target = $region64
        $region63: #{transformer_forward.1} parent=39 // pred_region
          %p578 = scmp.lt.s32.totalorder %s31, 1
          %s579 = scalar_select %p578, %s31, 1
          %s580 = scalar_lea.vmem %s9, %s579
        $region64: #{transformer_forward.1} parent=39 // pred_fallthru
          _
        // Predicated region
        $region65: #{transformer_forward.1} parent=39 // pred_check
          %p581 = pneg %p291
        $region66: #{transformer_forward.1} parent=39 // pred_check_branch
          %583 = sbr.rel (%p581) target = $region68
        $region67: #{transformer_forward.1} parent=39 // pred_region
          %s584 = sand.u32 %s31, 1
          %s585 = scalar_lea.sflag [#allocation7], %s584
          %s586 = sand.u32 %s281, 1
          %s587 = smul.addr %s586, 256
          %s588 = scalar_lea.vmem [#allocation6], %s587
          %s590 = ssub.s32 4096, 4096
          %591 = vsyncadd %s585, %s590
          %s592 = smul.addr %s31, 64
          %s593 = smul.addr %s592, 64
          %s594 = scalar_lea.hbm %s10, %s593
          %s595 = sshll.u32 %s588, 4
          %s596 = int_to_ptr.vmem [resolvable:$true] %s595
          %601 = dma.hbm_to_vmem [thread:$0]  %s594, 4096, %s596, %s585, 256, 256, 16
        $region68: #{transformer_forward.1} parent=39 // pred_fallthru
          _
        // Predicated region
        $region69: #{transformer_forward.1} parent=39 // pred_check
          %p602 = pneg %p317
        $region70: #{transformer_forward.1} parent=39 // pred_check_branch
          %604 = sbr.rel (%p602) target = $region72
        $region71: #{transformer_forward.1} parent=39 // pred_region
          %p605 = scmp.lt.s32.totalorder %s31, 1
          %s606 = scalar_select %p605, %s31, 1
          %s607 = smul.addr %s606, 4
          %s608 = scalar_lea.vmem %s11, %s607
        $region72: #{transformer_forward.1} parent=39 // pred_fallthru
          _
        // Predicated region
        $region73: #{transformer_forward.1} parent=39 // pred_check
          %p609 = pneg %p343
        $region74: #{transformer_forward.1} parent=39 // pred_check_branch
          %611 = sbr.rel (%p609) target = $region76
        $region75: #{transformer_forward.1} parent=39 // pred_region
          %s612 = sand.u32 %s31, 1
          %s613 = scalar_lea.sflag [#allocation7], %s612
          %s614 = sand.u32 %s333, 1
          %s615 = smul.addr %s614, 256
          %s616 = scalar_lea.vmem [#allocation8], %s615
          %s618 = ssub.s32 4096, 4096
          %619 = vsyncadd %s613, %s618
          %s620 = smul.addr %s31, 64
          %s621 = smul.addr %s620, 64
          %s622 = scalar_lea.hbm %s12, %s621
          %s623 = sshll.u32 %s616, 4
          %s624 = int_to_ptr.vmem [resolvable:$true] %s623
          %629 = dma.hbm_to_vmem [thread:$0]  %s622, 4096, %s624, %s613, 64, 64, 4
        $region76: #{transformer_forward.1} parent=39 // pred_fallthru
          _
        // Predicated region
        $region77: #{transformer_forward.1} parent=39 // pred_check
          %p630 = pneg %p369
        $region78: #{transformer_forward.1} parent=39 // pred_check_branch
          %632 = sbr.rel (%p630) target = $region80
        $region79: #{transformer_forward.1} parent=39 // pred_region
          %p633 = scmp.lt.s32.totalorder %s31, 1
          %s634 = scalar_select %p633, %s31, 1
          %s635 = scalar_lea.vmem %s13, %s634
        $region80: #{transformer_forward.1} parent=39 // pred_fallthru
          _
        // Predicated region
        $region81: #{transformer_forward.1} parent=39 // pred_check
          %p636 = pneg %p395
        $region82: #{transformer_forward.1} parent=39 // pred_check_branch
          %638 = sbr.rel (%p636) target = $region84
        $region83: #{transformer_forward.1} parent=39 // pred_region
          %p639 = scmp.lt.s32.totalorder %s31, 1
          %s640 = scalar_select %p639, %s31, 1
          %s641 = scalar_lea.vmem %s14, %s640
        $region84: #{transformer_forward.1} parent=39 // pred_fallthru
          _
        // Predicated region
        $region85: #{transformer_forward.1} parent=39 // pred_check
          %p642 = pneg %p421
        $region86: #{transformer_forward.1} parent=39 // pred_check_branch
          %644 = sbr.rel (%p642) target = $region88
        $region87: #{transformer_forward.1} parent=39 // pred_region
          %p645 = scmp.lt.s32.totalorder %s31, 1
          %s646 = scalar_select %p645, %s31, 1
          %s647 = scalar_lea.vmem %s15, %s646
        $region88: #{transformer_forward.1} parent=39 // pred_fallthru
          _
      $region40: #{transformer_forward.1} parent=5 // pred_fallthru
        _
      %p648 = scmp.le.s32.totalorder 1, %s31
      %p649 = scmp.lt.s32.totalorder %s31, 3
      %p650 = pnand %p648, %p649
      %p651 = pneg %p650
      // Predicated region
      $region89: #{transformer_forward.1} parent=5 // pred_check
        _
      $region90: #{transformer_forward.1} parent=5 // pred_check_branch
        %653 = sbr.rel (%p650) target = $region92
      $region91: #{transformer_forward.1} parent=5 // pred_region
        %s654 = ssub.s32 %s31, 1
        %s655 = sand.u32 %s128, 1
        %s656 = scalar_lea.sflag [#allocation4], %s655
        %s657 = sand.u32 %s128, 1
        %s658 = smul.addr %s657, 192
        %s659 = scalar_lea.vmem [#allocation3], %s658
        // Predicated region
        $region93: #{transformer_forward.1} parent=91 // pred_check
          %p660 = pneg %p141
        $region94: #{transformer_forward.1} parent=91 // pred_check_branch
          %662 = sbr.rel (%p660) target = $region96
        $region95: #{transformer_forward.1} parent=91 // pred_region
          %663 = dma.done %s656, 3072
        $region96: #{transformer_forward.1} parent=91 // pred_fallthru
          _
        %s664 = sand.u32 %s36, 1
        %s665 = scalar_lea.sflag [#allocation7], %s664
        %s666 = sand.u32 %s284, 1
        %s667 = smul.addr %s666, 256
        %s668 = scalar_lea.vmem [#allocation6], %s667
        // Predicated region
        $region97: #{transformer_forward.1} parent=91 // pred_check
          %p669 = pneg %p297
        $region98: #{transformer_forward.1} parent=91 // pred_check_branch
          %671 = sbr.rel (%p669) target = $region100
        $region99: #{transformer_forward.1} parent=91 // pred_region
          %672 = dma.done %s665, 4096
        $region100: #{transformer_forward.1} parent=91 // pred_fallthru
          _
        %s673 = sand.u32 %s36, 1
        %s674 = scalar_lea.sflag [#allocation7], %s673
        %s675 = sand.u32 %s336, 1
        %s676 = smul.addr %s675, 256
        %s677 = scalar_lea.vmem [#allocation8], %s676
        // Predicated region
        $region101: #{transformer_forward.1} parent=91 // pred_check
          %p678 = pneg %p349
        $region102: #{transformer_forward.1} parent=91 // pred_check_branch
          %680 = sbr.rel (%p678) target = $region104
        $region103: #{transformer_forward.1} parent=91 // pred_region
          %681 = dma.done %s674, 4096
        $region104: #{transformer_forward.1} parent=91 // pred_fallthru
          _
        %p682 = pneg %p52
        %p683 = pneg %p49
        %p684 = pneg %p73
        %p685 = pneg %p70
        %p686 = pneg %p94
        %p687 = pneg %p91
        %p688 = pneg %p115
        %p689 = pneg %p112
        %s690 = sand.u32 %s128, 1
        %s691 = scalar_lea.sflag [#allocation4], %s690
        %s692 = sand.u32 %s128, 1
        %s693 = smul.addr %s692, 192
        %s694 = scalar_lea.vmem [#allocation3], %s693
        %p695 = pneg %p141
        %p696 = pneg %p138
        %p697 = scmp.lt.s32.totalorder %s36, 1
        %s698 = scalar_select %p697, %s36, 1
        %s699 = smul.addr %s698, 3
        %s700 = scalar_lea.vmem %s5, %s699
        %p701 = pneg %p167
        %p702 = pneg %p164
        %p703 = scmp.lt.s32.totalorder %s36, 1
        %s704 = scalar_select %p703, %s36, 1
        %s705 = smul.addr %s704, 16
        %s706 = smul.addr %s705, 4
        %s707 = scalar_lea.vmem %s6, %s706
        %p708 = pneg %p193
        %p709 = pneg %p190
        %p710 = scmp.lt.s32.totalorder %s36, 1
        %s711 = scalar_select %p710, %s36, 1
        %s712 = scalar_lea.vmem %s7, %s711
        %p713 = pneg %p219
        %p714 = pneg %p216
        %p715 = scmp.lt.s32.totalorder %s36, 1
        %s716 = scalar_select %p715, %s36, 1
        %s717 = scalar_lea.vmem %s8, %s716
        %p718 = pneg %p245
        %p719 = pneg %p242
        %p720 = scmp.lt.s32.totalorder %s36, 1
        %s721 = scalar_select %p720, %s36, 1
        %s722 = scalar_lea.vmem %s9, %s721
        %p723 = pneg %p271
        %p724 = pneg %p268
        %s725 = sand.u32 %s36, 1
        %s726 = scalar_lea.sflag [#allocation7], %s725
        %s727 = sand.u32 %s284, 1
        %s728 = smul.addr %s727, 256
        %s729 = scalar_lea.vmem [#allocation6], %s728
        %p730 = pneg %p297
        %p731 = pneg %p294
        %p732 = scmp.lt.s32.totalorder %s36, 1
        %s733 = scalar_select %p732, %s36, 1
        %s734 = smul.addr %s733, 4
        %s735 = scalar_lea.vmem %s11, %s734
        %p736 = pneg %p323
        %p737 = pneg %p320
        %s738 = sand.u32 %s36, 1
        %s739 = scalar_lea.sflag [#allocation7], %s738
        %s740 = sand.u32 %s336, 1
        %s741 = smul.addr %s740, 256
        %s742 = scalar_lea.vmem [#allocation8], %s741
        %p743 = pneg %p349
        %p744 = pneg %p346
        %p745 = scmp.lt.s32.totalorder %s36, 1
        %s746 = scalar_select %p745, %s36, 1
        %s747 = scalar_lea.vmem %s13, %s746
        %p748 = pneg %p375
        %p749 = pneg %p372
        %p750 = scmp.lt.s32.totalorder %s36, 1
        %s751 = scalar_select %p750, %s36, 1
        %s752 = scalar_lea.vmem %s14, %s751
        %p753 = pneg %p401
        %p754 = pneg %p398
        %p755 = scmp.lt.s32.totalorder %s36, 1
        %s756 = scalar_select %p755, %s36, 1
        %s757 = scalar_lea.vmem %s15, %s756
        %p758 = pneg %p427
        %p759 = pneg %p424
        %p760 = pneg %p448
        %p761 = pneg %p445
        %p762 = pneg %p469
        %p763 = pneg %p466
        %p764 = pneg %p490
        %p765 = pneg %p487
        %p766 = scmp.lt.s32.totalorder %s36, 1
        %s767 = scalar_select %p766, %s36, 1
        %s768 = smul.addr %s767, 3
        %s769 = scalar_lea.vmem %s5, %s768
        %p770 = scmp.lt.s32.totalorder %s36, 1
        %s771 = scalar_select %p770, %s36, 1
        %s772 = smul.addr %s771, 16
        %s773 = smul.addr %s772, 4
        %s774 = scalar_lea.vmem %s6, %s773
        %p775 = scmp.lt.s32.totalorder %s36, 1
        %s776 = scalar_select %p775, %s36, 1
        %s777 = scalar_lea.vmem %s7, %s776
        %p778 = scmp.lt.s32.totalorder %s36, 1
        %s779 = scalar_select %p778, %s36, 1
        %s780 = scalar_lea.vmem %s8, %s779
        %p781 = scmp.lt.s32.totalorder %s36, 1
        %s782 = scalar_select %p781, %s36, 1
        %s783 = scalar_lea.vmem %s9, %s782
        %p784 = scmp.lt.s32.totalorder %s36, 1
        %s785 = scalar_select %p784, %s36, 1
        %s786 = smul.addr %s785, 4
        %s787 = scalar_lea.vmem %s11, %s786
        %p788 = scmp.lt.s32.totalorder %s36, 1
        %s789 = scalar_select %p788, %s36, 1
        %s790 = scalar_lea.vmem %s13, %s789
        %p791 = scmp.lt.s32.totalorder %s36, 1
        %s792 = scalar_select %p791, %s36, 1
        %s793 = scalar_lea.vmem %s14, %s792
        %p794 = scmp.lt.s32.totalorder %s36, 1
        %s795 = scalar_select %p794, %s36, 1
        %s796 = scalar_lea.vmem %s15, %s795
        %p798 = scmp.eq.s32.totalorder %s36, 0
        // Predicated region
        $region105: #{transformer_forward.1} parent=91 // pred_check
          %p799 = pneg %p798
        $region106: #{transformer_forward.1} parent=91 // pred_check_branch
          %801 = sbr.rel (%p799) target = $region108
        $region107: #{transformer_forward.1} parent=91 // pred_region
          %v802 = vld [vmem:[%s0] sm:$0xff]
          %v803 = vld [vmem:[%s0 + $0x8] sm:$0xff]
          %v804 = vld [vmem:[%s2] sm:$0x1]
          %v805 = vld [vmem:[%s3] sm:$0x1]
          %806 = vadd.xlane.f32.xlu0 %v802
          %v807 = vpop.xlane.xlu0 %806
          %808 = vadd.xlane.f32.xlu0 %v803
          %v809 = vpop.xlane.xlu0 %808
          %v810 = vrcp.pop 128.0
          %v811 = vmul.f32 %v807, %v810
          %v812 = vmul.f32 %v809, %v810
          %v813 = vsub.f32 %v802, %v811
          %v814 = vsub.f32 %v803, %v812
          %v815 = vmul.f32 %v813, %v813
          %v816 = vmul.f32 %v814, %v814
          %817 = vadd.xlane.f32.xlu0 %v815
          %v818 = vpop.xlane.xlu0 %817
          %819 = vadd.xlane.f32.xlu0 %v816
          %v820 = vpop.xlane.xlu0 %819
          %v821 = vmul.f32 %v818, %v810
          %v822 = vmul.f32 %v820, %v810
          %v823 = vadd.f32 %v821, 1e-12
          %v824 = vadd.f32 %v822, 1e-12
          %v825 = vrsqrt.pop %v823
          %v826 = vrsqrt.pop %v824
          %v827 = vmul.f32 %v813, %v825
          %v828 = vmul.f32 %v814, %v826
          %v830 = vlaneseq
          %v831 = vshrl.u32 %v830, 7
          %v832 = vsub.s32 0, %v831
          %v833 = vrot.slane %v804, %v832
          %v835 = vmul.f32 %v827, %v833
          %v836 = vmul.f32 %v828, %v833
          %v838 = vlaneseq
          %v839 = vshrl.u32 %v838, 7
          %v840 = vsub.s32 0, %v839
          %v841 = vrot.slane %v805, %v840
          %v843 = vadd.f32 %v835, %v841
          %v844 = vadd.f32 %v836, %v841
          %845 = vst [vmem:[#allocation2] sm:$0xff] %v843
          %846 = vst [vmem:[#allocation2 + $0x8] sm:$0xff] %v844
        $region108: #{transformer_forward.1} parent=91 // pred_fallthru
          _
        %v847 = vld [vmem:[#allocation2] sm:$0xff]
        %v848 = vld [vmem:[#allocation2 + $0x8] sm:$0xff]
        %v849 = vpack.c.bf16 %v848, %v847
        %v850 = vld [vmem:[%s659] sm:$0xff]
        %v851 = vld [vmem:[%s659 + $0x8] sm:$0xf]
        %v852 = vld [vmem:[%s659 + $0xc] sm:$0xff]
        %v853 = vld [vmem:[%s659 + $0x14] sm:$0xf]
        %v854 = vld [vmem:[%s659 + $0x18] sm:$0xff]
        %v855 = vld [vmem:[%s659 + $0x20] sm:$0xf]
        %v856 = vld [vmem:[%s659 + $0x24] sm:$0xff]
        %v857 = vld [vmem:[%s659 + $0x2c] sm:$0xf]
        %v858 = vld [vmem:[%s659 + $0x30] sm:$0xff]
        %v859 = vld [vmem:[%s659 + $0x38] sm:$0xf]
        %v860 = vld [vmem:[%s659 + $0x3c] sm:$0xff]
        %v861 = vld [vmem:[%s659 + $0x44] sm:$0xf]
        %v862 = vld [vmem:[%s659 + $0x48] sm:$0xff]
        %v863 = vld [vmem:[%s659 + $0x50] sm:$0xf]
        %v864 = vld [vmem:[%s659 + $0x54] sm:$0xff]
        %v865 = vld [vmem:[%s659 + $0x5c] sm:$0xf]
        %v866 = vld [vmem:[%s659 + $0x60] sm:$0xff]
        %v867 = vld [vmem:[%s659 + $0x68] sm:$0xf]
        %v868 = vld [vmem:[%s659 + $0x6c] sm:$0xff]
        %v869 = vld [vmem:[%s659 + $0x74] sm:$0xf]
        %v870 = vld [vmem:[%s659 + $0x78] sm:$0xff]
        %v871 = vld [vmem:[%s659 + $0x80] sm:$0xf]
        %v872 = vld [vmem:[%s659 + $0x84] sm:$0xff]
        %v873 = vld [vmem:[%s659 + $0x8c] sm:$0xf]
        %v874 = vld [vmem:[%s659 + $0x90] sm:$0xff]
        %v875 = vld [vmem:[%s659 + $0x98] sm:$0xf]
        %v876 = vld [vmem:[%s659 + $0x9c] sm:$0xff]
        %v877 = vld [vmem:[%s659 + $0xa4] sm:$0xf]
        %v878 = vld [vmem:[%s659 + $0xa8] sm:$0xff]
        %v879 = vld [vmem:[%s659 + $0xb0] sm:$0xf]
        %v880 = vld [vmem:[%s659 + $0xb4] sm:$0xff]
        %v881 = vld [vmem:[%s659 + $0xbc] sm:$0xf]
        %v882 = vld [vmem:[%s769] sm:$0x7]
        %v884 = vlaneseq
        %v885 = vshrl.u32 %v884, 7
        %v886 = vsub.s32 0, %v885
        %v887 = vrot.slane %v882, %v886
        %v888 = vlaneseq
        %v889 = vshrl.u32 %v888, 7
        %v890 = vsub.s32 1, %v889
        %v891 = vrot.slane %v882, %v890
        %v892 = vlaneseq
        %v893 = vshrl.u32 %v892, 7
        %v894 = vsub.s32 2, %v893
        %v895 = vrot.slane %v882, %v894
        %v931 = vunpack.c.l.b16 %v850
        %v932 = vunpack.c.h.b16 %v850
        %v933 = vunpack.c.l.b16 %v851
        %v934 = vunpack.c.l.b16 %v852
        %v935 = vunpack.c.h.b16 %v852
        %v936 = vunpack.c.l.b16 %v853
        %v937 = vunpack.c.l.b16 %v854
        %v938 = vunpack.c.h.b16 %v854
        %v939 = vunpack.c.l.b16 %v855
        %v940 = vunpack.c.l.b16 %v856
        %v941 = vunpack.c.h.b16 %v856
        %v942 = vunpack.c.l.b16 %v857
        %v943 = vunpack.c.l.b16 %v858
        %v944 = vunpack.c.h.b16 %v858
        %v945 = vunpack.c.l.b16 %v859
        %v946 = vunpack.c.l.b16 %v860
        %v947 = vunpack.c.h.b16 %v860
        %v948 = vunpack.c.l.b16 %v861
        %v949 = vunpack.c.l.b16 %v862
        %v950 = vunpack.c.h.b16 %v862
        %v951 = vunpack.c.l.b16 %v863
        %v952 = vunpack.c.l.b16 %v864
        %v953 = vunpack.c.h.b16 %v864
        %v954 = vunpack.c.l.b16 %v865
        %v955 = vunpack.c.l.b16 %v866
        %v956 = vunpack.c.h.b16 %v866
        %v957 = vunpack.c.l.b16 %v867
        %v958 = vunpack.c.l.b16 %v868
        %v959 = vunpack.c.h.b16 %v868
        %v960 = vunpack.c.l.b16 %v869
        %v961 = vunpack.c.l.b16 %v870
        %v962 = vunpack.c.h.b16 %v870
        %v963 = vunpack.c.l.b16 %v871
        %v964 = vunpack.c.l.b16 %v872
        %v965 = vunpack.c.h.b16 %v872
        %v966 = vunpack.c.l.b16 %v873
        %v967 = vunpack.c.l.b16 %v874
        %v968 = vunpack.c.h.b16 %v874
        %v969 = vunpack.c.l.b16 %v875
        %v970 = vunpack.c.l.b16 %v876
        %v971 = vunpack.c.h.b16 %v876
        %v972 = vunpack.c.l.b16 %v877
        %v973 = vunpack.c.l.b16 %v878
        %v974 = vunpack.c.h.b16 %v878
        %v975 = vunpack.c.l.b16 %v879
        %v976 = vunpack.c.l.b16 %v880
        %v977 = vunpack.c.h.b16 %v880
        %v978 = vunpack.c.l.b16 %v881
        %v979 = vpack.c.b16 %v934, %v931
        %v980 = vpack.c.b16 %v935, %v932
        %v981 = vpack.c.b16 %v936, %v933
        %v982 = vpack.c.b16 %v940, %v937
        %v983 = vpack.c.b16 %v941, %v938
        %v984 = vpack.c.b16 %v942, %v939
        %v985 = vpack.c.b16 %v946, %v943
        %v986 = vpack.c.b16 %v947, %v944
        %v987 = vpack.c.b16 %v948, %v945
        %v988 = vpack.c.b16 %v952, %v949
        %v989 = vpack.c.b16 %v953, %v950
        %v990 = vpack.c.b16 %v954, %v951
        %v991 = vpack.c.b16 %v958, %v955
        %v992 = vpack.c.b16 %v959, %v956
        %v993 = vpack.c.b16 %v960, %v957
        %v994 = vpack.c.b16 %v964, %v961
        %v995 = vpack.c.b16 %v965, %v962
        %v996 = vpack.c.b16 %v966, %v963
        %v997 = vpack.c.b16 %v970, %v967
        %v998 = vpack.c.b16 %v971, %v968
        %v999 = vpack.c.b16 %v972, %v969
        %v1000 = vpack.c.b16 %v976, %v973
        %v1001 = vpack.c.b16 %v977, %v974
        %v1002 = vpack.c.b16 %v978, %v975
        %1027 = vmatprep.subr.bf16.mxu0 %v1001
        %1028 = vmatpush1.bf16.msra.mxu0 %v1000
        %1029 = vmatprep.subr.bf16.mxu0 %v998
        %1030 = vmatpush1.bf16.msra.mxu0 %v997
        %1031 = vmatprep.subr.bf16.mxu0 %v995
        %1032 = vmatpush1.bf16.msra.mxu0 %v994
        %1033 = vmatprep.subr.bf16.mxu0 %v992
        %1034 = vmatpush1.bf16.msra.mxu0 %v991
        %1035 = vmatprep.subr.bf16.mxu0 %v989
        %1036 = vmatpush1.bf16.msra.mxu0 %v988
        %1037 = vmatprep.subr.bf16.mxu0 %v986
        %1038 = vmatpush1.bf16.msra.mxu0 %v985
        %1039 = vmatprep.subr.bf16.mxu0 %v983
        %1040 = vmatpush1.bf16.msra.mxu0 %v982
        %1041 = vmatprep.subr.bf16.mxu0 %v980
        %1042 = vmatpush1.bf16.msra.mxu0 %v979
        %1043 = vmatprep.subr.bf16.mxu0 0
        %1044 = vmatpush2.bf16.msra.mxu0 0
        %1045 = vmatprep.subr.bf16.mxu0 0
        %1046 = vmatpush2.bf16.msra.mxu0 0
        %1047 = vmatprep.subr.bf16.mxu0 0
        %1048 = vmatpush2.bf16.msra.mxu0 0
        %1049 = vmatprep.subr.bf16.mxu0 0
        %1050 = vmatpush2.bf16.msra.mxu0 0
        %1051 = vmatprep.subr.bf16.mxu0 0
        %1052 = vmatpush2.bf16.msra.mxu0 0
        %1053 = vmatprep.subr.bf16.mxu0 0
        %1054 = vmatpush2.bf16.msra.mxu0 0
        %1055 = vmatprep.subr.bf16.mxu0 0
        %1056 = vmatpush2.bf16.msra.mxu0 0
        %1057 = vmatprep.subr.bf16.mxu0 0
        %1058 = vmatpush2.bf16.msra.mxu0 0
        %1059 = vmatprep.mubr.bf16.mxu0 0
        %1060 = vmatmul.mubr.bf16.gmra.mxu0 %v849
        %v1061 = vpop.f32.mrf.mxu0
        %v1062 = vadd.f32 %v887, %v1061
        %v1063 = vpop.f32.mrf.mxu0
        %v1064 = vadd.f32 %v891, %v1063
        %v1065 = vpop.f32.mrf.mxu0
        %v1066 = vadd.f32 %v887, %v1065
        %v1067 = vpop.f32.mrf.mxu0
        %v1068 = vadd.f32 %v891, %v1067
        %1069 = vdwg.mxu0
        %1070 = vmatprep.subr.bf16.mxu0 0
        %1071 = vmatpush1.bf16.msra.mxu0 %v1002
        %1072 = vmatprep.subr.bf16.mxu0 0
        %1073 = vmatpush1.bf16.msra.mxu0 %v999
        %1074 = vmatprep.subr.bf16.mxu0 0
        %1075 = vmatpush1.bf16.msra.mxu0 %v996
        %1076 = vmatprep.subr.bf16.mxu0 0
        %1077 = vmatpush1.bf16.msra.mxu0 %v993
        %1078 = vmatprep.subr.bf16.mxu0 0
        %1079 = vmatpush1.bf16.msra.mxu0 %v990
        %1080 = vmatprep.subr.bf16.mxu0 0
        %1081 = vmatpush1.bf16.msra.mxu0 %v987
        %1082 = vmatprep.subr.bf16.mxu0 0
        %1083 = vmatpush1.bf16.msra.mxu0 %v984
        %1084 = vmatprep.subr.bf16.mxu0 0
        %1085 = vmatpush1.bf16.msra.mxu0 %v981
        %1086 = vmatprep.subr.bf16.mxu0 0
        %1087 = vmatpush2.bf16.msra.mxu0 0
        %1088 = vmatprep.subr.bf16.mxu0 0
        %1089 = vmatpush2.bf16.msra.mxu0 0
        %1090 = vmatprep.subr.bf16.mxu0 0
        %1091 = vmatpush2.bf16.msra.mxu0 0
        %1092 = vmatprep.subr.bf16.mxu0 0
        %1093 = vmatpush2.bf16.msra.mxu0 0
        %1094 = vmatprep.subr.bf16.mxu0 0
        %1095 = vmatpush2.bf16.msra.mxu0 0
        %1096 = vmatprep.subr.bf16.mxu0 0
        %1097 = vmatpush2.bf16.msra.mxu0 0
        %1098 = vmatprep.subr.bf16.mxu0 0
        %1099 = vmatpush2.bf16.msra.mxu0 0
        %1100 = vmatprep.subr.bf16.mxu0 0
        %1101 = vmatpush2.bf16.msra.mxu0 0
        %1102 = vmatprep.mubr.bf16.mxu0 0
        %1103 = vmatmul.mubr.bf16.gmra.mxu0 %v849
        %v1104 = vpop.f32.mrf.mxu0
        %v1105 = vadd.f32 %v895, %v1104
        %v1106 = vpop.f32.mrf.mxu0
        %v1107 = vpop.f32.mrf.mxu0
        %v1108 = vadd.f32 %v895, %v1107
        %v1109 = vpop.f32.mrf.mxu0
        %1110 = vdwg.mxu0
        %v1111 = vpack.c.bf16 %v1066, %v1062
        %v1112 = vpack.c.bf16 %v1068, %v1064
        %v1113 = vpack.c.bf16 %v1108, %v1105
        %v1114 = vld [vmem:[%s1] sm:$0x3]
        %v1115 = vlaneseq
        %v1116 = vshrl.u32 %v1115, 7
        %v1117 = vsub.s32 0, %v1116
        %v1118 = vrot.slane %v1114, %v1117
        %vm1119 = vcmask 261120
        %v1121 = vsel %vm1119, %v1111, 0
        %v1124 = vsel %vm1119, %v1112, 0
        %1126 = vmatprep.subr.bf16.mxu0 0
        %1127 = vmatpush1.bf16.xpose.msra.mxu0 0
        %1128 = vmatprep.subr.bf16.mxu0 0
        %1129 = vmatpush1.bf16.xpose.msra.mxu0 0
        %1130 = vmatprep.subr.bf16.mxu0 0
        %1131 = vmatpush1.bf16.xpose.msra.mxu0 0
        %1132 = vmatprep.subr.bf16.mxu0 0
        %1133 = vmatpush1.bf16.xpose.msra.mxu0 0
        %1134 = vmatprep.subr.bf16.mxu0 0
        %1135 = vmatpush1.bf16.xpose.msra.mxu0 0
        %1136 = vmatprep.subr.bf16.mxu0 0
        %1137 = vmatpush1.bf16.xpose.msra.mxu0 0
        %1138 = vmatprep.subr.bf16.mxu0 0
        %1139 = vmatpush1.bf16.xpose.msra.mxu0 0
        %1140 = vmatprep.subr.bf16.mxu0 0
        %1141 = vmatpush1.bf16.xpose.msra.mxu0 %v1124
        %1142 = vmatprep.subr.bf16.mxu0 0
        %1143 = vmatpush2.bf16.xpose.msra.mxu0 0
        %1144 = vmatprep.subr.bf16.mxu0 0
        %1145 = vmatpush2.bf16.xpose.msra.mxu0 0
        %1146 = vmatprep.subr.bf16.mxu0 0
        %1147 = vmatpush2.bf16.xpose.msra.mxu0 0
        %1148 = vmatprep.subr.bf16.mxu0 0
        %1149 = vmatpush2.bf16.xpose.msra.mxu0 0
        %1150 = vmatprep.subr.bf16.mxu0 0
        %1151 = vmatpush2.bf16.xpose.msra.mxu0 0
        %1152 = vmatprep.subr.bf16.mxu0 0
        %1153 = vmatpush2.bf16.xpose.msra.mxu0 0
        %1154 = vmatprep.subr.bf16.mxu0 0
        %1155 = vmatpush2.bf16.xpose.msra.mxu0 0
        %1156 = vmatprep.subr.bf16.mxu0 0
        %1157 = vmatpush2.bf16.xpose.msra.mxu0 0
        %1158 = vmatprep.mubr.bf16.mxu0 0
        %1159 = vmatmul.mubr.bf16.gmra.mxu0 %v1121
        %v1160 = vpop.f32.mrf.mxu0
        %v1161 = vadd.f32 %v1118, %v1160
        %v1162 = vpop.f32.mrf.mxu0
        %v1163 = vpop.f32.mrf.mxu0
        %v1164 = vpop.f32.mrf.mxu0
        %1165 = vdwg.mxu0
        %vm1166 = vcmask 64512
        %v1167 = vsel %vm1166, %v1161, -inf
        %1168 = vmax.xlane.f32.xlu0 %v1167
        %v1169 = vpop.xlane.xlu0 %1168
        %v1170 = vsub.f32 %v1161, %v1169
        %v1171 = vmul.f32 %v1170, 1.442695
        %v1172 = vpow.pop %v1171
        %v1173 = vsel %vm1166, %v1172, 0.0
        %1174 = vadd.xlane.f32.xlu0 %v1173
        %v1175 = vpop.xlane.xlu0 %1174
        %v1176 = vrcp.pop %v1175
        %v1177 = vmul.f32 %v1172, %v1176
        %v1178 = vpack.c.bf16 %v1177, %v1177
        %v1180 = vsel %vm1166, %v1178, 0
        %vm1182 = vcmask 1043456
        %v1184 = vsel %vm1182, %v1113, 0
        %1186 = vmatprep.subr.bf16.mxu0 0
        %1187 = vmatpush1.bf16.msra.mxu0 0
        %1188 = vmatprep.subr.bf16.mxu0 0
        %1189 = vmatpush1.bf16.msra.mxu0 0
        %1190 = vmatprep.subr.bf16.mxu0 0
        %1191 = vmatpush1.bf16.msra.mxu0 0
        %1192 = vmatprep.subr.bf16.mxu0 0
        %1193 = vmatpush1.bf16.msra.mxu0 0
        %1194 = vmatprep.subr.bf16.mxu0 0
        %1195 = vmatpush1.bf16.msra.mxu0 0
        %1196 = vmatprep.subr.bf16.mxu0 0
        %1197 = vmatpush1.bf16.msra.mxu0 0
        %1198 = vmatprep.subr.bf16.mxu0 0
        %1199 = vmatpush1.bf16.msra.mxu0 0
        %1200 = vmatprep.subr.bf16.mxu0 0
        %1201 = vmatpush1.bf16.msra.mxu0 %v1184
        %1202 = vmatprep.subr.bf16.mxu0 0
        %1203 = vmatpush2.bf16.msra.mxu0 0
        %1204 = vmatprep.subr.bf16.mxu0 0
        %1205 = vmatpush2.bf16.msra.mxu0 0
        %1206 = vmatprep.subr.bf16.mxu0 0
        %1207 = vmatpush2.bf16.msra.mxu0 0
        %1208 = vmatprep.subr.bf16.mxu0 0
        %1209 = vmatpush2.bf16.msra.mxu0 0
        %1210 = vmatprep.subr.bf16.mxu0 0
        %1211 = vmatpush2.bf16.msra.mxu0 0
        %1212 = vmatprep.subr.bf16.mxu0 0
        %1213 = vmatpush2.bf16.msra.mxu0 0
        %1214 = vmatprep.subr.bf16.mxu0 0
        %1215 = vmatpush2.bf16.msra.mxu0 0
        %1216 = vmatprep.subr.bf16.mxu0 0
        %1217 = vmatpush2.bf16.msra.mxu0 0
        %1218 = vmatprep.mubr.bf16.mxu0 0
        %1219 = vmatmul.mubr.bf16.gmra.mxu0 %v1180
        %v1220 = vpop.f32.mrf.mxu0
        %v1221 = vadd.f32 0.0, %v1220
        %v1222 = vpop.f32.mrf.mxu0
        %v1223 = vpop.f32.mrf.mxu0
        %v1224 = vpop.f32.mrf.mxu0
        %1225 = vdwg.mxu0
        %1227 = vrot.lane.b32.xlu0 %v1111, 96
        %v1228 = vpop.permute.xlu0 %1227
        %1230 = vrot.lane.b32.xlu0 %v1112, 96
        %v1231 = vpop.permute.xlu0 %1230
        %v1233 = vsel %vm1119, %v1228, 0
        %v1236 = vsel %vm1119, %v1231, 0
        %1238 = vmatprep.subr.bf16.mxu0 0
        %1239 = vmatpush1.bf16.xpose.msra.mxu0 0
        %1240 = vmatprep.subr.bf16.mxu0 0
        %1241 = vmatpush1.bf16.xpose.msra.mxu0 0
        %1242 = vmatprep.subr.bf16.mxu0 0
        %1243 = vmatpush1.bf16.xpose.msra.mxu0 0
        %1244 = vmatprep.subr.bf16.mxu0 0
        %1245 = vmatpush1.bf16.xpose.msra.mxu0 0
        %1246 = vmatprep.subr.bf16.mxu0 0
        %1247 = vmatpush1.bf16.xpose.msra.mxu0 0
        %1248 = vmatprep.subr.bf16.mxu0 0
        %1249 = vmatpush1.bf16.xpose.msra.mxu0 0
        %1250 = vmatprep.subr.bf16.mxu0 0
        %1251 = vmatpush1.bf16.xpose.msra.mxu0 0
        %1252 = vmatprep.subr.bf16.mxu0 0
        %1253 = vmatpush1.bf16.xpose.msra.mxu0 %v1236
        %1254 = vmatprep.subr.bf16.mxu0 0
        %1255 = vmatpush2.bf16.xpose.msra.mxu0 0
        %1256 = vmatprep.subr.bf16.mxu0 0
        %1257 = vmatpush2.bf16.xpose.msra.mxu0 0
        %1258 = vmatprep.subr.bf16.mxu0 0
        %1259 = vmatpush2.bf16.xpose.msra.mxu0 0
        %1260 = vmatprep.subr.bf16.mxu0 0
        %1261 = vmatpush2.bf16.xpose.msra.mxu0 0
        %1262 = vmatprep.subr.bf16.mxu0 0
        %1263 = vmatpush2.bf16.xpose.msra.mxu0 0
        %1264 = vmatprep.subr.bf16.mxu0 0
        %1265 = vmatpush2.bf16.xpose.msra.mxu0 0
        %1266 = vmatprep.subr.bf16.mxu0 0
        %1267 = vmatpush2.bf16.xpose.msra.mxu0 0
        %1268 = vmatprep.subr.bf16.mxu0 0
        %1269 = vmatpush2.bf16.xpose.msra.mxu0 0
        %1270 = vmatprep.mubr.bf16.mxu0 0
        %1271 = vmatmul.mubr.bf16.gmra.mxu0 %v1233
        %v1272 = vpop.f32.mrf.mxu0
        %v1273 = vadd.f32 %v1118, %v1272
        %v1274 = vpop.f32.mrf.mxu0
        %v1275 = vpop.f32.mrf.mxu0
        %v1276 = vpop.f32.mrf.mxu0
        %1277 = vdwg.mxu0
        %v1278 = vsel %vm1166, %v1273, -inf
        %1279 = vmax.xlane.f32.xlu0 %v1278
        %v1280 = vpop.xlane.xlu0 %1279
        %v1281 = vsub.f32 %v1273, %v1280
        %v1282 = vmul.f32 %v1281, 1.442695
        %v1283 = vpow.pop %v1282
        %v1284 = vsel %vm1166, %v1283, 0.0
        %1285 = vadd.xlane.f32.xlu0 %v1284
        %v1286 = vpop.xlane.xlu0 %1285
        %v1287 = vrcp.pop %v1286
        %v1288 = vmul.f32 %v1283, %v1287
        %v1289 = vpack.c.bf16 %v1288, %v1288
        %1291 = vrot.lane.b32.xlu0 %v1113, 96
        %v1292 = vpop.permute.xlu0 %1291
        %v1294 = vsel %vm1166, %v1289, 0
        %v1297 = vsel %vm1182, %v1292, 0
        %1299 = vmatprep.subr.bf16.mxu0 0
        %1300 = vmatpush1.bf16.msra.mxu0 0
        %1301 = vmatprep.subr.bf16.mxu0 0
        %1302 = vmatpush1.bf16.msra.mxu0 0
        %1303 = vmatprep.subr.bf16.mxu0 0
        %1304 = vmatpush1.bf16.msra.mxu0 0
        %1305 = vmatprep.subr.bf16.mxu0 0
        %1306 = vmatpush1.bf16.msra.mxu0 0
        %1307 = vmatprep.subr.bf16.mxu0 0
        %1308 = vmatpush1.bf16.msra.mxu0 0
        %1309 = vmatprep.subr.bf16.mxu0 0
        %1310 = vmatpush1.bf16.msra.mxu0 0
        %1311 = vmatprep.subr.bf16.mxu0 0
        %1312 = vmatpush1.bf16.msra.mxu0 0
        %1313 = vmatprep.subr.bf16.mxu0 0
        %1314 = vmatpush1.bf16.msra.mxu0 %v1297
        %1315 = vmatprep.subr.bf16.mxu0 0
        %1316 = vmatpush2.bf16.msra.mxu0 0
        %1317 = vmatprep.subr.bf16.mxu0 0
        %1318 = vmatpush2.bf16.msra.mxu0 0
        %1319 = vmatprep.subr.bf16.mxu0 0
        %1320 = vmatpush2.bf16.msra.mxu0 0
        %1321 = vmatprep.subr.bf16.mxu0 0
        %1322 = vmatpush2.bf16.msra.mxu0 0
        %1323 = vmatprep.subr.bf16.mxu0 0
        %1324 = vmatpush2.bf16.msra.mxu0 0
        %1325 = vmatprep.subr.bf16.mxu0 0
        %1326 = vmatpush2.bf16.msra.mxu0 0
        %1327 = vmatprep.subr.bf16.mxu0 0
        %1328 = vmatpush2.bf16.msra.mxu0 0
        %1329 = vmatprep.subr.bf16.mxu0 0
        %1330 = vmatpush2.bf16.msra.mxu0 0
        %1331 = vmatprep.mubr.bf16.mxu0 0
        %1332 = vmatmul.mubr.bf16.gmra.mxu0 %v1294
        %v1333 = vpop.f32.mrf.mxu0
        %v1334 = vadd.f32 0.0, %v1333
        %v1335 = vpop.f32.mrf.mxu0
        %v1336 = vpop.f32.mrf.mxu0
        %v1337 = vpop.f32.mrf.mxu0
        %1338 = vdwg.mxu0
        %1339 = vrot.lane.b32.xlu0 %v1111, 64
        %v1340 = vpop.permute.xlu0 %1339
        %1341 = vrot.lane.b32.xlu0 %v1112, 64
        %v1342 = vpop.permute.xlu0 %1341
        %v1344 = vsel %vm1119, %v1340, 0
        %v1347 = vsel %vm1119, %v1342, 0
        %1349 = vmatprep.subr.bf16.mxu0 0
        %1350 = vmatpush1.bf16.xpose.msra.mxu0 0
        %1351 = vmatprep.subr.bf16.mxu0 0
        %1352 = vmatpush1.bf16.xpose.msra.mxu0 0
        %1353 = vmatprep.subr.bf16.mxu0 0
        %1354 = vmatpush1.bf16.xpose.msra.mxu0 0
        %1355 = vmatprep.subr.bf16.mxu0 0
        %1356 = vmatpush1.bf16.xpose.msra.mxu0 0
        %1357 = vmatprep.subr.bf16.mxu0 0
        %1358 = vmatpush1.bf16.xpose.msra.mxu0 0
        %1359 = vmatprep.subr.bf16.mxu0 0
        %1360 = vmatpush1.bf16.xpose.msra.mxu0 0
        %1361 = vmatprep.subr.bf16.mxu0 0
        %1362 = vmatpush1.bf16.xpose.msra.mxu0 0
        %1363 = vmatprep.subr.bf16.mxu0 0
        %1364 = vmatpush1.bf16.xpose.msra.mxu0 %v1347
        %1365 = vmatprep.subr.bf16.mxu0 0
        %1366 = vmatpush2.bf16.xpose.msra.mxu0 0
        %1367 = vmatprep.subr.bf16.mxu0 0
        %1368 = vmatpush2.bf16.xpose.msra.mxu0 0
        %1369 = vmatprep.subr.bf16.mxu0 0
        %1370 = vmatpush2.bf16.xpose.msra.mxu0 0
        %1371 = vmatprep.subr.bf16.mxu0 0
        %1372 = vmatpush2.bf16.xpose.msra.mxu0 0
        %1373 = vmatprep.subr.bf16.mxu0 0
        %1374 = vmatpush2.bf16.xpose.msra.mxu0 0
        %1375 = vmatprep.subr.bf16.mxu0 0
        %1376 = vmatpush2.bf16.xpose.msra.mxu0 0
        %1377 = vmatprep.subr.bf16.mxu0 0
        %1378 = vmatpush2.bf16.xpose.msra.mxu0 0
        %1379 = vmatprep.subr.bf16.mxu0 0
        %1380 = vmatpush2.bf16.xpose.msra.mxu0 0
        %1381 = vmatprep.mubr.bf16.mxu0 0
        %1382 = vmatmul.mubr.bf16.gmra.mxu0 %v1344
        %v1383 = vpop.f32.mrf.mxu0
        %v1384 = vadd.f32 %v1118, %v1383
        %v1385 = vpop.f32.mrf.mxu0
        %v1386 = vpop.f32.mrf.mxu0
        %v1387 = vpop.f32.mrf.mxu0
        %1388 = vdwg.mxu0
        %v1389 = vsel %vm1166, %v1384, -inf
        %1390 = vmax.xlane.f32.xlu0 %v1389
        %v1391 = vpop.xlane.xlu0 %1390
        %v1392 = vsub.f32 %v1384, %v1391
        %v1393 = vmul.f32 %v1392, 1.442695
        %v1394 = vpow.pop %v1393
        %v1395 = vsel %vm1166, %v1394, 0.0
        %1396 = vadd.xlane.f32.xlu0 %v1395
        %v1397 = vpop.xlane.xlu0 %1396
        %v1398 = vrcp.pop %v1397
        %v1399 = vmul.f32 %v1394, %v1398
        %v1400 = vpack.c.bf16 %v1399, %v1399
        %1401 = vrot.lane.b32.xlu0 %v1113, 64
        %v1402 = vpop.permute.xlu0 %1401
        %v1404 = vsel %vm1166, %v1400, 0
        %v1407 = vsel %vm1182, %v1402, 0
        %1409 = vmatprep.subr.bf16.mxu0 0
        %1410 = vmatpush1.bf16.msra.mxu0 0
        %1411 = vmatprep.subr.bf16.mxu0 0
        %1412 = vmatpush1.bf16.msra.mxu0 0
        %1413 = vmatprep.subr.bf16.mxu0 0
        %1414 = vmatpush1.bf16.msra.mxu0 0
        %1415 = vmatprep.subr.bf16.mxu0 0
        %1416 = vmatpush1.bf16.msra.mxu0 0
        %1417 = vmatprep.subr.bf16.mxu0 0
        %1418 = vmatpush1.bf16.msra.mxu0 0
        %1419 = vmatprep.subr.bf16.mxu0 0
        %1420 = vmatpush1.bf16.msra.mxu0 0
        %1421 = vmatprep.subr.bf16.mxu0 0
        %1422 = vmatpush1.bf16.msra.mxu0 0
        %1423 = vmatprep.subr.bf16.mxu0 0
        %1424 = vmatpush1.bf16.msra.mxu0 %v1407
        %1425 = vmatprep.subr.bf16.mxu0 0
        %1426 = vmatpush2.bf16.msra.mxu0 0
        %1427 = vmatprep.subr.bf16.mxu0 0
        %1428 = vmatpush2.bf16.msra.mxu0 0
        %1429 = vmatprep.subr.bf16.mxu0 0
        %1430 = vmatpush2.bf16.msra.mxu0 0
        %1431 = vmatprep.subr.bf16.mxu0 0
        %1432 = vmatpush2.bf16.msra.mxu0 0
        %1433 = vmatprep.subr.bf16.mxu0 0
        %1434 = vmatpush2.bf16.msra.mxu0 0
        %1435 = vmatprep.subr.bf16.mxu0 0
        %1436 = vmatpush2.bf16.msra.mxu0 0
        %1437 = vmatprep.subr.bf16.mxu0 0
        %1438 = vmatpush2.bf16.msra.mxu0 0
        %1439 = vmatprep.subr.bf16.mxu0 0
        %1440 = vmatpush2.bf16.msra.mxu0 0
        %1441 = vmatprep.mubr.bf16.mxu0 0
        %1442 = vmatmul.mubr.bf16.gmra.mxu0 %v1404
        %v1443 = vpop.f32.mrf.mxu0
        %v1444 = vadd.f32 0.0, %v1443
        %v1445 = vpop.f32.mrf.mxu0
        %v1446 = vpop.f32.mrf.mxu0
        %v1447 = vpop.f32.mrf.mxu0
        %1448 = vdwg.mxu0
        %1449 = vrot.lane.b32.xlu0 %v1111, 32
        %v1450 = vpop.permute.xlu0 %1449
        %1451 = vrot.lane.b32.xlu0 %v1112, 32
        %v1452 = vpop.permute.xlu0 %1451
        %v1454 = vsel %vm1119, %v1450, 0
        %v1457 = vsel %vm1119, %v1452, 0
        %1459 = vmatprep.subr.bf16.mxu0 0
        %1460 = vmatpush1.bf16.xpose.msra.mxu0 0
        %1461 = vmatprep.subr.bf16.mxu0 0
        %1462 = vmatpush1.bf16.xpose.msra.mxu0 0
        %1463 = vmatprep.subr.bf16.mxu0 0
        %1464 = vmatpush1.bf16.xpose.msra.mxu0 0
        %1465 = vmatprep.subr.bf16.mxu0 0
        %1466 = vmatpush1.bf16.xpose.msra.mxu0 0
        %1467 = vmatprep.subr.bf16.mxu0 0
        %1468 = vmatpush1.bf16.xpose.msra.mxu0 0
        %1469 = vmatprep.subr.bf16.mxu0 0
        %1470 = vmatpush1.bf16.xpose.msra.mxu0 0
        %1471 = vmatprep.subr.bf16.mxu0 0
        %1472 = vmatpush1.bf16.xpose.msra.mxu0 0
        %1473 = vmatprep.subr.bf16.mxu0 0
        %1474 = vmatpush1.bf16.xpose.msra.mxu0 %v1457
        %1475 = vmatprep.subr.bf16.mxu0 0
        %1476 = vmatpush2.bf16.xpose.msra.mxu0 0
        %1477 = vmatprep.subr.bf16.mxu0 0
        %1478 = vmatpush2.bf16.xpose.msra.mxu0 0
        %1479 = vmatprep.subr.bf16.mxu0 0
        %1480 = vmatpush2.bf16.xpose.msra.mxu0 0
        %1481 = vmatprep.subr.bf16.mxu0 0
        %1482 = vmatpush2.bf16.xpose.msra.mxu0 0
        %1483 = vmatprep.subr.bf16.mxu0 0
        %1484 = vmatpush2.bf16.xpose.msra.mxu0 0
        %1485 = vmatprep.subr.bf16.mxu0 0
        %1486 = vmatpush2.bf16.xpose.msra.mxu0 0
        %1487 = vmatprep.subr.bf16.mxu0 0
        %1488 = vmatpush2.bf16.xpose.msra.mxu0 0
        %1489 = vmatprep.subr.bf16.mxu0 0
        %1490 = vmatpush2.bf16.xpose.msra.mxu0 0
        %1491 = vmatprep.mubr.bf16.mxu0 0
        %1492 = vmatmul.mubr.bf16.gmra.mxu0 %v1454
        %v1493 = vpop.f32.mrf.mxu0
        %v1494 = vadd.f32 %v1118, %v1493
        %v1495 = vpop.f32.mrf.mxu0
        %v1496 = vpop.f32.mrf.mxu0
        %v1497 = vpop.f32.mrf.mxu0
        %1498 = vdwg.mxu0
        %v1499 = vsel %vm1166, %v1494, -inf
        %1500 = vmax.xlane.f32.xlu0 %v1499
        %v1501 = vpop.xlane.xlu0 %1500
        %v1502 = vsub.f32 %v1494, %v1501
        %v1503 = vmul.f32 %v1502, 1.442695
        %v1504 = vpow.pop %v1503
        %v1505 = vsel %vm1166, %v1504, 0.0
        %1506 = vadd.xlane.f32.xlu0 %v1505
        %v1507 = vpop.xlane.xlu0 %1506
        %v1508 = vrcp.pop %v1507
        %v1509 = vmul.f32 %v1504, %v1508
        %v1510 = vpack.c.bf16 %v1509, %v1509
        %1511 = vrot.lane.b32.xlu0 %v1113, 32
        %v1512 = vpop.permute.xlu0 %1511
        %v1514 = vsel %vm1166, %v1510, 0
        %v1517 = vsel %vm1182, %v1512, 0
        %1519 = vmatprep.subr.bf16.mxu0 0
        %1520 = vmatpush1.bf16.msra.mxu0 0
        %1521 = vmatprep.subr.bf16.mxu0 0
        %1522 = vmatpush1.bf16.msra.mxu0 0
        %1523 = vmatprep.subr.bf16.mxu0 0
        %1524 = vmatpush1.bf16.msra.mxu0 0
        %1525 = vmatprep.subr.bf16.mxu0 0
        %1526 = vmatpush1.bf16.msra.mxu0 0
        %1527 = vmatprep.subr.bf16.mxu0 0
        %1528 = vmatpush1.bf16.msra.mxu0 0
        %1529 = vmatprep.subr.bf16.mxu0 0
        %1530 = vmatpush1.bf16.msra.mxu0 0
        %1531 = vmatprep.subr.bf16.mxu0 0
        %1532 = vmatpush1.bf16.msra.mxu0 0
        %1533 = vmatprep.subr.bf16.mxu0 0
        %1534 = vmatpush1.bf16.msra.mxu0 %v1517
        %1535 = vmatprep.subr.bf16.mxu0 0
        %1536 = vmatpush2.bf16.msra.mxu0 0
        %1537 = vmatprep.subr.bf16.mxu0 0
        %1538 = vmatpush2.bf16.msra.mxu0 0
        %1539 = vmatprep.subr.bf16.mxu0 0
        %1540 = vmatpush2.bf16.msra.mxu0 0
        %1541 = vmatprep.subr.bf16.mxu0 0
        %1542 = vmatpush2.bf16.msra.mxu0 0
        %1543 = vmatprep.subr.bf16.mxu0 0
        %1544 = vmatpush2.bf16.msra.mxu0 0
        %1545 = vmatprep.subr.bf16.mxu0 0
        %1546 = vmatpush2.bf16.msra.mxu0 0
        %1547 = vmatprep.subr.bf16.mxu0 0
        %1548 = vmatpush2.bf16.msra.mxu0 0
        %1549 = vmatprep.subr.bf16.mxu0 0
        %1550 = vmatpush2.bf16.msra.mxu0 0
        %1551 = vmatprep.mubr.bf16.mxu0 0
        %1552 = vmatmul.mubr.bf16.gmra.mxu0 %v1514
        %v1553 = vpop.f32.mrf.mxu0
        %v1554 = vadd.f32 0.0, %v1553
        %v1555 = vpop.f32.mrf.mxu0
        %v1556 = vpop.f32.mrf.mxu0
        %v1557 = vpop.f32.mrf.mxu0
        %1558 = vdwg.mxu0
        %1560 = vrot.lane.b32.xlu0 %v1334, 32
        %v1561 = vpop.permute.xlu0 %1560
        %1564 = vrot.lane.b32.xlu0 %v1444, 64
        %v1565 = vpop.permute.xlu0 %1564
        %1568 = vrot.lane.b32.xlu0 %v1554, 96
        %v1569 = vpop.permute.xlu0 %1568
        %v1571 = vsel %vm1119, %v1221, %v1561
        %vm1572 = vcmask 523264
        %v1573 = vsel %vm1572, %v1571, %v1565
        %vm1574 = vcmask 785408
        %v1575 = vsel %vm1574, %v1573, %v1569
        %v1576 = vlaneseq
        %v1577 = vshrl.u32 %v1576, 7
        %v1578 = vsub.s32 1, %v1577
        %v1579 = vrot.slane %v1114, %v1578
        %v1580 = vrot.slane %v1111, 4
        %v1581 = vrot.slane %v1112, 4
        %v1583 = vsel %vm1119, %v1580, 0
        %v1586 = vsel %vm1119, %v1581, 0
        %1588 = vmatprep.subr.bf16.mxu0 0
        %1589 = vmatpush1.bf16.xpose.msra.mxu0 0
        %1590 = vmatprep.subr.bf16.mxu0 0
        %1591 = vmatpush1.bf16.xpose.msra.mxu0 0
        %1592 = vmatprep.subr.bf16.mxu0 0
        %1593 = vmatpush1.bf16.xpose.msra.mxu0 0
        %1594 = vmatprep.subr.bf16.mxu0 0
        %1595 = vmatpush1.bf16.xpose.msra.mxu0 0
        %1596 = vmatprep.subr.bf16.mxu0 0
        %1597 = vmatpush1.bf16.xpose.msra.mxu0 0
        %1598 = vmatprep.subr.bf16.mxu0 0
        %1599 = vmatpush1.bf16.xpose.msra.mxu0 0
        %1600 = vmatprep.subr.bf16.mxu0 0
        %1601 = vmatpush1.bf16.xpose.msra.mxu0 0
        %1602 = vmatprep.subr.bf16.mxu0 0
        %1603 = vmatpush1.bf16.xpose.msra.mxu0 %v1586
        %1604 = vmatprep.subr.bf16.mxu0 0
        %1605 = vmatpush2.bf16.xpose.msra.mxu0 0
        %1606 = vmatprep.subr.bf16.mxu0 0
        %1607 = vmatpush2.bf16.xpose.msra.mxu0 0
        %1608 = vmatprep.subr.bf16.mxu0 0
        %1609 = vmatpush2.bf16.xpose.msra.mxu0 0
        %1610 = vmatprep.subr.bf16.mxu0 0
        %1611 = vmatpush2.bf16.xpose.msra.mxu0 0
        %1612 = vmatprep.subr.bf16.mxu0 0
        %1613 = vmatpush2.bf16.xpose.msra.mxu0 0
        %1614 = vmatprep.subr.bf16.mxu0 0
        %1615 = vmatpush2.bf16.xpose.msra.mxu0 0
        %1616 = vmatprep.subr.bf16.mxu0 0
        %1617 = vmatpush2.bf16.xpose.msra.mxu0 0
        %1618 = vmatprep.subr.bf16.mxu0 0
        %1619 = vmatpush2.bf16.xpose.msra.mxu0 0
        %1620 = vmatprep.mubr.bf16.mxu0 0
        %1621 = vmatmul.mubr.bf16.gmra.mxu0 %v1583
        %v1622 = vpop.f32.mrf.mxu0
        %v1623 = vadd.f32 %v1579, %v1622
        %v1624 = vpop.f32.mrf.mxu0
        %v1625 = vpop.f32.mrf.mxu0
        %v1626 = vpop.f32.mrf.mxu0
        %1627 = vdwg.mxu0
        %v1628 = vsel %vm1166, %v1623, -inf
        %1629 = vmax.xlane.f32.xlu0 %v1628
        %v1630 = vpop.xlane.xlu0 %1629
        %v1631 = vsub.f32 %v1623, %v1630
        %v1632 = vmul.f32 %v1631, 1.442695
        %v1633 = vpow.pop %v1632
        %v1634 = vsel %vm1166, %v1633, 0.0
        %1635 = vadd.xlane.f32.xlu0 %v1634
        %v1636 = vpop.xlane.xlu0 %1635
        %v1637 = vrcp.pop %v1636
        %v1638 = vmul.f32 %v1633, %v1637
        %v1639 = vpack.c.bf16 %v1638, %v1638
        %v1640 = vrot.slane %v1113, 4
        %v1642 = vsel %vm1166, %v1639, 0
        %v1645 = vsel %vm1182, %v1640, 0
        %1647 = vmatprep.subr.bf16.mxu0 0
        %1648 = vmatpush1.bf16.msra.mxu0 0
        %1649 = vmatprep.subr.bf16.mxu0 0
        %1650 = vmatpush1.bf16.msra.mxu0 0
        %1651 = vmatprep.subr.bf16.mxu0 0
        %1652 = vmatpush1.bf16.msra.mxu0 0
        %1653 = vmatprep.subr.bf16.mxu0 0
        %1654 = vmatpush1.bf16.msra.mxu0 0
        %1655 = vmatprep.subr.bf16.mxu0 0
        %1656 = vmatpush1.bf16.msra.mxu0 0
        %1657 = vmatprep.subr.bf16.mxu0 0
        %1658 = vmatpush1.bf16.msra.mxu0 0
        %1659 = vmatprep.subr.bf16.mxu0 0
        %1660 = vmatpush1.bf16.msra.mxu0 0
        %1661 = vmatprep.subr.bf16.mxu0 0
        %1662 = vmatpush1.bf16.msra.mxu0 %v1645
        %1663 = vmatprep.subr.bf16.mxu0 0
        %1664 = vmatpush2.bf16.msra.mxu0 0
        %1665 = vmatprep.subr.bf16.mxu0 0
        %1666 = vmatpush2.bf16.msra.mxu0 0
        %1667 = vmatprep.subr.bf16.mxu0 0
        %1668 = vmatpush2.bf16.msra.mxu0 0
        %1669 = vmatprep.subr.bf16.mxu0 0
        %1670 = vmatpush2.bf16.msra.mxu0 0
        %1671 = vmatprep.subr.bf16.mxu0 0
        %1672 = vmatpush2.bf16.msra.mxu0 0
        %1673 = vmatprep.subr.bf16.mxu0 0
        %1674 = vmatpush2.bf16.msra.mxu0 0
        %1675 = vmatprep.subr.bf16.mxu0 0
        %1676 = vmatpush2.bf16.msra.mxu0 0
        %1677 = vmatprep.subr.bf16.mxu0 0
        %1678 = vmatpush2.bf16.msra.mxu0 0
        %1679 = vmatprep.mubr.bf16.mxu0 0
        %1680 = vmatmul.mubr.bf16.gmra.mxu0 %v1642
        %v1681 = vpop.f32.mrf.mxu0
        %v1682 = vadd.f32 0.0, %v1681
        %v1683 = vpop.f32.mrf.mxu0
        %v1684 = vpop.f32.mrf.mxu0
        %v1685 = vpop.f32.mrf.mxu0
        %1686 = vdwg.mxu0
        %1687 = vrot.lane.b32.xlu0 %v1580, 96
        %v1688 = vpop.permute.xlu0 %1687
        %1689 = vrot.lane.b32.xlu0 %v1581, 96
        %v1690 = vpop.permute.xlu0 %1689
        %v1692 = vsel %vm1119, %v1688, 0
        %v1695 = vsel %vm1119, %v1690, 0
        %1697 = vmatprep.subr.bf16.mxu0 0
        %1698 = vmatpush1.bf16.xpose.msra.mxu0 0
        %1699 = vmatprep.subr.bf16.mxu0 0
        %1700 = vmatpush1.bf16.xpose.msra.mxu0 0
        %1701 = vmatprep.subr.bf16.mxu0 0
        %1702 = vmatpush1.bf16.xpose.msra.mxu0 0
        %1703 = vmatprep.subr.bf16.mxu0 0
        %1704 = vmatpush1.bf16.xpose.msra.mxu0 0
        %1705 = vmatprep.subr.bf16.mxu0 0
        %1706 = vmatpush1.bf16.xpose.msra.mxu0 0
        %1707 = vmatprep.subr.bf16.mxu0 0
        %1708 = vmatpush1.bf16.xpose.msra.mxu0 0
        %1709 = vmatprep.subr.bf16.mxu0 0
        %1710 = vmatpush1.bf16.xpose.msra.mxu0 0
        %1711 = vmatprep.subr.bf16.mxu0 0
        %1712 = vmatpush1.bf16.xpose.msra.mxu0 %v1695
        %1713 = vmatprep.subr.bf16.mxu0 0
        %1714 = vmatpush2.bf16.xpose.msra.mxu0 0
        %1715 = vmatprep.subr.bf16.mxu0 0
        %1716 = vmatpush2.bf16.xpose.msra.mxu0 0
        %1717 = vmatprep.subr.bf16.mxu0 0
        %1718 = vmatpush2.bf16.xpose.msra.mxu0 0
        %1719 = vmatprep.subr.bf16.mxu0 0
        %1720 = vmatpush2.bf16.xpose.msra.mxu0 0
        %1721 = vmatprep.subr.bf16.mxu0 0
        %1722 = vmatpush2.bf16.xpose.msra.mxu0 0
        %1723 = vmatprep.subr.bf16.mxu0 0
        %1724 = vmatpush2.bf16.xpose.msra.mxu0 0
        %1725 = vmatprep.subr.bf16.mxu0 0
        %1726 = vmatpush2.bf16.xpose.msra.mxu0 0
        %1727 = vmatprep.subr.bf16.mxu0 0
        %1728 = vmatpush2.bf16.xpose.msra.mxu0 0
        %1729 = vmatprep.mubr.bf16.mxu0 0
        %1730 = vmatmul.mubr.bf16.gmra.mxu0 %v1692
        %v1731 = vpop.f32.mrf.mxu0
        %v1732 = vadd.f32 %v1579, %v1731
        %v1733 = vpop.f32.mrf.mxu0
        %v1734 = vpop.f32.mrf.mxu0
        %v1735 = vpop.f32.mrf.mxu0
        %1736 = vdwg.mxu0
        %v1737 = vsel %vm1166, %v1732, -inf
        %1738 = vmax.xlane.f32.xlu0 %v1737
        %v1739 = vpop.xlane.xlu0 %1738
        %v1740 = vsub.f32 %v1732, %v1739
        %v1741 = vmul.f32 %v1740, 1.442695
        %v1742 = vpow.pop %v1741
        %v1743 = vsel %vm1166, %v1742, 0.0
        %1744 = vadd.xlane.f32.xlu0 %v1743
        %v1745 = vpop.xlane.xlu0 %1744
        %v1746 = vrcp.pop %v1745
        %v1747 = vmul.f32 %v1742, %v1746
        %v1748 = vpack.c.bf16 %v1747, %v1747
        %1749 = vrot.lane.b32.xlu0 %v1640, 96
        %v1750 = vpop.permute.xlu0 %1749
        %v1752 = vsel %vm1166, %v1748, 0
        %v1755 = vsel %vm1182, %v1750, 0
        %1757 = vmatprep.subr.bf16.mxu0 0
        %1758 = vmatpush1.bf16.msra.mxu0 0
        %1759 = vmatprep.subr.bf16.mxu0 0
        %1760 = vmatpush1.bf16.msra.mxu0 0
        %1761 = vmatprep.subr.bf16.mxu0 0
        %1762 = vmatpush1.bf16.msra.mxu0 0
        %1763 = vmatprep.subr.bf16.mxu0 0
        %1764 = vmatpush1.bf16.msra.mxu0 0
        %1765 = vmatprep.subr.bf16.mxu0 0
        %1766 = vmatpush1.bf16.msra.mxu0 0
        %1767 = vmatprep.subr.bf16.mxu0 0
        %1768 = vmatpush1.bf16.msra.mxu0 0
        %1769 = vmatprep.subr.bf16.mxu0 0
        %1770 = vmatpush1.bf16.msra.mxu0 0
        %1771 = vmatprep.subr.bf16.mxu0 0
        %1772 = vmatpush1.bf16.msra.mxu0 %v1755
        %1773 = vmatprep.subr.bf16.mxu0 0
        %1774 = vmatpush2.bf16.msra.mxu0 0
        %1775 = vmatprep.subr.bf16.mxu0 0
        %1776 = vmatpush2.bf16.msra.mxu0 0
        %1777 = vmatprep.subr.bf16.mxu0 0
        %1778 = vmatpush2.bf16.msra.mxu0 0
        %1779 = vmatprep.subr.bf16.mxu0 0
        %1780 = vmatpush2.bf16.msra.mxu0 0
        %1781 = vmatprep.subr.bf16.mxu0 0
        %1782 = vmatpush2.bf16.msra.mxu0 0
        %1783 = vmatprep.subr.bf16.mxu0 0
        %1784 = vmatpush2.bf16.msra.mxu0 0
        %1785 = vmatprep.subr.bf16.mxu0 0
        %1786 = vmatpush2.bf16.msra.mxu0 0
        %1787 = vmatprep.subr.bf16.mxu0 0
        %1788 = vmatpush2.bf16.msra.mxu0 0
        %1789 = vmatprep.mubr.bf16.mxu0 0
        %1790 = vmatmul.mubr.bf16.gmra.mxu0 %v1752
        %v1791 = vpop.f32.mrf.mxu0
        %v1792 = vadd.f32 0.0, %v1791
        %v1793 = vpop.f32.mrf.mxu0
        %v1794 = vpop.f32.mrf.mxu0
        %v1795 = vpop.f32.mrf.mxu0
        %1796 = vdwg.mxu0
        %1797 = vrot.lane.b32.xlu0 %v1580, 64
        %v1798 = vpop.permute.xlu0 %1797
        %1799 = vrot.lane.b32.xlu0 %v1581, 64
        %v1800 = vpop.permute.xlu0 %1799
        %v1802 = vsel %vm1119, %v1798, 0
        %v1805 = vsel %vm1119, %v1800, 0
        %1807 = vmatprep.subr.bf16.mxu0 0
        %1808 = vmatpush1.bf16.xpose.msra.mxu0 0
        %1809 = vmatprep.subr.bf16.mxu0 0
        %1810 = vmatpush1.bf16.xpose.msra.mxu0 0
        %1811 = vmatprep.subr.bf16.mxu0 0
        %1812 = vmatpush1.bf16.xpose.msra.mxu0 0
        %1813 = vmatprep.subr.bf16.mxu0 0
        %1814 = vmatpush1.bf16.xpose.msra.mxu0 0
        %1815 = vmatprep.subr.bf16.mxu0 0
        %1816 = vmatpush1.bf16.xpose.msra.mxu0 0
        %1817 = vmatprep.subr.bf16.mxu0 0
        %1818 = vmatpush1.bf16.xpose.msra.mxu0 0
        %1819 = vmatprep.subr.bf16.mxu0 0
        %1820 = vmatpush1.bf16.xpose.msra.mxu0 0
        %1821 = vmatprep.subr.bf16.mxu0 0
        %1822 = vmatpush1.bf16.xpose.msra.mxu0 %v1805
        %1823 = vmatprep.subr.bf16.mxu0 0
        %1824 = vmatpush2.bf16.xpose.msra.mxu0 0
        %1825 = vmatprep.subr.bf16.mxu0 0
        %1826 = vmatpush2.bf16.xpose.msra.mxu0 0
        %1827 = vmatprep.subr.bf16.mxu0 0
        %1828 = vmatpush2.bf16.xpose.msra.mxu0 0
        %1829 = vmatprep.subr.bf16.mxu0 0
        %1830 = vmatpush2.bf16.xpose.msra.mxu0 0
        %1831 = vmatprep.subr.bf16.mxu0 0
        %1832 = vmatpush2.bf16.xpose.msra.mxu0 0
        %1833 = vmatprep.subr.bf16.mxu0 0
        %1834 = vmatpush2.bf16.xpose.msra.mxu0 0
        %1835 = vmatprep.subr.bf16.mxu0 0
        %1836 = vmatpush2.bf16.xpose.msra.mxu0 0
        %1837 = vmatprep.subr.bf16.mxu0 0
        %1838 = vmatpush2.bf16.xpose.msra.mxu0 0
        %1839 = vmatprep.mubr.bf16.mxu0 0
        %1840 = vmatmul.mubr.bf16.gmra.mxu0 %v1802
        %v1841 = vpop.f32.mrf.mxu0
        %v1842 = vadd.f32 %v1579, %v1841
        %v1843 = vpop.f32.mrf.mxu0
        %v1844 = vpop.f32.mrf.mxu0
        %v1845 = vpop.f32.mrf.mxu0
        %1846 = vdwg.mxu0
        %v1847 = vsel %vm1166, %v1842, -inf
        %1848 = vmax.xlane.f32.xlu0 %v1847
        %v1849 = vpop.xlane.xlu0 %1848
        %v1850 = vsub.f32 %v1842, %v1849
        %v1851 = vmul.f32 %v1850, 1.442695
        %v1852 = vpow.pop %v1851
        %v1853 = vsel %vm1166, %v1852, 0.0
        %1854 = vadd.xlane.f32.xlu0 %v1853
        %v1855 = vpop.xlane.xlu0 %1854
        %v1856 = vrcp.pop %v1855
        %v1857 = vmul.f32 %v1852, %v1856
        %v1858 = vpack.c.bf16 %v1857, %v1857
        %1859 = vrot.lane.b32.xlu0 %v1640, 64
        %v1860 = vpop.permute.xlu0 %1859
        %v1862 = vsel %vm1166, %v1858, 0
        %v1865 = vsel %vm1182, %v1860, 0
        %1867 = vmatprep.subr.bf16.mxu0 0
        %1868 = vmatpush1.bf16.msra.mxu0 0
        %1869 = vmatprep.subr.bf16.mxu0 0
        %1870 = vmatpush1.bf16.msra.mxu0 0
        %1871 = vmatprep.subr.bf16.mxu0 0
        %1872 = vmatpush1.bf16.msra.mxu0 0
        %1873 = vmatprep.subr.bf16.mxu0 0
        %1874 = vmatpush1.bf16.msra.mxu0 0
        %1875 = vmatprep.subr.bf16.mxu0 0
        %1876 = vmatpush1.bf16.msra.mxu0 0
        %1877 = vmatprep.subr.bf16.mxu0 0
        %1878 = vmatpush1.bf16.msra.mxu0 0
        %1879 = vmatprep.subr.bf16.mxu0 0
        %1880 = vmatpush1.bf16.msra.mxu0 0
        %1881 = vmatprep.subr.bf16.mxu0 0
        %1882 = vmatpush1.bf16.msra.mxu0 %v1865
        %1883 = vmatprep.subr.bf16.mxu0 0
        %1884 = vmatpush2.bf16.msra.mxu0 0
        %1885 = vmatprep.subr.bf16.mxu0 0
        %1886 = vmatpush2.bf16.msra.mxu0 0
        %1887 = vmatprep.subr.bf16.mxu0 0
        %1888 = vmatpush2.bf16.msra.mxu0 0
        %1889 = vmatprep.subr.bf16.mxu0 0
        %1890 = vmatpush2.bf16.msra.mxu0 0
        %1891 = vmatprep.subr.bf16.mxu0 0
        %1892 = vmatpush2.bf16.msra.mxu0 0
        %1893 = vmatprep.subr.bf16.mxu0 0
        %1894 = vmatpush2.bf16.msra.mxu0 0
        %1895 = vmatprep.subr.bf16.mxu0 0
        %1896 = vmatpush2.bf16.msra.mxu0 0
        %1897 = vmatprep.subr.bf16.mxu0 0
        %1898 = vmatpush2.bf16.msra.mxu0 0
        %1899 = vmatprep.mubr.bf16.mxu0 0
        %1900 = vmatmul.mubr.bf16.gmra.mxu0 %v1862
        %v1901 = vpop.f32.mrf.mxu0
        %v1902 = vadd.f32 0.0, %v1901
        %v1903 = vpop.f32.mrf.mxu0
        %v1904 = vpop.f32.mrf.mxu0
        %v1905 = vpop.f32.mrf.mxu0
        %1906 = vdwg.mxu0
        %1907 = vrot.lane.b32.xlu0 %v1580, 32
        %v1908 = vpop.permute.xlu0 %1907
        %1909 = vrot.lane.b32.xlu0 %v1581, 32
        %v1910 = vpop.permute.xlu0 %1909
        %v1912 = vsel %vm1119, %v1908, 0
        %v1915 = vsel %vm1119, %v1910, 0
        %1917 = vmatprep.subr.bf16.mxu0 0
        %1918 = vmatpush1.bf16.xpose.msra.mxu0 0
        %1919 = vmatprep.subr.bf16.mxu0 0
        %1920 = vmatpush1.bf16.xpose.msra.mxu0 0
        %1921 = vmatprep.subr.bf16.mxu0 0
        %1922 = vmatpush1.bf16.xpose.msra.mxu0 0
        %1923 = vmatprep.subr.bf16.mxu0 0
        %1924 = vmatpush1.bf16.xpose.msra.mxu0 0
        %1925 = vmatprep.subr.bf16.mxu0 0
        %1926 = vmatpush1.bf16.xpose.msra.mxu0 0
        %1927 = vmatprep.subr.bf16.mxu0 0
        %1928 = vmatpush1.bf16.xpose.msra.mxu0 0
        %1929 = vmatprep.subr.bf16.mxu0 0
        %1930 = vmatpush1.bf16.xpose.msra.mxu0 0
        %1931 = vmatprep.subr.bf16.mxu0 0
        %1932 = vmatpush1.bf16.xpose.msra.mxu0 %v1915
        %1933 = vmatprep.subr.bf16.mxu0 0
        %1934 = vmatpush2.bf16.xpose.msra.mxu0 0
        %1935 = vmatprep.subr.bf16.mxu0 0
        %1936 = vmatpush2.bf16.xpose.msra.mxu0 0
        %1937 = vmatprep.subr.bf16.mxu0 0
        %1938 = vmatpush2.bf16.xpose.msra.mxu0 0
        %1939 = vmatprep.subr.bf16.mxu0 0
        %1940 = vmatpush2.bf16.xpose.msra.mxu0 0
        %1941 = vmatprep.subr.bf16.mxu0 0
        %1942 = vmatpush2.bf16.xpose.msra.mxu0 0
        %1943 = vmatprep.subr.bf16.mxu0 0
        %1944 = vmatpush2.bf16.xpose.msra.mxu0 0
        %1945 = vmatprep.subr.bf16.mxu0 0
        %1946 = vmatpush2.bf16.xpose.msra.mxu0 0
        %1947 = vmatprep.subr.bf16.mxu0 0
        %1948 = vmatpush2.bf16.xpose.msra.mxu0 0
        %1949 = vmatprep.mubr.bf16.mxu0 0
        %1950 = vmatmul.mubr.bf16.gmra.mxu0 %v1912
        %v1951 = vpop.f32.mrf.mxu0
        %v1952 = vadd.f32 %v1579, %v1951
        %v1953 = vpop.f32.mrf.mxu0
        %v1954 = vpop.f32.mrf.mxu0
        %v1955 = vpop.f32.mrf.mxu0
        %1956 = vdwg.mxu0
        %v1957 = vsel %vm1166, %v1952, -inf
        %1958 = vmax.xlane.f32.xlu0 %v1957
        %v1959 = vpop.xlane.xlu0 %1958
        %v1960 = vsub.f32 %v1952, %v1959
        %v1961 = vmul.f32 %v1960, 1.442695
        %v1962 = vpow.pop %v1961
        %v1963 = vsel %vm1166, %v1962, 0.0
        %1964 = vadd.xlane.f32.xlu0 %v1963
        %v1965 = vpop.xlane.xlu0 %1964
        %v1966 = vrcp.pop %v1965
        %v1967 = vmul.f32 %v1962, %v1966
        %v1968 = vpack.c.bf16 %v1967, %v1967
        %1969 = vrot.lane.b32.xlu0 %v1640, 32
        %v1970 = vpop.permute.xlu0 %1969
        %v1972 = vsel %vm1166, %v1968, 0
        %v1975 = vsel %vm1182, %v1970, 0
        %1977 = vmatprep.subr.bf16.mxu0 0
        %1978 = vmatpush1.bf16.msra.mxu0 0
        %1979 = vmatprep.subr.bf16.mxu0 0
        %1980 = vmatpush1.bf16.msra.mxu0 0
        %1981 = vmatprep.subr.bf16.mxu0 0
        %1982 = vmatpush1.bf16.msra.mxu0 0
        %1983 = vmatprep.subr.bf16.mxu0 0
        %1984 = vmatpush1.bf16.msra.mxu0 0
        %1985 = vmatprep.subr.bf16.mxu0 0
        %1986 = vmatpush1.bf16.msra.mxu0 0
        %1987 = vmatprep.subr.bf16.mxu0 0
        %1988 = vmatpush1.bf16.msra.mxu0 0
        %1989 = vmatprep.subr.bf16.mxu0 0
        %1990 = vmatpush1.bf16.msra.mxu0 0
        %1991 = vmatprep.subr.bf16.mxu0 0
        %1992 = vmatpush1.bf16.msra.mxu0 %v1975
        %1993 = vmatprep.subr.bf16.mxu0 0
        %1994 = vmatpush2.bf16.msra.mxu0 0
        %1995 = vmatprep.subr.bf16.mxu0 0
        %1996 = vmatpush2.bf16.msra.mxu0 0
        %1997 = vmatprep.subr.bf16.mxu0 0
        %1998 = vmatpush2.bf16.msra.mxu0 0
        %1999 = vmatprep.subr.bf16.mxu0 0
        %2000 = vmatpush2.bf16.msra.mxu0 0
        %2001 = vmatprep.subr.bf16.mxu0 0
        %2002 = vmatpush2.bf16.msra.mxu0 0
        %2003 = vmatprep.subr.bf16.mxu0 0
        %2004 = vmatpush2.bf16.msra.mxu0 0
        %2005 = vmatprep.subr.bf16.mxu0 0
        %2006 = vmatpush2.bf16.msra.mxu0 0
        %2007 = vmatprep.subr.bf16.mxu0 0
        %2008 = vmatpush2.bf16.msra.mxu0 0
        %2009 = vmatprep.mubr.bf16.mxu0 0
        %2010 = vmatmul.mubr.bf16.gmra.mxu0 %v1972
        %v2011 = vpop.f32.mrf.mxu0
        %v2012 = vadd.f32 0.0, %v2011
        %v2013 = vpop.f32.mrf.mxu0
        %v2014 = vpop.f32.mrf.mxu0
        %v2015 = vpop.f32.mrf.mxu0
        %2016 = vdwg.mxu0
        %2018 = vrot.lane.b32.xlu0 %v1792, 32
        %v2019 = vpop.permute.xlu0 %2018
        %2022 = vrot.lane.b32.xlu0 %v1902, 64
        %v2023 = vpop.permute.xlu0 %2022
        %2026 = vrot.lane.b32.xlu0 %v2012, 96
        %v2027 = vpop.permute.xlu0 %2026
        %v2029 = vsel %vm1119, %v1682, %v2019
        %v2030 = vsel %vm1572, %v2029, %v2023
        %v2031 = vsel %vm1574, %v2030, %v2027
        %v2032 = vpack.c.bf16 %v2031, %v1575
        %v2033 = vld [vmem:[%s774] sm:$0xf]
        %v2034 = vld [vmem:[%s774 + $0x4] sm:$0xf]
        %v2035 = vld [vmem:[%s774 + $0x8] sm:$0xf]
        %v2036 = vld [vmem:[%s774 + $0xc] sm:$0xf]
        %v2037 = vld [vmem:[%s774 + $0x10] sm:$0xf]
        %v2038 = vld [vmem:[%s774 + $0x14] sm:$0xf]
        %v2039 = vld [vmem:[%s774 + $0x18] sm:$0xf]
        %v2040 = vld [vmem:[%s774 + $0x1c] sm:$0xf]
        %v2041 = vld [vmem:[%s774 + $0x20] sm:$0xf]
        %v2042 = vld [vmem:[%s774 + $0x24] sm:$0xf]
        %v2043 = vld [vmem:[%s774 + $0x28] sm:$0xf]
        %v2044 = vld [vmem:[%s774 + $0x2c] sm:$0xf]
        %v2045 = vld [vmem:[%s774 + $0x30] sm:$0xf]
        %v2046 = vld [vmem:[%s774 + $0x34] sm:$0xf]
        %v2047 = vld [vmem:[%s774 + $0x38] sm:$0xf]
        %v2048 = vld [vmem:[%s774 + $0x3c] sm:$0xf]
        %v2049 = vld [vmem:[%s777] sm:$0x1]
        %v2051 = vlaneseq
        %v2052 = vshrl.u32 %v2051, 7
        %v2053 = vsub.s32 0, %v2052
        %v2054 = vrot.slane %v2049, %v2053
        %v2072 = vunpack.c.l.b16 %v2033
        %v2073 = vunpack.c.l.b16 %v2034
        %v2074 = vunpack.c.l.b16 %v2035
        %v2075 = vunpack.c.l.b16 %v2036
        %v2076 = vunpack.c.l.b16 %v2037
        %v2077 = vunpack.c.l.b16 %v2038
        %v2078 = vunpack.c.l.b16 %v2039
        %v2079 = vunpack.c.l.b16 %v2040
        %v2080 = vunpack.c.l.b16 %v2041
        %v2081 = vunpack.c.l.b16 %v2042
        %v2082 = vunpack.c.l.b16 %v2043
        %v2083 = vunpack.c.l.b16 %v2044
        %v2084 = vunpack.c.l.b16 %v2045
        %v2085 = vunpack.c.l.b16 %v2046
        %v2086 = vunpack.c.l.b16 %v2047
        %v2087 = vunpack.c.l.b16 %v2048
        %v2088 = vpack.c.b16 %v2073, %v2072
        %v2089 = vpack.c.b16 %v2075, %v2074
        %v2090 = vpack.c.b16 %v2077, %v2076
        %v2091 = vpack.c.b16 %v2079, %v2078
        %v2092 = vpack.c.b16 %v2081, %v2080
        %v2093 = vpack.c.b16 %v2083, %v2082
        %v2094 = vpack.c.b16 %v2085, %v2084
        %v2095 = vpack.c.b16 %v2087, %v2086
        %2104 = vmatprep.subr.bf16.mxu0 0
        %2105 = vmatpush1.bf16.msra.mxu0 %v2095
        %2106 = vmatprep.subr.bf16.mxu0 0
        %2107 = vmatpush1.bf16.msra.mxu0 %v2094
        %2108 = vmatprep.subr.bf16.mxu0 0
        %2109 = vmatpush1.bf16.msra.mxu0 %v2093
        %2110 = vmatprep.subr.bf16.mxu0 0
        %2111 = vmatpush1.bf16.msra.mxu0 %v2092
        %2112 = vmatprep.subr.bf16.mxu0 0
        %2113 = vmatpush1.bf16.msra.mxu0 %v2091
        %2114 = vmatprep.subr.bf16.mxu0 0
        %2115 = vmatpush1.bf16.msra.mxu0 %v2090
        %2116 = vmatprep.subr.bf16.mxu0 0
        %2117 = vmatpush1.bf16.msra.mxu0 %v2089
        %2118 = vmatprep.subr.bf16.mxu0 0
        %2119 = vmatpush1.bf16.msra.mxu0 %v2088
        %2120 = vmatprep.subr.bf16.mxu0 0
        %2121 = vmatpush2.bf16.msra.mxu0 0
        %2122 = vmatprep.subr.bf16.mxu0 0
        %2123 = vmatpush2.bf16.msra.mxu0 0
        %2124 = vmatprep.subr.bf16.mxu0 0
        %2125 = vmatpush2.bf16.msra.mxu0 0
        %2126 = vmatprep.subr.bf16.mxu0 0
        %2127 = vmatpush2.bf16.msra.mxu0 0
        %2128 = vmatprep.subr.bf16.mxu0 0
        %2129 = vmatpush2.bf16.msra.mxu0 0
        %2130 = vmatprep.subr.bf16.mxu0 0
        %2131 = vmatpush2.bf16.msra.mxu0 0
        %2132 = vmatprep.subr.bf16.mxu0 0
        %2133 = vmatpush2.bf16.msra.mxu0 0
        %2134 = vmatprep.subr.bf16.mxu0 0
        %2135 = vmatpush2.bf16.msra.mxu0 0
        %2136 = vmatprep.mubr.bf16.mxu0 0
        %2137 = vmatmul.mubr.bf16.gmra.mxu0 %v2032
        %v2138 = vpop.f32.mrf.mxu0
        %v2139 = vadd.f32 %v2054, %v2138
        %v2140 = vpop.f32.mrf.mxu0
        %v2141 = vpop.f32.mrf.mxu0
        %v2142 = vadd.f32 %v2054, %v2141
        %v2143 = vpop.f32.mrf.mxu0
        %2144 = vdwg.mxu0
        %v2145 = vadd.f32 %v2139, %v847
        %v2146 = vadd.f32 %v2142, %v848
        %v2147 = vld [vmem:[%s780] sm:$0x1]
        %v2148 = vld [vmem:[%s783] sm:$0x1]
        %2149 = vadd.xlane.f32.xlu0 %v2145
        %v2150 = vpop.xlane.xlu0 %2149
        %2151 = vadd.xlane.f32.xlu0 %v2146
        %v2152 = vpop.xlane.xlu0 %2151
        %v2153 = vrcp.pop 128.0
        %v2154 = vmul.f32 %v2150, %v2153
        %v2155 = vmul.f32 %v2152, %v2153
        %v2156 = vsub.f32 %v2145, %v2154
        %v2157 = vsub.f32 %v2146, %v2155
        %v2158 = vmul.f32 %v2156, %v2156
        %v2159 = vmul.f32 %v2157, %v2157
        %2160 = vadd.xlane.f32.xlu0 %v2158
        %v2161 = vpop.xlane.xlu0 %2160
        %2162 = vadd.xlane.f32.xlu0 %v2159
        %v2163 = vpop.xlane.xlu0 %2162
        %v2164 = vmul.f32 %v2161, %v2153
        %v2165 = vmul.f32 %v2163, %v2153
        %v2166 = vadd.f32 %v2164, 1e-12
        %v2167 = vadd.f32 %v2165, 1e-12
        %v2168 = vrsqrt.pop %v2166
        %v2169 = vrsqrt.pop %v2167
        %v2170 = vmul.f32 %v2156, %v2168
        %v2171 = vmul.f32 %v2157, %v2169
        %v2173 = vlaneseq
        %v2174 = vshrl.u32 %v2173, 7
        %v2175 = vsub.s32 0, %v2174
        %v2176 = vrot.slane %v2147, %v2175
        %v2178 = vmul.f32 %v2170, %v2176
        %v2179 = vmul.f32 %v2171, %v2176
        %v2181 = vlaneseq
        %v2182 = vshrl.u32 %v2181, 7
        %v2183 = vsub.s32 0, %v2182
        %v2184 = vrot.slane %v2148, %v2183
        %v2186 = vadd.f32 %v2178, %v2184
        %v2187 = vadd.f32 %v2179, %v2184
        %v2188 = vpack.c.bf16 %v2187, %v2186
        %v2189 = vld [vmem:[%s668] sm:$0xff]
        %v2190 = vld [vmem:[%s668 + $0x8] sm:$0xff]
        %v2191 = vld [vmem:[%s668 + $0x10] sm:$0xff]
        %v2192 = vld [vmem:[%s668 + $0x18] sm:$0xff]
        %v2193 = vld [vmem:[%s668 + $0x20] sm:$0xff]
        %v2194 = vld [vmem:[%s668 + $0x28] sm:$0xff]
        %v2195 = vld [vmem:[%s668 + $0x30] sm:$0xff]
        %v2196 = vld [vmem:[%s668 + $0x38] sm:$0xff]
        %v2197 = vld [vmem:[%s668 + $0x40] sm:$0xff]
        %v2198 = vld [vmem:[%s668 + $0x48] sm:$0xff]
        %v2199 = vld [vmem:[%s668 + $0x50] sm:$0xff]
        %v2200 = vld [vmem:[%s668 + $0x58] sm:$0xff]
        %v2201 = vld [vmem:[%s668 + $0x60] sm:$0xff]
        %v2202 = vld [vmem:[%s668 + $0x68] sm:$0xff]
        %v2203 = vld [vmem:[%s668 + $0x70] sm:$0xff]
        %v2204 = vld [vmem:[%s668 + $0x78] sm:$0xff]
        %v2205 = vld [vmem:[%s668 + $0x80] sm:$0xff]
        %v2206 = vld [vmem:[%s668 + $0x88] sm:$0xff]
        %v2207 = vld [vmem:[%s668 + $0x90] sm:$0xff]
        %v2208 = vld [vmem:[%s668 + $0x98] sm:$0xff]
        %v2209 = vld [vmem:[%s668 + $0xa0] sm:$0xff]
        %v2210 = vld [vmem:[%s668 + $0xa8] sm:$0xff]
        %v2211 = vld [vmem:[%s668 + $0xb0] sm:$0xff]
        %v2212 = vld [vmem:[%s668 + $0xb8] sm:$0xff]
        %v2213 = vld [vmem:[%s668 + $0xc0] sm:$0xff]
        %v2214 = vld [vmem:[%s668 + $0xc8] sm:$0xff]
        %v2215 = vld [vmem:[%s668 + $0xd0] sm:$0xff]
        %v2216 = vld [vmem:[%s668 + $0xd8] sm:$0xff]
        %v2217 = vld [vmem:[%s668 + $0xe0] sm:$0xff]
        %v2218 = vld [vmem:[%s668 + $0xe8] sm:$0xff]
        %v2219 = vld [vmem:[%s668 + $0xf0] sm:$0xff]
        %v2220 = vld [vmem:[%s668 + $0xf8] sm:$0xff]
        %v2221 = vld [vmem:[%s787] sm:$0xf]
        %v2223 = vlaneseq
        %v2224 = vshrl.u32 %v2223, 7
        %v2225 = vsub.s32 0, %v2224
        %v2226 = vrot.slane %v2221, %v2225
        %v2227 = vlaneseq
        %v2228 = vshrl.u32 %v2227, 7
        %v2229 = vsub.s32 1, %v2228
        %v2230 = vrot.slane %v2221, %v2229
        %v2231 = vlaneseq
        %v2232 = vshrl.u32 %v2231, 7
        %v2233 = vsub.s32 2, %v2232
        %v2234 = vrot.slane %v2221, %v2233
        %v2235 = vlaneseq
        %v2236 = vshrl.u32 %v2235, 7
        %v2237 = vsub.s32 3, %v2236
        %v2238 = vrot.slane %v2221, %v2237
        %v2275 = vunpack.c.l.b16 %v2189
        %v2276 = vunpack.c.h.b16 %v2189
        %v2277 = vunpack.c.l.b16 %v2190
        %v2278 = vunpack.c.h.b16 %v2190
        %v2279 = vunpack.c.l.b16 %v2191
        %v2280 = vunpack.c.h.b16 %v2191
        %v2281 = vunpack.c.l.b16 %v2192
        %v2282 = vunpack.c.h.b16 %v2192
        %v2283 = vunpack.c.l.b16 %v2193
        %v2284 = vunpack.c.h.b16 %v2193
        %v2285 = vunpack.c.l.b16 %v2194
        %v2286 = vunpack.c.h.b16 %v2194
        %v2287 = vunpack.c.l.b16 %v2195
        %v2288 = vunpack.c.h.b16 %v2195
        %v2289 = vunpack.c.l.b16 %v2196
        %v2290 = vunpack.c.h.b16 %v2196
        %v2291 = vunpack.c.l.b16 %v2197
        %v2292 = vunpack.c.h.b16 %v2197
        %v2293 = vunpack.c.l.b16 %v2198
        %v2294 = vunpack.c.h.b16 %v2198
        %v2295 = vunpack.c.l.b16 %v2199
        %v2296 = vunpack.c.h.b16 %v2199
        %v2297 = vunpack.c.l.b16 %v2200
        %v2298 = vunpack.c.h.b16 %v2200
        %v2299 = vunpack.c.l.b16 %v2201
        %v2300 = vunpack.c.h.b16 %v2201
        %v2301 = vunpack.c.l.b16 %v2202
        %v2302 = vunpack.c.h.b16 %v2202
        %v2303 = vunpack.c.l.b16 %v2203
        %v2304 = vunpack.c.h.b16 %v2203
        %v2305 = vunpack.c.l.b16 %v2204
        %v2306 = vunpack.c.h.b16 %v2204
        %v2307 = vunpack.c.l.b16 %v2205
        %v2308 = vunpack.c.h.b16 %v2205
        %v2309 = vunpack.c.l.b16 %v2206
        %v2310 = vunpack.c.h.b16 %v2206
        %v2311 = vunpack.c.l.b16 %v2207
        %v2312 = vunpack.c.h.b16 %v2207
        %v2313 = vunpack.c.l.b16 %v2208
        %v2314 = vunpack.c.h.b16 %v2208
        %v2315 = vunpack.c.l.b16 %v2209
        %v2316 = vunpack.c.h.b16 %v2209
        %v2317 = vunpack.c.l.b16 %v2210
        %v2318 = vunpack.c.h.b16 %v2210
        %v2319 = vunpack.c.l.b16 %v2211
        %v2320 = vunpack.c.h.b16 %v2211
        %v2321 = vunpack.c.l.b16 %v2212
        %v2322 = vunpack.c.h.b16 %v2212
        %v2323 = vunpack.c.l.b16 %v2213
        %v2324 = vunpack.c.h.b16 %v2213
        %v2325 = vunpack.c.l.b16 %v2214
        %v2326 = vunpack.c.h.b16 %v2214
        %v2327 = vunpack.c.l.b16 %v2215
        %v2328 = vunpack.c.h.b16 %v2215
        %v2329 = vunpack.c.l.b16 %v2216
        %v2330 = vunpack.c.h.b16 %v2216
        %v2331 = vunpack.c.l.b16 %v2217
        %v2332 = vunpack.c.h.b16 %v2217
        %v2333 = vunpack.c.l.b16 %v2218
        %v2334 = vunpack.c.h.b16 %v2218
        %v2335 = vunpack.c.l.b16 %v2219
        %v2336 = vunpack.c.h.b16 %v2219
        %v2337 = vunpack.c.l.b16 %v2220
        %v2338 = vunpack.c.h.b16 %v2220
        %v2339 = vpack.c.b16 %v2279, %v2275
        %v2340 = vpack.c.b16 %v2280, %v2276
        %v2341 = vpack.c.b16 %v2281, %v2277
        %v2342 = vpack.c.b16 %v2282, %v2278
        %v2343 = vpack.c.b16 %v2287, %v2283
        %v2344 = vpack.c.b16 %v2288, %v2284
        %v2345 = vpack.c.b16 %v2289, %v2285
        %v2346 = vpack.c.b16 %v2290, %v2286
        %v2347 = vpack.c.b16 %v2295, %v2291
        %v2348 = vpack.c.b16 %v2296, %v2292
        %v2349 = vpack.c.b16 %v2297, %v2293
        %v2350 = vpack.c.b16 %v2298, %v2294
        %v2351 = vpack.c.b16 %v2303, %v2299
        %v2352 = vpack.c.b16 %v2304, %v2300
        %v2353 = vpack.c.b16 %v2305, %v2301
        %v2354 = vpack.c.b16 %v2306, %v2302
        %v2355 = vpack.c.b16 %v2311, %v2307
        %v2356 = vpack.c.b16 %v2312, %v2308
        %v2357 = vpack.c.b16 %v2313, %v2309
        %v2358 = vpack.c.b16 %v2314, %v2310
        %v2359 = vpack.c.b16 %v2319, %v2315
        %v2360 = vpack.c.b16 %v2320, %v2316
        %v2361 = vpack.c.b16 %v2321, %v2317
        %v2362 = vpack.c.b16 %v2322, %v2318
        %v2363 = vpack.c.b16 %v2327, %v2323
        %v2364 = vpack.c.b16 %v2328, %v2324
        %v2365 = vpack.c.b16 %v2329, %v2325
        %v2366 = vpack.c.b16 %v2330, %v2326
        %v2367 = vpack.c.b16 %v2335, %v2331
        %v2368 = vpack.c.b16 %v2336, %v2332
        %v2369 = vpack.c.b16 %v2337, %v2333
        %v2370 = vpack.c.b16 %v2338, %v2334
        %2403 = vmatprep.subr.bf16.mxu0 %v2368
        %2404 = vmatpush1.bf16.msra.mxu0 %v2367
        %2405 = vmatprep.subr.bf16.mxu0 %v2364
        %2406 = vmatpush1.bf16.msra.mxu0 %v2363
        %2407 = vmatprep.subr.bf16.mxu0 %v2360
        %2408 = vmatpush1.bf16.msra.mxu0 %v2359
        %2409 = vmatprep.subr.bf16.mxu0 %v2356
        %2410 = vmatpush1.bf16.msra.mxu0 %v2355
        %2411 = vmatprep.subr.bf16.mxu0 %v2352
        %2412 = vmatpush1.bf16.msra.mxu0 %v2351
        %2413 = vmatprep.subr.bf16.mxu0 %v2348
        %2414 = vmatpush1.bf16.msra.mxu0 %v2347
        %2415 = vmatprep.subr.bf16.mxu0 %v2344
        %2416 = vmatpush1.bf16.msra.mxu0 %v2343
        %2417 = vmatprep.subr.bf16.mxu0 %v2340
        %2418 = vmatpush1.bf16.msra.mxu0 %v2339
        %2419 = vmatprep.subr.bf16.mxu0 0
        %2420 = vmatpush2.bf16.msra.mxu0 0
        %2421 = vmatprep.subr.bf16.mxu0 0
        %2422 = vmatpush2.bf16.msra.mxu0 0
        %2423 = vmatprep.subr.bf16.mxu0 0
        %2424 = vmatpush2.bf16.msra.mxu0 0
        %2425 = vmatprep.subr.bf16.mxu0 0
        %2426 = vmatpush2.bf16.msra.mxu0 0
        %2427 = vmatprep.subr.bf16.mxu0 0
        %2428 = vmatpush2.bf16.msra.mxu0 0
        %2429 = vmatprep.subr.bf16.mxu0 0
        %2430 = vmatpush2.bf16.msra.mxu0 0
        %2431 = vmatprep.subr.bf16.mxu0 0
        %2432 = vmatpush2.bf16.msra.mxu0 0
        %2433 = vmatprep.subr.bf16.mxu0 0
        %2434 = vmatpush2.bf16.msra.mxu0 0
        %2435 = vmatprep.mubr.bf16.mxu0 0
        %2436 = vmatmul.mubr.bf16.gmra.mxu0 %v2188
        %v2437 = vpop.f32.mrf.mxu0
        %v2438 = vadd.f32 %v2226, %v2437
        %v2439 = vpop.f32.mrf.mxu0
        %v2440 = vadd.f32 %v2230, %v2439
        %v2441 = vpop.f32.mrf.mxu0
        %v2442 = vadd.f32 %v2226, %v2441
        %v2443 = vpop.f32.mrf.mxu0
        %v2444 = vadd.f32 %v2230, %v2443
        %2445 = vdwg.mxu0
        %2446 = vmatprep.subr.bf16.mxu0 %v2370
        %2447 = vmatpush1.bf16.msra.mxu0 %v2369
        %2448 = vmatprep.subr.bf16.mxu0 %v2366
        %2449 = vmatpush1.bf16.msra.mxu0 %v2365
        %2450 = vmatprep.subr.bf16.mxu0 %v2362
        %2451 = vmatpush1.bf16.msra.mxu0 %v2361
        %2452 = vmatprep.subr.bf16.mxu0 %v2358
        %2453 = vmatpush1.bf16.msra.mxu0 %v2357
        %2454 = vmatprep.subr.bf16.mxu0 %v2354
        %2455 = vmatpush1.bf16.msra.mxu0 %v2353
        %2456 = vmatprep.subr.bf16.mxu0 %v2350
        %2457 = vmatpush1.bf16.msra.mxu0 %v2349
        %2458 = vmatprep.subr.bf16.mxu0 %v2346
        %2459 = vmatpush1.bf16.msra.mxu0 %v2345
        %2460 = vmatprep.subr.bf16.mxu0 %v2342
        %2461 = vmatpush1.bf16.msra.mxu0 %v2341
        %2462 = vmatprep.subr.bf16.mxu0 0
        %2463 = vmatpush2.bf16.msra.mxu0 0
        %2464 = vmatprep.subr.bf16.mxu0 0
        %2465 = vmatpush2.bf16.msra.mxu0 0
        %2466 = vmatprep.subr.bf16.mxu0 0
        %2467 = vmatpush2.bf16.msra.mxu0 0
        %2468 = vmatprep.subr.bf16.mxu0 0
        %2469 = vmatpush2.bf16.msra.mxu0 0
        %2470 = vmatprep.subr.bf16.mxu0 0
        %2471 = vmatpush2.bf16.msra.mxu0 0
        %2472 = vmatprep.subr.bf16.mxu0 0
        %2473 = vmatpush2.bf16.msra.mxu0 0
        %2474 = vmatprep.subr.bf16.mxu0 0
        %2475 = vmatpush2.bf16.msra.mxu0 0
        %2476 = vmatprep.subr.bf16.mxu0 0
        %2477 = vmatpush2.bf16.msra.mxu0 0
        %2478 = vmatprep.mubr.bf16.mxu0 0
        %2479 = vmatmul.mubr.bf16.gmra.mxu0 %v2188
        %v2480 = vpop.f32.mrf.mxu0
        %v2481 = vadd.f32 %v2234, %v2480
        %v2482 = vpop.f32.mrf.mxu0
        %v2483 = vadd.f32 %v2238, %v2482
        %v2484 = vpop.f32.mrf.mxu0
        %v2485 = vadd.f32 %v2234, %v2484
        %v2486 = vpop.f32.mrf.mxu0
        %v2487 = vadd.f32 %v2238, %v2486
        %2488 = vdwg.mxu0
        %v2489 = vmul.f32 %v2438, %v2438
        %v2490 = vmul.f32 %v2440, %v2440
        %v2491 = vmul.f32 %v2481, %v2481
        %v2492 = vmul.f32 %v2483, %v2483
        %v2493 = vmul.f32 %v2442, %v2442
        %v2494 = vmul.f32 %v2444, %v2444
        %v2495 = vmul.f32 %v2485, %v2485
        %v2496 = vmul.f32 %v2487, %v2487
        %v2497 = vmul.f32 %v2438, %v2489
        %v2498 = vmul.f32 %v2440, %v2490
        %v2499 = vmul.f32 %v2481, %v2491
        %v2500 = vmul.f32 %v2483, %v2492
        %v2501 = vmul.f32 %v2442, %v2493
        %v2502 = vmul.f32 %v2444, %v2494
        %v2503 = vmul.f32 %v2485, %v2495
        %v2504 = vmul.f32 %v2487, %v2496
        %v2505 = vmul.f32 %v2497, 0.044715
        %v2506 = vmul.f32 %v2498, 0.044715
        %v2507 = vmul.f32 %v2499, 0.044715
        %v2508 = vmul.f32 %v2500, 0.044715
        %v2509 = vmul.f32 %v2501, 0.044715
        %v2510 = vmul.f32 %v2502, 0.044715
        %v2511 = vmul.f32 %v2503, 0.044715
        %v2512 = vmul.f32 %v2504, 0.044715
        %v2513 = vadd.f32 %v2438, %v2505
        %v2514 = vadd.f32 %v2440, %v2506
        %v2515 = vadd.f32 %v2481, %v2507
        %v2516 = vadd.f32 %v2483, %v2508
        %v2517 = vadd.f32 %v2442, %v2509
        %v2518 = vadd.f32 %v2444, %v2510
        %v2519 = vadd.f32 %v2485, %v2511
        %v2520 = vadd.f32 %v2487, %v2512
        %v2521 = vmul.f32 %v2513, 0.7978846
        %v2522 = vmul.f32 %v2514, 0.7978846
        %v2523 = vmul.f32 %v2515, 0.7978846
        %v2524 = vmul.f32 %v2516, 0.7978846
        %v2525 = vmul.f32 %v2517, 0.7978846
        %v2526 = vmul.f32 %v2518, 0.7978846
        %v2527 = vmul.f32 %v2519, 0.7978846
        %v2528 = vmul.f32 %v2520, 0.7978846
        %v2529 = vtanh.pop %v2521
        %v2530 = vtanh.pop %v2522
        %v2531 = vtanh.pop %v2523
        %v2532 = vtanh.pop %v2524
        %v2533 = vtanh.pop %v2525
        %v2534 = vtanh.pop %v2526
        %v2535 = vtanh.pop %v2527
        %v2536 = vtanh.pop %v2528
        %v2537 = vadd.f32 %v2529, 1.0
        %v2538 = vadd.f32 %v2530, 1.0
        %v2539 = vadd.f32 %v2531, 1.0
        %v2540 = vadd.f32 %v2532, 1.0
        %v2541 = vadd.f32 %v2533, 1.0
        %v2542 = vadd.f32 %v2534, 1.0
        %v2543 = vadd.f32 %v2535, 1.0
        %v2544 = vadd.f32 %v2536, 1.0
        %v2545 = vmul.f32 %v2537, 0.5
        %v2546 = vmul.f32 %v2538, 0.5
        %v2547 = vmul.f32 %v2539, 0.5
        %v2548 = vmul.f32 %v2540, 0.5
        %v2549 = vmul.f32 %v2541, 0.5
        %v2550 = vmul.f32 %v2542, 0.5
        %v2551 = vmul.f32 %v2543, 0.5
        %v2552 = vmul.f32 %v2544, 0.5
        %v2553 = vmul.f32 %v2438, %v2545
        %v2554 = vmul.f32 %v2440, %v2546
        %v2555 = vmul.f32 %v2481, %v2547
        %v2556 = vmul.f32 %v2483, %v2548
        %v2557 = vmul.f32 %v2442, %v2549
        %v2558 = vmul.f32 %v2444, %v2550
        %v2559 = vmul.f32 %v2485, %v2551
        %v2560 = vmul.f32 %v2487, %v2552
        %v2561 = vpack.c.bf16 %v2557, %v2553
        %v2562 = vpack.c.bf16 %v2558, %v2554
        %v2563 = vpack.c.bf16 %v2559, %v2555
        %v2564 = vpack.c.bf16 %v2560, %v2556
        %v2565 = vld [vmem:[%s677] sm:$0xf]
        %v2566 = vld [vmem:[%s677 + $0x4] sm:$0xf]
        %v2567 = vld [vmem:[%s677 + $0x8] sm:$0xf]
        %v2568 = vld [vmem:[%s677 + $0xc] sm:$0xf]
        %v2569 = vld [vmem:[%s677 + $0x10] sm:$0xf]
        %v2570 = vld [vmem:[%s677 + $0x14] sm:$0xf]
        %v2571 = vld [vmem:[%s677 + $0x18] sm:$0xf]
        %v2572 = vld [vmem:[%s677 + $0x1c] sm:$0xf]
        %v2573 = vld [vmem:[%s677 + $0x20] sm:$0xf]
        %v2574 = vld [vmem:[%s677 + $0x24] sm:$0xf]
        %v2575 = vld [vmem:[%s677 + $0x28] sm:$0xf]
        %v2576 = vld [vmem:[%s677 + $0x2c] sm:$0xf]
        %v2577 = vld [vmem:[%s677 + $0x30] sm:$0xf]
        %v2578 = vld [vmem:[%s677 + $0x34] sm:$0xf]
        %v2579 = vld [vmem:[%s677 + $0x38] sm:$0xf]
        %v2580 = vld [vmem:[%s677 + $0x3c] sm:$0xf]
        %v2581 = vld [vmem:[%s677 + $0x40] sm:$0xf]
        %v2582 = vld [vmem:[%s677 + $0x44] sm:$0xf]
        %v2583 = vld [vmem:[%s677 + $0x48] sm:$0xf]
        %v2584 = vld [vmem:[%s677 + $0x4c] sm:$0xf]
        %v2585 = vld [vmem:[%s677 + $0x50] sm:$0xf]
        %v2586 = vld [vmem:[%s677 + $0x54] sm:$0xf]
        %v2587 = vld [vmem:[%s677 + $0x58] sm:$0xf]
        %v2588 = vld [vmem:[%s677 + $0x5c] sm:$0xf]
        %v2589 = vld [vmem:[%s677 + $0x60] sm:$0xf]
        %v2590 = vld [vmem:[%s677 + $0x64] sm:$0xf]
        %v2591 = vld [vmem:[%s677 + $0x68] sm:$0xf]
        %v2592 = vld [vmem:[%s677 + $0x6c] sm:$0xf]
        %v2593 = vld [vmem:[%s677 + $0x70] sm:$0xf]
        %v2594 = vld [vmem:[%s677 + $0x74] sm:$0xf]
        %v2595 = vld [vmem:[%s677 + $0x78] sm:$0xf]
        %v2596 = vld [vmem:[%s677 + $0x7c] sm:$0xf]
        %v2597 = vld [vmem:[%s677 + $0x80] sm:$0xf]
        %v2598 = vld [vmem:[%s677 + $0x84] sm:$0xf]
        %v2599 = vld [vmem:[%s677 + $0x88] sm:$0xf]
        %v2600 = vld [vmem:[%s677 + $0x8c] sm:$0xf]
        %v2601 = vld [vmem:[%s677 + $0x90] sm:$0xf]
        %v2602 = vld [vmem:[%s677 + $0x94] sm:$0xf]
        %v2603 = vld [vmem:[%s677 + $0x98] sm:$0xf]
        %v2604 = vld [vmem:[%s677 + $0x9c] sm:$0xf]
        %v2605 = vld [vmem:[%s677 + $0xa0] sm:$0xf]
        %v2606 = vld [vmem:[%s677 + $0xa4] sm:$0xf]
        %v2607 = vld [vmem:[%s677 + $0xa8] sm:$0xf]
        %v2608 = vld [vmem:[%s677 + $0xac] sm:$0xf]
        %v2609 = vld [vmem:[%s677 + $0xb0] sm:$0xf]
        %v2610 = vld [vmem:[%s677 + $0xb4] sm:$0xf]
        %v2611 = vld [vmem:[%s677 + $0xb8] sm:$0xf]
        %v2612 = vld [vmem:[%s677 + $0xbc] sm:$0xf]
        %v2613 = vld [vmem:[%s677 + $0xc0] sm:$0xf]
        %v2614 = vld [vmem:[%s677 + $0xc4] sm:$0xf]
        %v2615 = vld [vmem:[%s677 + $0xc8] sm:$0xf]
        %v2616 = vld [vmem:[%s677 + $0xcc] sm:$0xf]
        %v2617 = vld [vmem:[%s677 + $0xd0] sm:$0xf]
        %v2618 = vld [vmem:[%s677 + $0xd4] sm:$0xf]
        %v2619 = vld [vmem:[%s677 + $0xd8] sm:$0xf]
        %v2620 = vld [vmem:[%s677 + $0xdc] sm:$0xf]
        %v2621 = vld [vmem:[%s677 + $0xe0] sm:$0xf]
        %v2622 = vld [vmem:[%s677 + $0xe4] sm:$0xf]
        %v2623 = vld [vmem:[%s677 + $0xe8] sm:$0xf]
        %v2624 = vld [vmem:[%s677 + $0xec] sm:$0xf]
        %v2625 = vld [vmem:[%s677 + $0xf0] sm:$0xf]
        %v2626 = vld [vmem:[%s677 + $0xf4] sm:$0xf]
        %v2627 = vld [vmem:[%s677 + $0xf8] sm:$0xf]
        %v2628 = vld [vmem:[%s677 + $0xfc] sm:$0xf]
        %v2629 = vld [vmem:[%s790] sm:$0x1]
        %v2631 = vlaneseq
        %v2632 = vshrl.u32 %v2631, 7
        %v2633 = vsub.s32 0, %v2632
        %v2634 = vrot.slane %v2629, %v2633
        %v2700 = vunpack.c.l.b16 %v2565
        %v2701 = vunpack.c.l.b16 %v2566
        %v2702 = vunpack.c.l.b16 %v2567
        %v2703 = vunpack.c.l.b16 %v2568
        %v2704 = vunpack.c.l.b16 %v2569
        %v2705 = vunpack.c.l.b16 %v2570
        %v2706 = vunpack.c.l.b16 %v2571
        %v2707 = vunpack.c.l.b16 %v2572
        %v2708 = vunpack.c.l.b16 %v2573
        %v2709 = vunpack.c.l.b16 %v2574
        %v2710 = vunpack.c.l.b16 %v2575
        %v2711 = vunpack.c.l.b16 %v2576
        %v2712 = vunpack.c.l.b16 %v2577
        %v2713 = vunpack.c.l.b16 %v2578
        %v2714 = vunpack.c.l.b16 %v2579
        %v2715 = vunpack.c.l.b16 %v2580
        %v2716 = vunpack.c.l.b16 %v2581
        %v2717 = vunpack.c.l.b16 %v2582
        %v2718 = vunpack.c.l.b16 %v2583
        %v2719 = vunpack.c.l.b16 %v2584
        %v2720 = vunpack.c.l.b16 %v2585
        %v2721 = vunpack.c.l.b16 %v2586
        %v2722 = vunpack.c.l.b16 %v2587
        %v2723 = vunpack.c.l.b16 %v2588
        %v2724 = vunpack.c.l.b16 %v2589
        %v2725 = vunpack.c.l.b16 %v2590
        %v2726 = vunpack.c.l.b16 %v2591
        %v2727 = vunpack.c.l.b16 %v2592
        %v2728 = vunpack.c.l.b16 %v2593
        %v2729 = vunpack.c.l.b16 %v2594
        %v2730 = vunpack.c.l.b16 %v2595
        %v2731 = vunpack.c.l.b16 %v2596
        %v2732 = vunpack.c.l.b16 %v2597
        %v2733 = vunpack.c.l.b16 %v2598
        %v2734 = vunpack.c.l.b16 %v2599
        %v2735 = vunpack.c.l.b16 %v2600
        %v2736 = vunpack.c.l.b16 %v2601
        %v2737 = vunpack.c.l.b16 %v2602
        %v2738 = vunpack.c.l.b16 %v2603
        %v2739 = vunpack.c.l.b16 %v2604
        %v2740 = vunpack.c.l.b16 %v2605
        %v2741 = vunpack.c.l.b16 %v2606
        %v2742 = vunpack.c.l.b16 %v2607
        %v2743 = vunpack.c.l.b16 %v2608
        %v2744 = vunpack.c.l.b16 %v2609
        %v2745 = vunpack.c.l.b16 %v2610
        %v2746 = vunpack.c.l.b16 %v2611
        %v2747 = vunpack.c.l.b16 %v2612
        %v2748 = vunpack.c.l.b16 %v2613
        %v2749 = vunpack.c.l.b16 %v2614
        %v2750 = vunpack.c.l.b16 %v2615
        %v2751 = vunpack.c.l.b16 %v2616
        %v2752 = vunpack.c.l.b16 %v2617
        %v2753 = vunpack.c.l.b16 %v2618
        %v2754 = vunpack.c.l.b16 %v2619
        %v2755 = vunpack.c.l.b16 %v2620
        %v2756 = vunpack.c.l.b16 %v2621
        %v2757 = vunpack.c.l.b16 %v2622
        %v2758 = vunpack.c.l.b16 %v2623
        %v2759 = vunpack.c.l.b16 %v2624
        %v2760 = vunpack.c.l.b16 %v2625
        %v2761 = vunpack.c.l.b16 %v2626
        %v2762 = vunpack.c.l.b16 %v2627
        %v2763 = vunpack.c.l.b16 %v2628
        %v2764 = vpack.c.b16 %v2701, %v2700
        %v2765 = vpack.c.b16 %v2703, %v2702
        %v2766 = vpack.c.b16 %v2705, %v2704
        %v2767 = vpack.c.b16 %v2707, %v2706
        %v2768 = vpack.c.b16 %v2709, %v2708
        %v2769 = vpack.c.b16 %v2711, %v2710
        %v2770 = vpack.c.b16 %v2713, %v2712
        %v2771 = vpack.c.b16 %v2715, %v2714
        %v2772 = vpack.c.b16 %v2717, %v2716
        %v2773 = vpack.c.b16 %v2719, %v2718
        %v2774 = vpack.c.b16 %v2721, %v2720
        %v2775 = vpack.c.b16 %v2723, %v2722
        %v2776 = vpack.c.b16 %v2725, %v2724
        %v2777 = vpack.c.b16 %v2727, %v2726
        %v2778 = vpack.c.b16 %v2729, %v2728
        %v2779 = vpack.c.b16 %v2731, %v2730
        %v2780 = vpack.c.b16 %v2733, %v2732
        %v2781 = vpack.c.b16 %v2735, %v2734
        %v2782 = vpack.c.b16 %v2737, %v2736
        %v2783 = vpack.c.b16 %v2739, %v2738
        %v2784 = vpack.c.b16 %v2741, %v2740
        %v2785 = vpack.c.b16 %v2743, %v2742
        %v2786 = vpack.c.b16 %v2745, %v2744
        %v2787 = vpack.c.b16 %v2747, %v2746
        %v2788 = vpack.c.b16 %v2749, %v2748
        %v2789 = vpack.c.b16 %v2751, %v2750
        %v2790 = vpack.c.b16 %v2753, %v2752
        %v2791 = vpack.c.b16 %v2755, %v2754
        %v2792 = vpack.c.b16 %v2757, %v2756
        %v2793 = vpack.c.b16 %v2759, %v2758
        %v2794 = vpack.c.b16 %v2761, %v2760
        %v2795 = vpack.c.b16 %v2763, %v2762
        %2828 = vmatprep.subr.bf16.mxu0 0
        %2829 = vmatpush1.bf16.msra.mxu0 %v2771
        %2830 = vmatprep.subr.bf16.mxu0 0
        %2831 = vmatpush1.bf16.msra.mxu0 %v2770
        %2832 = vmatprep.subr.bf16.mxu0 0
        %2833 = vmatpush1.bf16.msra.mxu0 %v2769
        %2834 = vmatprep.subr.bf16.mxu0 0
        %2835 = vmatpush1.bf16.msra.mxu0 %v2768
        %2836 = vmatprep.subr.bf16.mxu0 0
        %2837 = vmatpush1.bf16.msra.mxu0 %v2767
        %2838 = vmatprep.subr.bf16.mxu0 0
        %2839 = vmatpush1.bf16.msra.mxu0 %v2766
        %2840 = vmatprep.subr.bf16.mxu0 0
        %2841 = vmatpush1.bf16.msra.mxu0 %v2765
        %2842 = vmatprep.subr.bf16.mxu0 0
        %2843 = vmatpush1.bf16.msra.mxu0 %v2764
        %2844 = vmatprep.subr.bf16.mxu0 0
        %2845 = vmatpush2.bf16.msra.mxu0 %v2779
        %2846 = vmatprep.subr.bf16.mxu0 0
        %2847 = vmatpush2.bf16.msra.mxu0 %v2778
        %2848 = vmatprep.subr.bf16.mxu0 0
        %2849 = vmatpush2.bf16.msra.mxu0 %v2777
        %2850 = vmatprep.subr.bf16.mxu0 0
        %2851 = vmatpush2.bf16.msra.mxu0 %v2776
        %2852 = vmatprep.subr.bf16.mxu0 0
        %2853 = vmatpush2.bf16.msra.mxu0 %v2775
        %2854 = vmatprep.subr.bf16.mxu0 0
        %2855 = vmatpush2.bf16.msra.mxu0 %v2774
        %2856 = vmatprep.subr.bf16.mxu0 0
        %2857 = vmatpush2.bf16.msra.mxu0 %v2773
        %2858 = vmatprep.subr.bf16.mxu0 0
        %2859 = vmatpush2.bf16.msra.mxu0 %v2772
        %2860 = vmatprep.mubr.bf16.mxu0 %v2562
        %2861 = vmatmul.mubr.bf16.gmra.mxu0 %v2561
        %v2862 = vpop.f32.mrf.mxu0
        %v2863 = vadd.f32 %v2634, %v2862
        %v2864 = vpop.f32.mrf.mxu0
        %v2865 = vpop.f32.mrf.mxu0
        %v2866 = vadd.f32 %v2634, %v2865
        %v2867 = vpop.f32.mrf.mxu0
        %2868 = vdwg.mxu0
        %2869 = vmatprep.subr.bf16.mxu0 0
        %2870 = vmatpush1.bf16.msra.mxu0 %v2787
        %2871 = vmatprep.subr.bf16.mxu0 0
        %2872 = vmatpush1.bf16.msra.mxu0 %v2786
        %2873 = vmatprep.subr.bf16.mxu0 0
        %2874 = vmatpush1.bf16.msra.mxu0 %v2785
        %2875 = vmatprep.subr.bf16.mxu0 0
        %2876 = vmatpush1.bf16.msra.mxu0 %v2784
        %2877 = vmatprep.subr.bf16.mxu0 0
        %2878 = vmatpush1.bf16.msra.mxu0 %v2783
        %2879 = vmatprep.subr.bf16.mxu0 0
        %2880 = vmatpush1.bf16.msra.mxu0 %v2782
        %2881 = vmatprep.subr.bf16.mxu0 0
        %2882 = vmatpush1.bf16.msra.mxu0 %v2781
        %2883 = vmatprep.subr.bf16.mxu0 0
        %2884 = vmatpush1.bf16.msra.mxu0 %v2780
        %2885 = vmatprep.subr.bf16.mxu0 0
        %2886 = vmatpush2.bf16.msra.mxu0 %v2795
        %2887 = vmatprep.subr.bf16.mxu0 0
        %2888 = vmatpush2.bf16.msra.mxu0 %v2794
        %2889 = vmatprep.subr.bf16.mxu0 0
        %2890 = vmatpush2.bf16.msra.mxu0 %v2793
        %2891 = vmatprep.subr.bf16.mxu0 0
        %2892 = vmatpush2.bf16.msra.mxu0 %v2792
        %2893 = vmatprep.subr.bf16.mxu0 0
        %2894 = vmatpush2.bf16.msra.mxu0 %v2791
        %2895 = vmatprep.subr.bf16.mxu0 0
        %2896 = vmatpush2.bf16.msra.mxu0 %v2790
        %2897 = vmatprep.subr.bf16.mxu0 0
        %2898 = vmatpush2.bf16.msra.mxu0 %v2789
        %2899 = vmatprep.subr.bf16.mxu0 0
        %2900 = vmatpush2.bf16.msra.mxu0 %v2788
        %2901 = vmatprep.mubr.bf16.mxu0 %v2564
        %2902 = vmatmul.mubr.bf16.gmra.mxu0 %v2563
        %v2903 = vpop.f32.mrf.mxu0
        %v2904 = vadd.f32 %v2863, %v2903
        %v2905 = vpop.f32.mrf.mxu0
        %v2906 = vpop.f32.mrf.mxu0
        %v2907 = vadd.f32 %v2866, %v2906
        %v2908 = vpop.f32.mrf.mxu0
        %2909 = vdwg.mxu0
        %v2910 = vadd.f32 %v2904, %v2186
        %v2911 = vadd.f32 %v2907, %v2187
        %v2912 = vld [vmem:[%s793] sm:$0x1]
        %v2913 = vld [vmem:[%s796] sm:$0x1]
        %2914 = vadd.xlane.f32.xlu0 %v2910
        %v2915 = vpop.xlane.xlu0 %2914
        %2916 = vadd.xlane.f32.xlu0 %v2911
        %v2917 = vpop.xlane.xlu0 %2916
        %v2918 = vmul.f32 %v2915, %v2153
        %v2919 = vmul.f32 %v2917, %v2153
        %v2920 = vsub.f32 %v2910, %v2918
        %v2921 = vsub.f32 %v2911, %v2919
        %v2922 = vmul.f32 %v2920, %v2920
        %v2923 = vmul.f32 %v2921, %v2921
        %2924 = vadd.xlane.f32.xlu0 %v2922
        %v2925 = vpop.xlane.xlu0 %2924
        %2926 = vadd.xlane.f32.xlu0 %v2923
        %v2927 = vpop.xlane.xlu0 %2926
        %v2928 = vmul.f32 %v2925, %v2153
        %v2929 = vmul.f32 %v2927, %v2153
        %v2930 = vadd.f32 %v2928, 1e-12
        %v2931 = vadd.f32 %v2929, 1e-12
        %v2932 = vrsqrt.pop %v2930
        %v2933 = vrsqrt.pop %v2931
        %v2934 = vmul.f32 %v2920, %v2932
        %v2935 = vmul.f32 %v2921, %v2933
        %v2937 = vlaneseq
        %v2938 = vshrl.u32 %v2937, 7
        %v2939 = vsub.s32 0, %v2938
        %v2940 = vrot.slane %v2912, %v2939
        %v2942 = vmul.f32 %v2934, %v2940
        %v2943 = vmul.f32 %v2935, %v2940
        %v2945 = vlaneseq
        %v2946 = vshrl.u32 %v2945, 7
        %v2947 = vsub.s32 0, %v2946
        %v2948 = vrot.slane %v2913, %v2947
        %v2950 = vadd.f32 %v2942, %v2948
        %v2951 = vadd.f32 %v2943, %v2948
        %2952 = vst [vmem:[#allocation2] sm:$0xff] %v2950
        %2953 = vst [vmem:[#allocation2 + $0x8] sm:$0xff] %v2951
        %p2954 = scmp.eq.s32.totalorder %s36, 1
        // Predicated region
        $region109: #{transformer_forward.1} parent=91 // pred_check
          %p2955 = pneg %p2954
        $region110: #{transformer_forward.1} parent=91 // pred_check_branch
          %2957 = sbr.rel (%p2955) target = $region112
        $region111: #{transformer_forward.1} parent=91 // pred_region
          %v2959 = vrot.slane %v2951, 7
          %vm2961 = vcmask 1040384
          %v2962 = vsel %vm2961, %v2950, %v2959
          %v2963 = vpack.c.bf16 %v2962, %v2962
          %v2964 = vld [vmem:[%s16] sm:$0xf]
          %v2965 = vld [vmem:[%s16 + $0x4] sm:$0xf]
          %v2966 = vld [vmem:[%s16 + $0x8] sm:$0xf]
          %v2967 = vld [vmem:[%s16 + $0xc] sm:$0xf]
          %v2968 = vld [vmem:[%s16 + $0x10] sm:$0xf]
          %v2969 = vld [vmem:[%s16 + $0x14] sm:$0xf]
          %v2970 = vld [vmem:[%s16 + $0x18] sm:$0xf]
          %v2971 = vld [vmem:[%s16 + $0x1c] sm:$0xf]
          %v2972 = vld [vmem:[%s16 + $0x20] sm:$0xf]
          %v2973 = vld [vmem:[%s16 + $0x24] sm:$0xf]
          %v2974 = vld [vmem:[%s16 + $0x28] sm:$0xf]
          %v2975 = vld [vmem:[%s16 + $0x2c] sm:$0xf]
          %v2976 = vld [vmem:[%s16 + $0x30] sm:$0xf]
          %v2977 = vld [vmem:[%s16 + $0x34] sm:$0xf]
          %v2978 = vld [vmem:[%s16 + $0x38] sm:$0xf]
          %v2979 = vld [vmem:[%s16 + $0x3c] sm:$0xf]
          %v2980 = vld [vmem:[%s17] sm:$0x1]
          %v2982 = vlaneseq
          %v2983 = vshrl.u32 %v2982, 7
          %v2984 = vsub.s32 0, %v2983
          %v2985 = vrot.slane %v2980, %v2984
          %v3003 = vunpack.c.l.b16 %v2964
          %v3004 = vunpack.c.l.b16 %v2965
          %v3005 = vunpack.c.l.b16 %v2966
          %v3006 = vunpack.c.l.b16 %v2967
          %v3007 = vunpack.c.l.b16 %v2968
          %v3008 = vunpack.c.l.b16 %v2969
          %v3009 = vunpack.c.l.b16 %v2970
          %v3010 = vunpack.c.l.b16 %v2971
          %v3011 = vunpack.c.l.b16 %v2972
          %v3012 = vunpack.c.l.b16 %v2973
          %v3013 = vunpack.c.l.b16 %v2974
          %v3014 = vunpack.c.l.b16 %v2975
          %v3015 = vunpack.c.l.b16 %v2976
          %v3016 = vunpack.c.l.b16 %v2977
          %v3017 = vunpack.c.l.b16 %v2978
          %v3018 = vunpack.c.l.b16 %v2979
          %v3019 = vpack.c.b16 %v3004, %v3003
          %v3020 = vpack.c.b16 %v3006, %v3005
          %v3021 = vpack.c.b16 %v3008, %v3007
          %v3022 = vpack.c.b16 %v3010, %v3009
          %v3023 = vpack.c.b16 %v3012, %v3011
          %v3024 = vpack.c.b16 %v3014, %v3013
          %v3025 = vpack.c.b16 %v3016, %v3015
          %v3026 = vpack.c.b16 %v3018, %v3017
          %3035 = vmatprep.subr.bf16.mxu0 0
          %3036 = vmatpush1.bf16.msra.mxu0 %v3026
          %3037 = vmatprep.subr.bf16.mxu0 0
          %3038 = vmatpush1.bf16.msra.mxu0 %v3025
          %3039 = vmatprep.subr.bf16.mxu0 0
          %3040 = vmatpush1.bf16.msra.mxu0 %v3024
          %3041 = vmatprep.subr.bf16.mxu0 0
          %3042 = vmatpush1.bf16.msra.mxu0 %v3023
          %3043 = vmatprep.subr.bf16.mxu0 0
          %3044 = vmatpush1.bf16.msra.mxu0 %v3022
          %3045 = vmatprep.subr.bf16.mxu0 0
          %3046 = vmatpush1.bf16.msra.mxu0 %v3021
          %3047 = vmatprep.subr.bf16.mxu0 0
          %3048 = vmatpush1.bf16.msra.mxu0 %v3020
          %3049 = vmatprep.subr.bf16.mxu0 0
          %3050 = vmatpush1.bf16.msra.mxu0 %v3019
          %3051 = vmatprep.subr.bf16.mxu0 0
          %3052 = vmatpush2.bf16.msra.mxu0 0
          %3053 = vmatprep.subr.bf16.mxu0 0
          %3054 = vmatpush2.bf16.msra.mxu0 0
          %3055 = vmatprep.subr.bf16.mxu0 0
          %3056 = vmatpush2.bf16.msra.mxu0 0
          %3057 = vmatprep.subr.bf16.mxu0 0
          %3058 = vmatpush2.bf16.msra.mxu0 0
          %3059 = vmatprep.subr.bf16.mxu0 0
          %3060 = vmatpush2.bf16.msra.mxu0 0
          %3061 = vmatprep.subr.bf16.mxu0 0
          %3062 = vmatpush2.bf16.msra.mxu0 0
          %3063 = vmatprep.subr.bf16.mxu0 0
          %3064 = vmatpush2.bf16.msra.mxu0 0
          %3065 = vmatprep.subr.bf16.mxu0 0
          %3066 = vmatpush2.bf16.msra.mxu0 0
          %3067 = vmatprep.mubr.bf16.mxu0 0
          %3068 = vmatmul.mubr.bf16.gmra.mxu0 %v2963
          %v3069 = vpop.f32.mrf.mxu0
          %v3070 = vadd.f32 %v2985, %v3069
          %v3071 = vpop.f32.mrf.mxu0
          %v3072 = vpop.f32.mrf.mxu0
          %v3073 = vpop.f32.mrf.mxu0
          %3074 = vdwg.mxu0
          %v3075 = vtanh.pop %v3070
          %3076 = vst [vmem:[#allocation9] sm:$0x3] %v3075
        $region112: #{transformer_forward.1} parent=91 // pred_fallthru
          _
        // Predicated region
        $region113: #{transformer_forward.1} parent=91 // pred_check
          %p3077 = pneg %p487
        $region114: #{transformer_forward.1} parent=91 // pred_check_branch
          %3079 = sbr.rel (%p3077) target = $region116
        $region115: #{transformer_forward.1} parent=91 // pred_region
          %s3081 = ssub.s32 32, 32
          %3082 = vsyncadd [#allocation5], %s3081
          %s3084 = sshll.u32 [#allocation9], 4
          %s3085 = int_to_ptr.vmem [resolvable:$true] %s3084
          %3087 = dma.vmem_to_hbm [thread:$0]  %s3085, 32, %s18, [#allocation5]
        $region116: #{transformer_forward.1} parent=91 // pred_fallthru
          _
        // Predicated region
        $region117: #{transformer_forward.1} parent=91 // pred_check
          %p3088 = pneg %p487
        $region118: #{transformer_forward.1} parent=91 // pred_check_branch
          %3090 = sbr.rel (%p3088) target = $region120
        $region119: #{transformer_forward.1} parent=91 // pred_region
          %3091 = dma.done [#allocation5], 32
        $region120: #{transformer_forward.1} parent=91 // pred_fallthru
          _
      $region92: #{transformer_forward.1} parent=5 // pred_fallthru
        _
      %p3092 = scmp.le.s32.totalorder 2, %s31
      // Predicated region
      $region121: #{transformer_forward.1} parent=5 // pred_check
        %p3093 = pneg %p3092
      $region122: #{transformer_forward.1} parent=5 // pred_check_branch
        %3095 = sbr.rel (%p3093) target = $region124
      $region123: #{transformer_forward.1} parent=5 // pred_region
        %s3096 = ssub.s32 %s31, 2
      $region124: #{transformer_forward.1} parent=5 // pred_fallthru
        _
    $region6: #{transformer_forward.1} parent=1 // loop_footer
      %s35 = sadd.s32 1, %s31
    $region7: #{transformer_forward.1} parent=1 // loop_footer_branch
      %30 = sbr.rel target = $region3
    $region8: #{transformer_forward.1} parent=1 // loop_exit
      _
    %3097 = vsyncpa [#allocation4], 1
    %s3098 = scalar_lea.sflag [#allocation4], 1
    %3099 = vsyncpa %s3098, 1
    %3100 = vsyncpa [#allocation7], 1
    %s3101 = scalar_lea.sflag [#allocation7], 1
    %3102 = vsyncpa %s3101, 1
    %3103 = vsyncpa [#allocation5], 1
    %s3104 = scalar_lea.sflag [#allocation5], 1
    %3105 = vsyncpa %s3104, 1

</llo_original>
